<compile_context>
chip_gen: v7x
topology: tpu7x:2x2x1
jax: 0.10.0
libtpu: 0.0.40
codegen_flags: <defaults>
</compile_context>

<pallas_src>
import jax
import jax.numpy as jnp
from jax.experimental import pallas as pl
from jax.experimental.pallas import tpu as pltpu


# ---------------------------------------------------------------------------
# Fused conv tower: one (or bblk) image(s) per grid step, fully VMEM-resident.
# ---------------------------------------------------------------------------
def genki_conv_tower(col1, w1, b1, w2, b2, w3, b3, *, bblk=1):
    """col1: (B, 4096, 32) layer-1 im2col slab (K padded 27->32).
    Returns (B, 64, 16) HWC features (row = h*8 + w, col = c)."""
    B = col1.shape[0]
    assert B % bblk == 0
    f32 = jnp.float32

    def kernel(col1_ref, w1_ref, b1_ref, w2_ref, b2_ref, w3_ref, b3_ref,
               feat_ref, xp2, xp3, zr1, zr2, zr3):
        # ---- Border-only zeroing of padded scratches (every grid step: megacore-safe;
        #      interiors are fully overwritten per image, borders are never written).
        xp2[0, :, :] = jnp.zeros((48, 32), f32)
        xp2[33, :, :] = jnp.zeros((48, 32), f32)
        xp2[:, pl.ds(0, 8), :] = jnp.zeros((34, 8, 32), f32)     # covers read col 7
        xp2[:, pl.ds(40, 8), :] = jnp.zeros((34, 8, 32), f32)    # covers read col 40
        xp3[0, :, :] = jnp.zeros((32, 32), f32)
        xp3[17, :, :] = jnp.zeros((32, 32), f32)
        xp3[:, pl.ds(0, 8), :] = jnp.zeros((18, 8, 32), f32)     # covers read col 7
        xp3[:, pl.ds(24, 8), :] = jnp.zeros((18, 8, 32), f32)    # covers read col 24

        w1v = w1_ref[...]                  # (32, 32)
        b1v = b1_ref[...]                  # (1, 32)
        b2v = b2_ref[...]                  # (1, 32)
        b3v = b3_ref[...]                  # (1, 16)

        for bb in range(bblk):             # images within this grid step (scratch is reused)

            # ---- Layer 1: conv3x3(3->32) + ReLU + pool, from the prebuilt im2col slab.
            #      16 chunks of 4 output rows; one (256,32)x(32,32) MXU dot per chunk.
            def l1_chunk(i, carry):
                r0 = pl.multiple_of(i * 256, 256)
                blk = jnp.dot(col1_ref[bb, pl.ds(r0, 256), :], w1v,
                              preferred_element_type=jnp.float32)          # (256, 32)
                blk = jnp.maximum(blk + b1v, 0.0).reshape(2, 2, 64, 32)
                zr1[...] = jnp.maximum(blk[:, 0], blk[:, 1])               # row pool (2,64,32)
                pooled = jnp.maximum(zr1[:, pl.ds(0, 32, stride=2), :],
                                     zr1[:, pl.ds(1, 32, stride=2), :])    # col pool (2,32,32)
                xp2[pl.ds(1 + 2 * i, 2), pl.ds(8, 32), :] = pooled
                return carry
            jax.lax.fori_loop(0, 16, l1_chunk, 0)

            # ---- Layer 2: conv3x3(32->32) + ReLU + pool, 9 direct accumulating K=32 dots.
            def l2_chunk(i, carry):
                h0 = pl.multiple_of(i * 4, 4)
                acc = jnp.zeros((128, 32), jnp.float32)
                for dy in range(3):
                    for dx in range(3):
                        t = dy * 3 + dx
                        win = xp2[pl.ds(h0 + dy, 4), pl.ds(7 + dx, 32), :].reshape(128, 32)
                        acc = acc + jnp.dot(win, w2_ref[pl.ds(t * 32, 32), :],
                                            preferred_element_type=jnp.float32)
                blk = jnp.maximum(acc + b2v, 0.0).reshape(2, 2, 32, 32)
                zr2[...] = jnp.maximum(blk[:, 0], blk[:, 1])               # (2, 32, 32)
                pooled = jnp.maximum(zr2[:, pl.ds(0, 16, stride=2), :],
                                     zr2[:, pl.ds(1, 16, stride=2), :])    # (2, 16, 32)
                xp3[pl.ds(1 + 2 * i, 2), pl.ds(8, 16), :] = pooled
                return carry
            jax.lax.fori_loop(0, 8, l2_chunk, 0)

            # ---- Layer 3: conv3x3(32->16) + ReLU + pool -> (64, 16) HWC feature rows.
            def l3_chunk(i, carry):
                h0 = pl.multiple_of(i * 4, 4)
                acc = jnp.zeros((64, 16), jnp.float32)
                for dy in range(3):
                    for dx in range(3):
                        t = dy * 3 + dx
                        win = xp3[pl.ds(h0 + dy, 4), pl.ds(7 + dx, 16), :].reshape(64, 32)
                        acc = acc + jnp.dot(win, w3_ref[pl.ds(t * 32, 32), :],
                                            preferred_element_type=jnp.float32)
                blk = jnp.maximum(acc + b3v, 0.0).reshape(2, 2, 16, 16)
                zr3[...] = jnp.maximum(blk[:, 0], blk[:, 1])               # (2, 16, 16)
                pooled = jnp.maximum(zr3[:, pl.ds(0, 8, stride=2), :],
                                     zr3[:, pl.ds(1, 8, stride=2), :])     # (2, 8, 16)
                feat_ref[bb, pl.ds(pl.multiple_of(i * 16, 16), 16), :] = pooled.reshape(16, 16)
                return carry
            jax.lax.fori_loop(0, 4, l3_chunk, 0)

    return pl.pallas_call(
        kernel,
        out_shape=jax.ShapeDtypeStruct((B, 64, 16), f32),
        grid_spec=pltpu.PrefetchScalarGridSpec(
            num_scalar_prefetch=0,
            grid=(B // bblk,),
            in_specs=[
                pl.BlockSpec((bblk, 4096, 32), lambda b: (b, 0, 0)),   # im2col slab
                pl.BlockSpec((32, 32), lambda b: (0, 0)),              # w1 (K padded to 32)
                pl.BlockSpec((1, 32), lambda b: (0, 0)),
                pl.BlockSpec((288, 32), lambda b: (0, 0)),             # w2
                pl.BlockSpec((1, 32), lambda b: (0, 0)),
                pl.BlockSpec((288, 16), lambda b: (0, 0)),             # w3
                pl.BlockSpec((1, 16), lambda b: (0, 0)),
            ],
            out_specs=pl.BlockSpec((bblk, 64, 16), lambda b: (b, 0, 0)),
            scratch_shapes=[
                pltpu.VMEM((34, 48, 32), f32),   # xp2: padded L2 input, interior [1:33, 8:40]
                pltpu.VMEM((18, 32, 32), f32),   # xp3: padded L3 input, interior [1:17, 8:24]
                pltpu.VMEM((2, 64, 32), f32),    # zr1: per-chunk row-pooled scratch (L1)
                pltpu.VMEM((2, 32, 32), f32),    # zr2
                pltpu.VMEM((2, 16, 16), f32),    # zr3
            ],
        ),
        compiler_params=pltpu.CompilerParams(
            dimension_semantics=("parallel",),
            vmem_limit_bytes=32 * 1024 * 1024),
    )(col1, w1, b1, w2, b2, w3, b3)


# ---------------------------------------------------------------------------
# MLP head: fc4 + ReLU + fc5 + sigmoid, tiled over the batch.
# ---------------------------------------------------------------------------
def mlp_head_kernel(x_ref, w4_ref, b4_ref, w5_ref, b5_ref, o_ref):
    h = jnp.dot(x_ref[...], w4_ref[...], preferred_element_type=jnp.float32)
    h = jnp.maximum(h + b4_ref[...], 0.0)
    z = jnp.dot(h, w5_ref[...], preferred_element_type=jnp.float32) + b5_ref[...]
    o_ref[...] = 1.0 / (1.0 + jnp.exp(-z))


def mlp_head(feat, w4, b4, w5, b5):
    B = feat.shape[0]
    if B <= 256:
        bt = B
    else:
        bt = B                      # fallback: untiled
        for cand in range(256, 0, -8):
            if B % cand == 0:
                bt = cand
                break
    return pl.pallas_call(
        mlp_head_kernel,
        out_shape=jax.ShapeDtypeStruct((B, 1), jnp.float32),
        grid_spec=pltpu.PrefetchScalarGridSpec(
            num_scalar_prefetch=0,
            grid=(B // bt,),
            in_specs=[
                pl.BlockSpec((bt, 1024), lambda i: (i, 0)),
                pl.BlockSpec((1024, 128), lambda i: (0, 0)),
                pl.BlockSpec((1, 128), lambda i: (0, 0)),
                pl.BlockSpec((128, 1), lambda i: (0, 0)),
                pl.BlockSpec((1, 1), lambda i: (0, 0)),
            ],
            out_specs=pl.BlockSpec((bt, 1), lambda i: (i, 0)),
        ),
        compiler_params=pltpu.CompilerParams(dimension_semantics=("parallel",)),
    )(feat, w4, b4, w5, b5)


# ---------------------------------------------------------------------------
# Parameters (deterministic, synthetic) and forward pass
# ---------------------------------------------------------------------------
def init_params(key):
    ks = jax.random.split(key, 10)

    def conv_w(k, cin, cout):
        return jax.random.normal(k, (3, 3, cin, cout), jnp.float32) * 0.1

    return dict(
        w1=conv_w(ks[0], 3, 32),  b1=jax.random.normal(ks[1], (1, 32), jnp.float32) * 0.01,
        w2=conv_w(ks[2], 32, 32), b2=jax.random.normal(ks[3], (1, 32), jnp.float32) * 0.01,
        w3=conv_w(ks[4], 32, 16), b3=jax.random.normal(ks[5], (1, 16), jnp.float32) * 0.01,
        w4=jax.random.normal(ks[6], (1024, 128), jnp.float32) * 0.05,   # rows = torch CHW flatten
        b4=jax.random.normal(ks[7], (1, 128), jnp.float32) * 0.01,
        w5=jax.random.normal(ks[8], (128, 1), jnp.float32) * 0.05,
        b5=jax.random.normal(ks[9], (1, 1), jnp.float32) * 0.01,
    )


@jax.jit
def genki_forward(x_nchw, params):
    B = x_nchw.shape[0]
    x = jnp.transpose(x_nchw, (0, 2, 3, 1)).astype(jnp.float32)      # NCHW -> NHWC
    xpad = jnp.pad(x, ((0, 0), (1, 1), (1, 1), (0, 0)))              # SAME halo
    # Layer-1 im2col in XLA: lane-friendly (B, 4096, 32) slab, tap-major / channel-minor,
    # K zero-padded 27 -> 32 (matching zero rows appended to w1).
    taps = [xpad[:, dy:dy + 64, dx:dx + 64, :] for dy in range(3) for dx in range(3)]
    taps.append(jnp.zeros((B, 64, 64, 5), jnp.float32))
    col1 = jnp.concatenate(taps, axis=-1).reshape(B, 4096, 32)
    w1 = jnp.pad(params["w1"].reshape(27, 32), ((0, 5), (0, 0)))     # (32, 32)
    # dropout(0.2) == identity in eval mode.
    bblk = 2 if (B > 2 and B % 2 == 0) else 1                        # keep grid >= 2 at tiny B
    feat = genki_conv_tower(
        col1, w1, params["b1"],
        params["w2"].reshape(288, 32), params["b2"],
        params["w3"].reshape(288, 16), params["b3"],
        bblk=bblk)                                                   # (B, 64, 16) HWC
    feat = feat.reshape(B, 1024)                                     # idx = h*128 + w*16 + c
    # fc4 rows are torch CHW-flatten ordered; permute the weight (not the activation) to HWC.
    w4_hwc = params["w4"].reshape(16, 8, 8, 128).transpose(1, 2, 0, 3).reshape(1024, 128)
    return mlp_head(feat, w4_hwc, params["b4"], params["w5"], params["b5"])   # (B, 1)


# Pure-JAX reference (correctness check only), using torch's CHW flatten directly.
def genki_reference(x_nchw, params):
    x = jnp.transpose(x_nchw, (0, 2, 3, 1)).astype(jnp.float32)

    def block(x, w, b):
        cout = w.shape[-1]
        y = jax.lax.conv_general_dilated(
            x, w, window_strides=(1, 1), padding="SAME",
            dimension_numbers=("NHWC", "HWIO", "NHWC"))
        y = jnp.maximum(y + b.reshape(1, 1, 1, cout), 0.0)
        return jax.lax.reduce_window(y, -jnp.inf, jax.lax.max,
                                     (1, 2, 2, 1), (1, 2, 2, 1), "VALID")

    x = block(x, params["w1"], params["b1"])
    x = block(x, params["w2"], params["b2"])
    x = block(x, params["w3"], params["b3"])
    feat = jnp.transpose(x, (0, 3, 1, 2)).reshape(x.shape[0], -1)    # torch CHW flatten
    h = jnp.maximum(feat @ params["w4"] + params["b4"], 0.0)
    return jax.nn.sigmoid(h @ params["w5"] + params["b5"])


if __name__ == "__main__":
    key = jax.random.PRNGKey(0)
    pkey, xkey = jax.random.split(key)
    params = init_params(pkey)
    x = jax.random.normal(xkey, (2, 3, 64, 64), jnp.float32)         # NCHW like PyTorch

    out = jax.block_until_ready(genki_forward(x, params))
    ref = jax.block_until_ready(genki_reference(x, params))

    assert out.shape == (2, 1), out.shape
    assert jnp.allclose(out, ref, rtol=1e-4, atol=1e-5), (out, ref)
    print("KERNEL_OK")
</pallas_src>

<mosaic_0001>
module attributes {stable_mosaic.version = 11 : i64} {
  func.func @kernel(%arg0: i32, %arg1: memref<1x4096x32xf32, #tpu.memory_space<vmem>>, %arg2: memref<32x32xf32, #tpu.memory_space<vmem>>, %arg3: memref<1x32xf32, #tpu.memory_space<vmem>>, %arg4: memref<288x32xf32, #tpu.memory_space<vmem>>, %arg5: memref<1x32xf32, #tpu.memory_space<vmem>>, %arg6: memref<288x16xf32, #tpu.memory_space<vmem>>, %arg7: memref<1x16xf32, #tpu.memory_space<vmem>>, %arg8: memref<1x64x16xf32, #tpu.memory_space<vmem>>, %arg9: memref<34x48x32xf32, #tpu.memory_space<vmem>>, %arg10: memref<18x32x32xf32, #tpu.memory_space<vmem>>, %arg11: memref<2x64x32xf32, #tpu.memory_space<vmem>>, %arg12: memref<2x32x32xf32, #tpu.memory_space<vmem>>, %arg13: memref<2x16x16xf32, #tpu.memory_space<vmem>>) attributes {dimension_semantics = [#tpu.dimension_semantics<parallel>], iteration_bounds = array<i64: 2>, scalar_prefetch = 0 : i64, scratch_operands = 5 : i64, tpu.core_type = #tpu.core_type<tc>, window_params = [{transform_indices = @transform_0, window_bounds = array<i64: 1, 4096, 32>}, {pipeline_mode = #tpu.pipeline_mode<synchronous>, transform_indices = @transform_1, window_bounds = array<i64: 32, 32>}, {pipeline_mode = #tpu.pipeline_mode<synchronous>, transform_indices = @transform_2, window_bounds = array<i64: 1, 32>}, {pipeline_mode = #tpu.pipeline_mode<synchronous>, transform_indices = @transform_3, window_bounds = array<i64: 288, 32>}, {pipeline_mode = #tpu.pipeline_mode<synchronous>, transform_indices = @transform_4, window_bounds = array<i64: 1, 32>}, {pipeline_mode = #tpu.pipeline_mode<synchronous>, transform_indices = @transform_5, window_bounds = array<i64: 288, 16>}, {pipeline_mode = #tpu.pipeline_mode<synchronous>, transform_indices = @transform_6, window_bounds = array<i64: 1, 16>}, {transform_indices = @transform_7, window_bounds = array<i64: 1, 64, 16>}]} {
    %cst = arith.constant 0.000000e+00 : f32
    %0 = vector.broadcast %cst : f32 to vector<48x32xf32>
    %c0 = arith.constant 0 : index
    %c0_0 = arith.constant 0 : index
    %c0_1 = arith.constant 0 : index
    %1 = vector.load %arg9[%c0, %c0_0, %c0_1] : memref<34x48x32xf32, #tpu.memory_space<vmem>>, vector<1x48x32xf32>
    %2 = vector.shape_cast %1 : vector<1x48x32xf32> to vector<48x32xf32>
    %3 = vector.shape_cast %0 : vector<48x32xf32> to vector<1x48x32xf32>
    tpu.vector_store %arg9[%c0, %c0_0, %c0_1], %3 {strides = array<i32>} : memref<34x48x32xf32, #tpu.memory_space<vmem>>, vector<1x48x32xf32>,
    %cst_2 = arith.constant 0.000000e+00 : f32
    %4 = vector.broadcast %cst_2 : f32 to vector<48x32xf32>
    %c33 = arith.constant 33 : index
    %c0_3 = arith.constant 0 : index
    %c0_4 = arith.constant 0 : index
    %5 = vector.load %arg9[%c33, %c0_3, %c0_4] : memref<34x48x32xf32, #tpu.memory_space<vmem>>, vector<1x48x32xf32>
    %6 = vector.shape_cast %5 : vector<1x48x32xf32> to vector<48x32xf32>
    %7 = vector.shape_cast %4 : vector<48x32xf32> to vector<1x48x32xf32>
    tpu.vector_store %arg9[%c33, %c0_3, %c0_4], %7 {strides = array<i32>} : memref<34x48x32xf32, #tpu.memory_space<vmem>>, vector<1x48x32xf32>,
    %cst_5 = arith.constant 0.000000e+00 : f32
    %8 = vector.broadcast %cst_5 : f32 to vector<34x8x32xf32>
    %c0_6 = arith.constant 0 : index
    %c0_7 = arith.constant 0 : index
    %c0_8 = arith.constant 0 : index
    %9 = vector.load %arg9[%c0_6, %c0_7, %c0_8] : memref<34x48x32xf32, #tpu.memory_space<vmem>>, vector<34x8x32xf32>
    tpu.vector_store %arg9[%c0_6, %c0_7, %c0_8], %8 {strides = array<i32>} : memref<34x48x32xf32, #tpu.memory_space<vmem>>, vector<34x8x32xf32>,
    %cst_9 = arith.constant 0.000000e+00 : f32
    %10 = vector.broadcast %cst_9 : f32 to vector<34x8x32xf32>
    %c0_10 = arith.constant 0 : index
    %c40 = arith.constant 40 : index
    %c0_11 = arith.constant 0 : index
    %11 = vector.load %arg9[%c0_10, %c40, %c0_11] : memref<34x48x32xf32, #tpu.memory_space<vmem>>, vector<34x8x32xf32>
    tpu.vector_store %arg9[%c0_10, %c40, %c0_11], %10 {strides = array<i32>} : memref<34x48x32xf32, #tpu.memory_space<vmem>>, vector<34x8x32xf32>,
    %cst_12 = arith.constant 0.000000e+00 : f32
    %12 = vector.broadcast %cst_12 : f32 to vector<32x32xf32>
    %c0_13 = arith.constant 0 : index
    %c0_14 = arith.constant 0 : index
    %c0_15 = arith.constant 0 : index
    %13 = vector.load %arg10[%c0_13, %c0_14, %c0_15] : memref<18x32x32xf32, #tpu.memory_space<vmem>>, vector<1x32x32xf32>
    %14 = vector.shape_cast %13 : vector<1x32x32xf32> to vector<32x32xf32>
    %15 = vector.shape_cast %12 : vector<32x32xf32> to vector<1x32x32xf32>
    tpu.vector_store %arg10[%c0_13, %c0_14, %c0_15], %15 {strides = array<i32>} : memref<18x32x32xf32, #tpu.memory_space<vmem>>, vector<1x32x32xf32>,
    %cst_16 = arith.constant 0.000000e+00 : f32
    %16 = vector.broadcast %cst_16 : f32 to vector<32x32xf32>
    %c17 = arith.constant 17 : index
    %c0_17 = arith.constant 0 : index
    %c0_18 = arith.constant 0 : index
    %17 = vector.load %arg10[%c17, %c0_17, %c0_18] : memref<18x32x32xf32, #tpu.memory_space<vmem>>, vector<1x32x32xf32>
    %18 = vector.shape_cast %17 : vector<1x32x32xf32> to vector<32x32xf32>
    %19 = vector.shape_cast %16 : vector<32x32xf32> to vector<1x32x32xf32>
    tpu.vector_store %arg10[%c17, %c0_17, %c0_18], %19 {strides = array<i32>} : memref<18x32x32xf32, #tpu.memory_space<vmem>>, vector<1x32x32xf32>,
    %cst_19 = arith.constant 0.000000e+00 : f32
    %20 = vector.broadcast %cst_19 : f32 to vector<18x8x32xf32>
    %c0_20 = arith.constant 0 : index
    %c0_21 = arith.constant 0 : index
    %c0_22 = arith.constant 0 : index
    %21 = vector.load %arg10[%c0_20, %c0_21, %c0_22] : memref<18x32x32xf32, #tpu.memory_space<vmem>>, vector<18x8x32xf32>
    tpu.vector_store %arg10[%c0_20, %c0_21, %c0_22], %20 {strides = array<i32>} : memref<18x32x32xf32, #tpu.memory_space<vmem>>, vector<18x8x32xf32>,
    %cst_23 = arith.constant 0.000000e+00 : f32
    %22 = vector.broadcast %cst_23 : f32 to vector<18x8x32xf32>
    %c0_24 = arith.constant 0 : index
    %c24 = arith.constant 24 : index
    %c0_25 = arith.constant 0 : index
    %23 = vector.load %arg10[%c0_24, %c24, %c0_25] : memref<18x32x32xf32, #tpu.memory_space<vmem>>, vector<18x8x32xf32>
    tpu.vector_store %arg10[%c0_24, %c24, %c0_25], %22 {strides = array<i32>} : memref<18x32x32xf32, #tpu.memory_space<vmem>>, vector<18x8x32xf32>,
    %c0_26 = arith.constant 0 : index
    %c0_27 = arith.constant 0 : index
    %24 = vector.load %arg2[%c0_26, %c0_27] : memref<32x32xf32, #tpu.memory_space<vmem>>, vector<32x32xf32>
    %c0_28 = arith.constant 0 : index
    %c0_29 = arith.constant 0 : index
    %25 = vector.load %arg3[%c0_28, %c0_29] : memref<1x32xf32, #tpu.memory_space<vmem>>, vector<1x32xf32>
    %c0_30 = arith.constant 0 : index
    %c0_31 = arith.constant 0 : index
    %26 = vector.load %arg5[%c0_30, %c0_31] : memref<1x32xf32, #tpu.memory_space<vmem>>, vector<1x32xf32>
    %c0_32 = arith.constant 0 : index
    %c0_33 = arith.constant 0 : index
    %27 = vector.load %arg7[%c0_32, %c0_33] : memref<1x16xf32, #tpu.memory_space<vmem>>, vector<1x16xf32>
    %c0_i32 = arith.constant 0 : i32
    %c16_i32 = arith.constant 16 : i32
    %28 = arith.addi %c0_i32, %c16_i32 : i32
    %c1_i32 = arith.constant 1 : i32
    scf.for %arg14 = %c0_i32 to %28 step %c1_i32  : i32 {
      %c256_i32 = arith.constant 256 : i32
      %31 = arith.muli %arg14, %c256_i32 : i32
      %32 = tpu.assume_multiple %31, 256 : i32
      %c0_41 = arith.constant 0 : index
      %33 = arith.index_cast %32 : i32 to index
      %c0_42 = arith.constant 0 : index
      %34 = vector.load %arg1[%c0_41, %33, %c0_42] : memref<1x4096x32xf32, #tpu.memory_space<vmem>>, vector<1x256x32xf32>
      %35 = vector.shape_cast %34 : vector<1x256x32xf32> to vector<256x32xf32>
      %cst_43 = arith.constant dense<0.000000e+00> : vector<256x32xf32>
      %36 = tpu.matmul %35, %24, %cst_43 {dimension_numbers = #tpu.dot_dimension_numbers<[1], [0], [0], [1], [0, 0, 1, 1], [], []>} : vector<256x32xf32>, vector<32x32xf32>, vector<256x32xf32> -> vector<256x32xf32>
      %37 = vector.broadcast %25 : vector<1x32xf32> to vector<256x32xf32>
      %38 = arith.addf %36, %37 : vector<256x32xf32>
      %cst_44 = arith.constant 0.000000e+00 : f32
      %39 = vector.broadcast %cst_44 : f32 to vector<256x32xf32>
      %40 = arith.maximumf %38, %39 : vector<256x32xf32>
      %41 = vector.shape_cast %40 : vector<256x32xf32> to vector<2x2x64x32xf32>
      %42 = vector.extract_strided_slice %41 {offsets = [0, 0, 0, 0], sizes = [2, 1, 64, 32], strides = [1, 1, 1, 1]} : vector<2x2x64x32xf32> to vector<2x1x64x32xf32>
      %43 = vector.shape_cast %42 : vector<2x1x64x32xf32> to vector<2x64x32xf32>
      %44 = vector.extract_strided_slice %41 {offsets = [0, 1, 0, 0], sizes = [2, 1, 64, 32], strides = [1, 1, 1, 1]} : vector<2x2x64x32xf32> to vector<2x1x64x32xf32>
      %45 = vector.shape_cast %44 : vector<2x1x64x32xf32> to vector<2x64x32xf32>
      %46 = arith.maximumf %43, %45 : vector<2x64x32xf32>
      %c0_45 = arith.constant 0 : index
      %c0_46 = arith.constant 0 : index
      %c0_47 = arith.constant 0 : index
      %47 = vector.load %arg11[%c0_45, %c0_46, %c0_47] : memref<2x64x32xf32, #tpu.memory_space<vmem>>, vector<2x64x32xf32>
      tpu.vector_store %arg11[%c0_45, %c0_46, %c0_47], %46 {strides = array<i32>} : memref<2x64x32xf32, #tpu.memory_space<vmem>>, vector<2x64x32xf32>,
      %c0_48 = arith.constant 0 : index
      %c0_49 = arith.constant 0 : index
      %c0_50 = arith.constant 0 : index
      %48 = tpu.strided_load %arg11[%c0_48, %c0_49, %c0_50] {strides = array<i32: 1, 2, 1>} : memref<2x64x32xf32, #tpu.memory_space<vmem>>, vector<2x32x32xf32>
      %c0_51 = arith.constant 0 : index
      %c1 = arith.constant 1 : index
      %c0_52 = arith.constant 0 : index
      %49 = tpu.strided_load %arg11[%c0_51, %c1, %c0_52] {strides = array<i32: 1, 2, 1>} : memref<2x64x32xf32, #tpu.memory_space<vmem>>, vector<2x32x32xf32>
      %50 = arith.maximumf %48, %49 : vector<2x32x32xf32>
      %c2_i32 = arith.constant 2 : i32
      %51 = arith.muli %c2_i32, %arg14 : i32
      %c1_i32_53 = arith.constant 1 : i32
      %52 = arith.addi %c1_i32_53, %51 : i32
      %53 = arith.index_cast %52 : i32 to index
      %c8 = arith.constant 8 : index
      %c0_54 = arith.constant 0 : index
      %54 = vector.load %arg9[%53, %c8, %c0_54] : memref<34x48x32xf32, #tpu.memory_space<vmem>>, vector<2x32x32xf32>
      tpu.vector_store %arg9[%53, %c8, %c0_54], %50 {strides = array<i32>} : memref<34x48x32xf32, #tpu.memory_space<vmem>>, vector<2x32x32xf32>,
    }
    %c16_i32_34 = arith.constant 16 : i32
    %c0_i32_35 = arith.constant 0 : i32
    %c8_i32 = arith.constant 8 : i32
    %29 = arith.addi %c0_i32_35, %c8_i32 : i32
    %c1_i32_36 = arith.constant 1 : i32
    scf.for %arg14 = %c0_i32_35 to %29 step %c1_i32_36  : i32 {
      %c4_i32_41 = arith.constant 4 : i32
      %31 = arith.muli %arg14, %c4_i32_41 : i32
      %32 = tpu.assume_multiple %31, 4 : i32
      %cst_42 = arith.constant 0.000000e+00 : f32
      %33 = vector.broadcast %cst_42 : f32 to vector<128x32xf32>
      %c0_i32_43 = arith.constant 0 : i32
      %34 = arith.addi %32, %c0_i32_43 : i32
      %35 = arith.index_cast %34 : i32 to index
      %c7 = arith.constant 7 : index
      %c0_44 = arith.constant 0 : index
      %36 = vector.load %arg9[%35, %c7, %c0_44] : memref<34x48x32xf32, #tpu.memory_space<vmem>>, vector<4x32x32xf32>
      %37 = vector.shape_cast %36 : vector<4x32x32xf32> to vector<128x32xf32>
      %c0_45 = arith.constant 0 : index
      %c0_46 = arith.constant 0 : index
      %38 = vector.load %arg4[%c0_45, %c0_46] : memref<288x32xf32, #tpu.memory_space<vmem>>, vector<32x32xf32>
      %cst_47 = arith.constant dense<0.000000e+00> : vector<128x32xf32>
      %39 = tpu.matmul %37, %38, %cst_47 {dimension_numbers = #tpu.dot_dimension_numbers<[1], [0], [0], [1], [0, 0, 1, 1], [], []>} : vector<128x32xf32>, vector<32x32xf32>, vector<128x32xf32> -> vector<128x32xf32>
      %40 = arith.addf %33, %39 : vector<128x32xf32>
      %c0_i32_48 = arith.constant 0 : i32
      %41 = arith.addi %32, %c0_i32_48 : i32
      %42 = arith.index_cast %41 : i32 to index
      %c8 = arith.constant 8 : index
      %c0_49 = arith.constant 0 : index
      %43 = vector.load %arg9[%42, %c8, %c0_49] : memref<34x48x32xf32, #tpu.memory_space<vmem>>, vector<4x32x32xf32>
      %44 = vector.shape_cast %43 : vector<4x32x32xf32> to vector<128x32xf32>
      %c32 = arith.constant 32 : index
      %c0_50 = arith.constant 0 : index
      %45 = vector.load %arg4[%c32, %c0_50] : memref<288x32xf32, #tpu.memory_space<vmem>>, vector<32x32xf32>
      %cst_51 = arith.constant dense<0.000000e+00> : vector<128x32xf32>
      %46 = tpu.matmul %44, %45, %cst_51 {dimension_numbers = #tpu.dot_dimension_numbers<[1], [0], [0], [1], [0, 0, 1, 1], [], []>} : vector<128x32xf32>, vector<32x32xf32>, vector<128x32xf32> -> vector<128x32xf32>
      %47 = arith.addf %40, %46 : vector<128x32xf32>
      %c0_i32_52 = arith.constant 0 : i32
      %48 = arith.addi %32, %c0_i32_52 : i32
      %49 = arith.index_cast %48 : i32 to index
      %c9 = arith.constant 9 : index
      %c0_53 = arith.constant 0 : index
      %50 = vector.load %arg9[%49, %c9, %c0_53] : memref<34x48x32xf32, #tpu.memory_space<vmem>>, vector<4x32x32xf32>
      %51 = vector.shape_cast %50 : vector<4x32x32xf32> to vector<128x32xf32>
      %c64 = arith.constant 64 : index
      %c0_54 = arith.constant 0 : index
      %52 = vector.load %arg4[%c64, %c0_54] : memref<288x32xf32, #tpu.memory_space<vmem>>, vector<32x32xf32>
      %cst_55 = arith.constant dense<0.000000e+00> : vector<128x32xf32>
      %53 = tpu.matmul %51, %52, %cst_55 {dimension_numbers = #tpu.dot_dimension_numbers<[1], [0], [0], [1], [0, 0, 1, 1], [], []>} : vector<128x32xf32>, vector<32x32xf32>, vector<128x32xf32> -> vector<128x32xf32>
      %54 = arith.addf %47, %53 : vector<128x32xf32>
      %c1_i32_56 = arith.constant 1 : i32
      %55 = arith.addi %32, %c1_i32_56 : i32
      %56 = arith.index_cast %55 : i32 to index
      %c7_57 = arith.constant 7 : index
      %c0_58 = arith.constant 0 : index
      %57 = vector.load %arg9[%56, %c7_57, %c0_58] : memref<34x48x32xf32, #tpu.memory_space<vmem>>, vector<4x32x32xf32>
      %58 = vector.shape_cast %57 : vector<4x32x32xf32> to vector<128x32xf32>
      %c96 = arith.constant 96 : index
      %c0_59 = arith.constant 0 : index
      %59 = vector.load %arg4[%c96, %c0_59] : memref<288x32xf32, #tpu.memory_space<vmem>>, vector<32x32xf32>
      %cst_60 = arith.constant dense<0.000000e+00> : vector<128x32xf32>
      %60 = tpu.matmul %58, %59, %cst_60 {dimension_numbers = #tpu.dot_dimension_numbers<[1], [0], [0], [1], [0, 0, 1, 1], [], []>} : vector<128x32xf32>, vector<32x32xf32>, vector<128x32xf32> -> vector<128x32xf32>
      %61 = arith.addf %54, %60 : vector<128x32xf32>
      %c1_i32_61 = arith.constant 1 : i32
      %62 = arith.addi %32, %c1_i32_61 : i32
      %63 = arith.index_cast %62 : i32 to index
      %c8_62 = arith.constant 8 : index
      %c0_63 = arith.constant 0 : index
      %64 = vector.load %arg9[%63, %c8_62, %c0_63] : memref<34x48x32xf32, #tpu.memory_space<vmem>>, vector<4x32x32xf32>
      %65 = vector.shape_cast %64 : vector<4x32x32xf32> to vector<128x32xf32>
      %c128 = arith.constant 128 : index
      %c0_64 = arith.constant 0 : index
      %66 = vector.load %arg4[%c128, %c0_64] : memref<288x32xf32, #tpu.memory_space<vmem>>, vector<32x32xf32>
      %cst_65 = arith.constant dense<0.000000e+00> : vector<128x32xf32>
      %67 = tpu.matmul %65, %66, %cst_65 {dimension_numbers = #tpu.dot_dimension_numbers<[1], [0], [0], [1], [0, 0, 1, 1], [], []>} : vector<128x32xf32>, vector<32x32xf32>, vector<128x32xf32> -> vector<128x32xf32>
      %68 = arith.addf %61, %67 : vector<128x32xf32>
      %c1_i32_66 = arith.constant 1 : i32
      %69 = arith.addi %32, %c1_i32_66 : i32
      %70 = arith.index_cast %69 : i32 to index
      %c9_67 = arith.constant 9 : index
      %c0_68 = arith.constant 0 : index
      %71 = vector.load %arg9[%70, %c9_67, %c0_68] : memref<34x48x32xf32, #tpu.memory_space<vmem>>, vector<4x32x32xf32>
      %72 = vector.shape_cast %71 : vector<4x32x32xf32> to vector<128x32xf32>
      %c160 = arith.constant 160 : index
      %c0_69 = arith.constant 0 : index
      %73 = vector.load %arg4[%c160, %c0_69] : memref<288x32xf32, #tpu.memory_space<vmem>>, vector<32x32xf32>
      %cst_70 = arith.constant dense<0.000000e+00> : vector<128x32xf32>
      %74 = tpu.matmul %72, %73, %cst_70 {dimension_numbers = #tpu.dot_dimension_numbers<[1], [0], [0], [1], [0, 0, 1, 1], [], []>} : vector<128x32xf32>, vector<32x32xf32>, vector<128x32xf32> -> vector<128x32xf32>
      %75 = arith.addf %68, %74 : vector<128x32xf32>
      %c2_i32 = arith.constant 2 : i32
      %76 = arith.addi %32, %c2_i32 : i32
      %77 = arith.index_cast %76 : i32 to index
      %c7_71 = arith.constant 7 : index
      %c0_72 = arith.constant 0 : index
      %78 = vector.load %arg9[%77, %c7_71, %c0_72] : memref<34x48x32xf32, #tpu.memory_space<vmem>>, vector<4x32x32xf32>
      %79 = vector.shape_cast %78 : vector<4x32x32xf32> to vector<128x32xf32>
      %c192 = arith.constant 192 : index
      %c0_73 = arith.constant 0 : index
      %80 = vector.load %arg4[%c192, %c0_73] : memref<288x32xf32, #tpu.memory_space<vmem>>, vector<32x32xf32>
      %cst_74 = arith.constant dense<0.000000e+00> : vector<128x32xf32>
      %81 = tpu.matmul %79, %80, %cst_74 {dimension_numbers = #tpu.dot_dimension_numbers<[1], [0], [0], [1], [0, 0, 1, 1], [], []>} : vector<128x32xf32>, vector<32x32xf32>, vector<128x32xf32> -> vector<128x32xf32>
      %82 = arith.addf %75, %81 : vector<128x32xf32>
      %c2_i32_75 = arith.constant 2 : i32
      %83 = arith.addi %32, %c2_i32_75 : i32
      %84 = arith.index_cast %83 : i32 to index
      %c8_76 = arith.constant 8 : index
      %c0_77 = arith.constant 0 : index
      %85 = vector.load %arg9[%84, %c8_76, %c0_77] : memref<34x48x32xf32, #tpu.memory_space<vmem>>, vector<4x32x32xf32>
      %86 = vector.shape_cast %85 : vector<4x32x32xf32> to vector<128x32xf32>
      %c224 = arith.constant 224 : index
      %c0_78 = arith.constant 0 : index
      %87 = vector.load %arg4[%c224, %c0_78] : memref<288x32xf32, #tpu.memory_space<vmem>>, vector<32x32xf32>
      %cst_79 = arith.constant dense<0.000000e+00> : vector<128x32xf32>
      %88 = tpu.matmul %86, %87, %cst_79 {dimension_numbers = #tpu.dot_dimension_numbers<[1], [0], [0], [1], [0, 0, 1, 1], [], []>} : vector<128x32xf32>, vector<32x32xf32>, vector<128x32xf32> -> vector<128x32xf32>
      %89 = arith.addf %82, %88 : vector<128x32xf32>
      %c2_i32_80 = arith.constant 2 : i32
      %90 = arith.addi %32, %c2_i32_80 : i32
      %91 = arith.index_cast %90 : i32 to index
      %c9_81 = arith.constant 9 : index
      %c0_82 = arith.constant 0 : index
      %92 = vector.load %arg9[%91, %c9_81, %c0_82] : memref<34x48x32xf32, #tpu.memory_space<vmem>>, vector<4x32x32xf32>
      %93 = vector.shape_cast %92 : vector<4x32x32xf32> to vector<128x32xf32>
      %c256 = arith.constant 256 : index
      %c0_83 = arith.constant 0 : index
      %94 = vector.load %arg4[%c256, %c0_83] : memref<288x32xf32, #tpu.memory_space<vmem>>, vector<32x32xf32>
      %cst_84 = arith.constant dense<0.000000e+00> : vector<128x32xf32>
      %95 = tpu.matmul %93, %94, %cst_84 {dimension_numbers = #tpu.dot_dimension_numbers<[1], [0], [0], [1], [0, 0, 1, 1], [], []>} : vector<128x32xf32>, vector<32x32xf32>, vector<128x32xf32> -> vector<128x32xf32>
      %96 = arith.addf %89, %95 : vector<128x32xf32>
      %97 = vector.broadcast %26 : vector<1x32xf32> to vector<128x32xf32>
      %98 = arith.addf %96, %97 : vector<128x32xf32>
      %cst_85 = arith.constant 0.000000e+00 : f32
      %99 = vector.broadcast %cst_85 : f32 to vector<128x32xf32>
      %100 = arith.maximumf %98, %99 : vector<128x32xf32>
      %101 = vector.shape_cast %100 : vector<128x32xf32> to vector<2x2x32x32xf32>
      %102 = vector.extract_strided_slice %101 {offsets = [0, 0, 0, 0], sizes = [2, 1, 32, 32], strides = [1, 1, 1, 1]} : vector<2x2x32x32xf32> to vector<2x1x32x32xf32>
      %103 = vector.shape_cast %102 : vector<2x1x32x32xf32> to vector<2x32x32xf32>
      %104 = vector.extract_strided_slice %101 {offsets = [0, 1, 0, 0], sizes = [2, 1, 32, 32], strides = [1, 1, 1, 1]} : vector<2x2x32x32xf32> to vector<2x1x32x32xf32>
      %105 = vector.shape_cast %104 : vector<2x1x32x32xf32> to vector<2x32x32xf32>
      %106 = arith.maximumf %103, %105 : vector<2x32x32xf32>
      %c0_86 = arith.constant 0 : index
      %c0_87 = arith.constant 0 : index
      %c0_88 = arith.constant 0 : index
      %107 = vector.load %arg12[%c0_86, %c0_87, %c0_88] : memref<2x32x32xf32, #tpu.memory_space<vmem>>, vector<2x32x32xf32>
      tpu.vector_store %arg12[%c0_86, %c0_87, %c0_88], %106 {strides = array<i32>} : memref<2x32x32xf32, #tpu.memory_space<vmem>>, vector<2x32x32xf32>,
      %c0_89 = arith.constant 0 : index
      %c0_90 = arith.constant 0 : index
      %c0_91 = arith.constant 0 : index
      %108 = tpu.strided_load %arg12[%c0_89, %c0_90, %c0_91] {strides = array<i32: 1, 2, 1>} : memref<2x32x32xf32, #tpu.memory_space<vmem>>, vector<2x16x32xf32>
      %c0_92 = arith.constant 0 : index
      %c1 = arith.constant 1 : index
      %c0_93 = arith.constant 0 : index
      %109 = tpu.strided_load %arg12[%c0_92, %c1, %c0_93] {strides = array<i32: 1, 2, 1>} : memref<2x32x32xf32, #tpu.memory_space<vmem>>, vector<2x16x32xf32>
      %110 = arith.maximumf %108, %109 : vector<2x16x32xf32>
      %c2_i32_94 = arith.constant 2 : i32
      %111 = arith.muli %c2_i32_94, %arg14 : i32
      %c1_i32_95 = arith.constant 1 : i32
      %112 = arith.addi %c1_i32_95, %111 : i32
      %113 = arith.index_cast %112 : i32 to index
      %c8_96 = arith.constant 8 : index
      %c0_97 = arith.constant 0 : index
      %114 = vector.load %arg10[%113, %c8_96, %c0_97] : memref<18x32x32xf32, #tpu.memory_space<vmem>>, vector<2x16x32xf32>
      tpu.vector_store %arg10[%113, %c8_96, %c0_97], %110 {strides = array<i32>} : memref<18x32x32xf32, #tpu.memory_space<vmem>>, vector<2x16x32xf32>,
    }
    %c8_i32_37 = arith.constant 8 : i32
    %c0_i32_38 = arith.constant 0 : i32
    %c4_i32 = arith.constant 4 : i32
    %30 = arith.addi %c0_i32_38, %c4_i32 : i32
    %c1_i32_39 = arith.constant 1 : i32
    scf.for %arg14 = %c0_i32_38 to %30 step %c1_i32_39  : i32 {
      %c4_i32_41 = arith.constant 4 : i32
      %31 = arith.muli %arg14, %c4_i32_41 : i32
      %32 = tpu.assume_multiple %31, 4 : i32
      %cst_42 = arith.constant 0.000000e+00 : f32
      %33 = vector.broadcast %cst_42 : f32 to vector<64x16xf32>
      %c0_i32_43 = arith.constant 0 : i32
      %34 = arith.addi %32, %c0_i32_43 : i32
      %35 = arith.index_cast %34 : i32 to index
      %c7 = arith.constant 7 : index
      %c0_44 = arith.constant 0 : index
      %36 = vector.load %arg10[%35, %c7, %c0_44] : memref<18x32x32xf32, #tpu.memory_space<vmem>>, vector<4x16x32xf32>
      %37 = vector.shape_cast %36 : vector<4x16x32xf32> to vector<64x32xf32>
      %c0_45 = arith.constant 0 : index
      %c0_46 = arith.constant 0 : index
      %38 = vector.load %arg6[%c0_45, %c0_46] : memref<288x16xf32, #tpu.memory_space<vmem>>, vector<32x16xf32>
      %cst_47 = arith.constant dense<0.000000e+00> : vector<64x16xf32>
      %39 = tpu.matmul %37, %38, %cst_47 {dimension_numbers = #tpu.dot_dimension_numbers<[1], [0], [0], [1], [0, 0, 1, 1], [], []>} : vector<64x32xf32>, vector<32x16xf32>, vector<64x16xf32> -> vector<64x16xf32>
      %40 = arith.addf %33, %39 : vector<64x16xf32>
      %c0_i32_48 = arith.constant 0 : i32
      %41 = arith.addi %32, %c0_i32_48 : i32
      %42 = arith.index_cast %41 : i32 to index
      %c8 = arith.constant 8 : index
      %c0_49 = arith.constant 0 : index
      %43 = vector.load %arg10[%42, %c8, %c0_49] : memref<18x32x32xf32, #tpu.memory_space<vmem>>, vector<4x16x32xf32>
      %44 = vector.shape_cast %43 : vector<4x16x32xf32> to vector<64x32xf32>
      %c32 = arith.constant 32 : index
      %c0_50 = arith.constant 0 : index
      %45 = vector.load %arg6[%c32, %c0_50] : memref<288x16xf32, #tpu.memory_space<vmem>>, vector<32x16xf32>
      %cst_51 = arith.constant dense<0.000000e+00> : vector<64x16xf32>
      %46 = tpu.matmul %44, %45, %cst_51 {dimension_numbers = #tpu.dot_dimension_numbers<[1], [0], [0], [1], [0, 0, 1, 1], [], []>} : vector<64x32xf32>, vector<32x16xf32>, vector<64x16xf32> -> vector<64x16xf32>
      %47 = arith.addf %40, %46 : vector<64x16xf32>
      %c0_i32_52 = arith.constant 0 : i32
      %48 = arith.addi %32, %c0_i32_52 : i32
      %49 = arith.index_cast %48 : i32 to index
      %c9 = arith.constant 9 : index
      %c0_53 = arith.constant 0 : index
      %50 = vector.load %arg10[%49, %c9, %c0_53] : memref<18x32x32xf32, #tpu.memory_space<vmem>>, vector<4x16x32xf32>
      %51 = vector.shape_cast %50 : vector<4x16x32xf32> to vector<64x32xf32>
      %c64 = arith.constant 64 : index
      %c0_54 = arith.constant 0 : index
      %52 = vector.load %arg6[%c64, %c0_54] : memref<288x16xf32, #tpu.memory_space<vmem>>, vector<32x16xf32>
      %cst_55 = arith.constant dense<0.000000e+00> : vector<64x16xf32>
      %53 = tpu.matmul %51, %52, %cst_55 {dimension_numbers = #tpu.dot_dimension_numbers<[1], [0], [0], [1], [0, 0, 1, 1], [], []>} : vector<64x32xf32>, vector<32x16xf32>, vector<64x16xf32> -> vector<64x16xf32>
      %54 = arith.addf %47, %53 : vector<64x16xf32>
      %c1_i32_56 = arith.constant 1 : i32
      %55 = arith.addi %32, %c1_i32_56 : i32
      %56 = arith.index_cast %55 : i32 to index
      %c7_57 = arith.constant 7 : index
      %c0_58 = arith.constant 0 : index
      %57 = vector.load %arg10[%56, %c7_57, %c0_58] : memref<18x32x32xf32, #tpu.memory_space<vmem>>, vector<4x16x32xf32>
      %58 = vector.shape_cast %57 : vector<4x16x32xf32> to vector<64x32xf32>
      %c96 = arith.constant 96 : index
      %c0_59 = arith.constant 0 : index
      %59 = vector.load %arg6[%c96, %c0_59] : memref<288x16xf32, #tpu.memory_space<vmem>>, vector<32x16xf32>
      %cst_60 = arith.constant dense<0.000000e+00> : vector<64x16xf32>
      %60 = tpu.matmul %58, %59, %cst_60 {dimension_numbers = #tpu.dot_dimension_numbers<[1], [0], [0], [1], [0, 0, 1, 1], [], []>} : vector<64x32xf32>, vector<32x16xf32>, vector<64x16xf32> -> vector<64x16xf32>
      %61 = arith.addf %54, %60 : vector<64x16xf32>
      %c1_i32_61 = arith.constant 1 : i32
      %62 = arith.addi %32, %c1_i32_61 : i32
      %63 = arith.index_cast %62 : i32 to index
      %c8_62 = arith.constant 8 : index
      %c0_63 = arith.constant 0 : index
      %64 = vector.load %arg10[%63, %c8_62, %c0_63] : memref<18x32x32xf32, #tpu.memory_space<vmem>>, vector<4x16x32xf32>
      %65 = vector.shape_cast %64 : vector<4x16x32xf32> to vector<64x32xf32>
      %c128 = arith.constant 128 : index
      %c0_64 = arith.constant 0 : index
      %66 = vector.load %arg6[%c128, %c0_64] : memref<288x16xf32, #tpu.memory_space<vmem>>, vector<32x16xf32>
      %cst_65 = arith.constant dense<0.000000e+00> : vector<64x16xf32>
      %67 = tpu.matmul %65, %66, %cst_65 {dimension_numbers = #tpu.dot_dimension_numbers<[1], [0], [0], [1], [0, 0, 1, 1], [], []>} : vector<64x32xf32>, vector<32x16xf32>, vector<64x16xf32> -> vector<64x16xf32>
      %68 = arith.addf %61, %67 : vector<64x16xf32>
      %c1_i32_66 = arith.constant 1 : i32
      %69 = arith.addi %32, %c1_i32_66 : i32
      %70 = arith.index_cast %69 : i32 to index
      %c9_67 = arith.constant 9 : index
      %c0_68 = arith.constant 0 : index
      %71 = vector.load %arg10[%70, %c9_67, %c0_68] : memref<18x32x32xf32, #tpu.memory_space<vmem>>, vector<4x16x32xf32>
      %72 = vector.shape_cast %71 : vector<4x16x32xf32> to vector<64x32xf32>
      %c160 = arith.constant 160 : index
      %c0_69 = arith.constant 0 : index
      %73 = vector.load %arg6[%c160, %c0_69] : memref<288x16xf32, #tpu.memory_space<vmem>>, vector<32x16xf32>
      %cst_70 = arith.constant dense<0.000000e+00> : vector<64x16xf32>
      %74 = tpu.matmul %72, %73, %cst_70 {dimension_numbers = #tpu.dot_dimension_numbers<[1], [0], [0], [1], [0, 0, 1, 1], [], []>} : vector<64x32xf32>, vector<32x16xf32>, vector<64x16xf32> -> vector<64x16xf32>
      %75 = arith.addf %68, %74 : vector<64x16xf32>
      %c2_i32 = arith.constant 2 : i32
      %76 = arith.addi %32, %c2_i32 : i32
      %77 = arith.index_cast %76 : i32 to index
      %c7_71 = arith.constant 7 : index
      %c0_72 = arith.constant 0 : index
      %78 = vector.load %arg10[%77, %c7_71, %c0_72] : memref<18x32x32xf32, #tpu.memory_space<vmem>>, vector<4x16x32xf32>
      %79 = vector.shape_cast %78 : vector<4x16x32xf32> to vector<64x32xf32>
      %c192 = arith.constant 192 : index
      %c0_73 = arith.constant 0 : index
      %80 = vector.load %arg6[%c192, %c0_73] : memref<288x16xf32, #tpu.memory_space<vmem>>, vector<32x16xf32>
      %cst_74 = arith.constant dense<0.000000e+00> : vector<64x16xf32>
      %81 = tpu.matmul %79, %80, %cst_74 {dimension_numbers = #tpu.dot_dimension_numbers<[1], [0], [0], [1], [0, 0, 1, 1], [], []>} : vector<64x32xf32>, vector<32x16xf32>, vector<64x16xf32> -> vector<64x16xf32>
      %82 = arith.addf %75, %81 : vector<64x16xf32>
      %c2_i32_75 = arith.constant 2 : i32
      %83 = arith.addi %32, %c2_i32_75 : i32
      %84 = arith.index_cast %83 : i32 to index
      %c8_76 = arith.constant 8 : index
      %c0_77 = arith.constant 0 : index
      %85 = vector.load %arg10[%84, %c8_76, %c0_77] : memref<18x32x32xf32, #tpu.memory_space<vmem>>, vector<4x16x32xf32>
      %86 = vector.shape_cast %85 : vector<4x16x32xf32> to vector<64x32xf32>
      %c224 = arith.constant 224 : index
      %c0_78 = arith.constant 0 : index
      %87 = vector.load %arg6[%c224, %c0_78] : memref<288x16xf32, #tpu.memory_space<vmem>>, vector<32x16xf32>
      %cst_79 = arith.constant dense<0.000000e+00> : vector<64x16xf32>
      %88 = tpu.matmul %86, %87, %cst_79 {dimension_numbers = #tpu.dot_dimension_numbers<[1], [0], [0], [1], [0, 0, 1, 1], [], []>} : vector<64x32xf32>, vector<32x16xf32>, vector<64x16xf32> -> vector<64x16xf32>
      %89 = arith.addf %82, %88 : vector<64x16xf32>
      %c2_i32_80 = arith.constant 2 : i32
      %90 = arith.addi %32, %c2_i32_80 : i32
      %91 = arith.index_cast %90 : i32 to index
      %c9_81 = arith.constant 9 : index
      %c0_82 = arith.constant 0 : index
      %92 = vector.load %arg10[%91, %c9_81, %c0_82] : memref<18x32x32xf32, #tpu.memory_space<vmem>>, vector<4x16x32xf32>
      %93 = vector.shape_cast %92 : vector<4x16x32xf32> to vector<64x32xf32>
      %c256 = arith.constant 256 : index
      %c0_83 = arith.constant 0 : index
      %94 = vector.load %arg6[%c256, %c0_83] : memref<288x16xf32, #tpu.memory_space<vmem>>, vector<32x16xf32>
      %cst_84 = arith.constant dense<0.000000e+00> : vector<64x16xf32>
      %95 = tpu.matmul %93, %94, %cst_84 {dimension_numbers = #tpu.dot_dimension_numbers<[1], [0], [0], [1], [0, 0, 1, 1], [], []>} : vector<64x32xf32>, vector<32x16xf32>, vector<64x16xf32> -> vector<64x16xf32>
      %96 = arith.addf %89, %95 : vector<64x16xf32>
      %97 = vector.broadcast %27 : vector<1x16xf32> to vector<64x16xf32>
      %98 = arith.addf %96, %97 : vector<64x16xf32>
      %cst_85 = arith.constant 0.000000e+00 : f32
      %99 = vector.broadcast %cst_85 : f32 to vector<64x16xf32>
      %100 = arith.maximumf %98, %99 : vector<64x16xf32>
      %101 = vector.shape_cast %100 : vector<64x16xf32> to vector<2x2x16x16xf32>
      %102 = vector.extract_strided_slice %101 {offsets = [0, 0, 0, 0], sizes = [2, 1, 16, 16], strides = [1, 1, 1, 1]} : vector<2x2x16x16xf32> to vector<2x1x16x16xf32>
      %103 = vector.shape_cast %102 : vector<2x1x16x16xf32> to vector<2x16x16xf32>
      %104 = vector.extract_strided_slice %101 {offsets = [0, 1, 0, 0], sizes = [2, 1, 16, 16], strides = [1, 1, 1, 1]} : vector<2x2x16x16xf32> to vector<2x1x16x16xf32>
      %105 = vector.shape_cast %104 : vector<2x1x16x16xf32> to vector<2x16x16xf32>
      %106 = arith.maximumf %103, %105 : vector<2x16x16xf32>
      %c0_86 = arith.constant 0 : index
      %c0_87 = arith.constant 0 : index
      %c0_88 = arith.constant 0 : index
      %107 = vector.load %arg13[%c0_86, %c0_87, %c0_88] : memref<2x16x16xf32, #tpu.memory_space<vmem>>, vector<2x16x16xf32>
      tpu.vector_store %arg13[%c0_86, %c0_87, %c0_88], %106 {strides = array<i32>} : memref<2x16x16xf32, #tpu.memory_space<vmem>>, vector<2x16x16xf32>,
      %c0_89 = arith.constant 0 : index
      %c0_90 = arith.constant 0 : index
      %c0_91 = arith.constant 0 : index
      %108 = tpu.strided_load %arg13[%c0_89, %c0_90, %c0_91] {strides = array<i32: 1, 2, 1>} : memref<2x16x16xf32, #tpu.memory_space<vmem>>, vector<2x8x16xf32>
      %c0_92 = arith.constant 0 : index
      %c1 = arith.constant 1 : index
      %c0_93 = arith.constant 0 : index
      %109 = tpu.strided_load %arg13[%c0_92, %c1, %c0_93] {strides = array<i32: 1, 2, 1>} : memref<2x16x16xf32, #tpu.memory_space<vmem>>, vector<2x8x16xf32>
      %110 = arith.maximumf %108, %109 : vector<2x8x16xf32>
      %111 = vector.shape_cast %110 : vector<2x8x16xf32> to vector<16x16xf32>
      %c16_i32_94 = arith.constant 16 : i32
      %112 = arith.muli %arg14, %c16_i32_94 : i32
      %113 = tpu.assume_multiple %112, 16 : i32
      %c0_95 = arith.constant 0 : index
      %114 = arith.index_cast %113 : i32 to index
      %c0_96 = arith.constant 0 : index
      %115 = vector.load %arg8[%c0_95, %114, %c0_96] : memref<1x64x16xf32, #tpu.memory_space<vmem>>, vector<1x16x16xf32>
      %116 = vector.shape_cast %115 : vector<1x16x16xf32> to vector<16x16xf32>
      %117 = vector.shape_cast %111 : vector<16x16xf32> to vector<1x16x16xf32>
      tpu.vector_store %arg8[%c0_95, %114, %c0_96], %117 {strides = array<i32>} : memref<1x64x16xf32, #tpu.memory_space<vmem>>, vector<1x16x16xf32>,
    }
    %c4_i32_40 = arith.constant 4 : i32
    return
  }
  func.func @transform_0(%arg0: i32) -> (i32, i32, i32) {
    %c0_i32 = arith.constant 0 : i32
    %c0_i32_0 = arith.constant 0 : i32
    %c0_i32_1 = arith.constant 0 : i32
    return %arg0, %c0_i32, %c0_i32_0 : i32, i32, i32
  }
  func.func @transform_1(%arg0: i32) -> (i32, i32) {
    %c0_i32 = arith.constant 0 : i32
    %c0_i32_0 = arith.constant 0 : i32
    %c0_i32_1 = arith.constant 0 : i32
    return %c0_i32, %c0_i32_0 : i32, i32
  }
  func.func @transform_2(%arg0: i32) -> (i32, i32) {
    %c0_i32 = arith.constant 0 : i32
    %c0_i32_0 = arith.constant 0 : i32
    %c0_i32_1 = arith.constant 0 : i32
    return %c0_i32, %c0_i32_0 : i32, i32
  }
  func.func @transform_3(%arg0: i32) -> (i32, i32) {
    %c0_i32 = arith.constant 0 : i32
    %c0_i32_0 = arith.constant 0 : i32
    %c0_i32_1 = arith.constant 0 : i32
    return %c0_i32, %c0_i32_0 : i32, i32
  }
  func.func @transform_4(%arg0: i32) -> (i32, i32) {
    %c0_i32 = arith.constant 0 : i32
    %c0_i32_0 = arith.constant 0 : i32
    %c0_i32_1 = arith.constant 0 : i32
    return %c0_i32, %c0_i32_0 : i32, i32
  }
  func.func @transform_5(%arg0: i32) -> (i32, i32) {
    %c0_i32 = arith.constant 0 : i32
    %c0_i32_0 = arith.constant 0 : i32
    %c0_i32_1 = arith.constant 0 : i32
    return %c0_i32, %c0_i32_0 : i32, i32
  }
  func.func @transform_6(%arg0: i32) -> (i32, i32) {
    %c0_i32 = arith.constant 0 : i32
    %c0_i32_0 = arith.constant 0 : i32
    %c0_i32_1 = arith.constant 0 : i32
    return %c0_i32, %c0_i32_0 : i32, i32
  }
  func.func @transform_7(%arg0: i32) -> (i32, i32, i32) {
    %c0_i32 = arith.constant 0 : i32
    %c0_i32_0 = arith.constant 0 : i32
    %c0_i32_1 = arith.constant 0 : i32
    return %arg0, %c0_i32, %c0_i32_0 : i32, i32, i32
  }
}

module attributes {stable_mosaic.version = 11 : i64} {
  func.func @mlp_head_kernel(%arg0: i32, %arg1: memref<2x1024xf32, #tpu.memory_space<vmem>>, %arg2: memref<1024x128xf32, #tpu.memory_space<vmem>>, %arg3: memref<1x128xf32, #tpu.memory_space<vmem>>, %arg4: memref<128x1xf32, #tpu.memory_space<vmem>>, %arg5: memref<1x1xf32, #tpu.memory_space<vmem>>, %arg6: memref<2x1xf32, #tpu.memory_space<vmem>>) attributes {dimension_semantics = [#tpu.dimension_semantics<parallel>], iteration_bounds = array<i64: 1>, scalar_prefetch = 0 : i64, scratch_operands = 0 : i64, tpu.core_type = #tpu.core_type<tc>, window_params = [{transform_indices = @transform_0, window_bounds = array<i64: 2, 1024>}, {pipeline_mode = #tpu.pipeline_mode<synchronous>, transform_indices = @transform_1, window_bounds = array<i64: 1024, 128>}, {pipeline_mode = #tpu.pipeline_mode<synchronous>, transform_indices = @transform_2, window_bounds = array<i64: 1, 128>}, {pipeline_mode = #tpu.pipeline_mode<synchronous>, transform_indices = @transform_3, window_bounds = array<i64: 128, 1>}, {pipeline_mode = #tpu.pipeline_mode<synchronous>, transform_indices = @transform_4, window_bounds = array<i64: 1, 1>}, {transform_indices = @transform_5, window_bounds = array<i64: 2, 1>}]} {
    %c0 = arith.constant 0 : index
    %c0_0 = arith.constant 0 : index
    %0 = vector.load %arg1[%c0, %c0_0] : memref<2x1024xf32, #tpu.memory_space<vmem>>, vector<2x1024xf32>
    %c0_1 = arith.constant 0 : index
    %c0_2 = arith.constant 0 : index
    %1 = vector.load %arg2[%c0_1, %c0_2] : memref<1024x128xf32, #tpu.memory_space<vmem>>, vector<1024x128xf32>
    %cst = arith.constant dense<0.000000e+00> : vector<2x128xf32>
    %2 = tpu.matmul %0, %1, %cst {dimension_numbers = #tpu.dot_dimension_numbers<[1], [0], [0], [1], [0, 0, 1, 1], [], []>} : vector<2x1024xf32>, vector<1024x128xf32>, vector<2x128xf32> -> vector<2x128xf32>
    %c0_3 = arith.constant 0 : index
    %c0_4 = arith.constant 0 : index
    %3 = vector.load %arg3[%c0_3, %c0_4] : memref<1x128xf32, #tpu.memory_space<vmem>>, vector<1x128xf32>
    %4 = vector.broadcast %3 : vector<1x128xf32> to vector<2x128xf32>
    %5 = arith.addf %2, %4 : vector<2x128xf32>
    %cst_5 = arith.constant 0.000000e+00 : f32
    %6 = vector.broadcast %cst_5 : f32 to vector<2x128xf32>
    %7 = arith.maximumf %5, %6 : vector<2x128xf32>
    %c0_6 = arith.constant 0 : index
    %c0_7 = arith.constant 0 : index
    %8 = vector.load %arg4[%c0_6, %c0_7] : memref<128x1xf32, #tpu.memory_space<vmem>>, vector<128x1xf32>
    %cst_8 = arith.constant dense<0.000000e+00> : vector<2x1xf32>
    %9 = tpu.matmul %7, %8, %cst_8 {dimension_numbers = #tpu.dot_dimension_numbers<[1], [0], [0], [1], [0, 0, 1, 1], [], []>} : vector<2x128xf32>, vector<128x1xf32>, vector<2x1xf32> -> vector<2x1xf32>
    %c0_9 = arith.constant 0 : index
    %c0_10 = arith.constant 0 : index
    %10 = vector.load %arg5[%c0_9, %c0_10] : memref<1x1xf32, #tpu.memory_space<vmem>>, vector<1x1xf32>
    %11 = vector.broadcast %10 : vector<1x1xf32> to vector<2x1xf32>
    %12 = arith.addf %9, %11 : vector<2x1xf32>
    %cst_11 = arith.constant 0.000000e+00 : f32
    %13 = vector.broadcast %cst_11 : f32 to vector<2x1xf32>
    %14 = arith.subf %13, %12 : vector<2x1xf32>
    %15 = math.exp %14 : vector<2x1xf32>
    %cst_12 = arith.constant 1.000000e+00 : f32
    %16 = vector.broadcast %cst_12 : f32 to vector<2x1xf32>
    %17 = arith.addf %16, %15 : vector<2x1xf32>
    %cst_13 = arith.constant 1.000000e+00 : f32
    %18 = vector.broadcast %cst_13 : f32 to vector<2x1xf32>
    %19 = arith.divf %18, %17 : vector<2x1xf32>
    %c0_14 = arith.constant 0 : index
    %c0_15 = arith.constant 0 : index
    %20 = vector.load %arg6[%c0_14, %c0_15] : memref<2x1xf32, #tpu.memory_space<vmem>>, vector<2x1xf32>
    tpu.vector_store %arg6[%c0_14, %c0_15], %19 {strides = array<i32>} : memref<2x1xf32, #tpu.memory_space<vmem>>, vector<2x1xf32>,
    return
  }
  func.func @transform_0(%arg0: i32) -> (i32, i32) {
    %c0_i32 = arith.constant 0 : i32
    %c0_i32_0 = arith.constant 0 : i32
    return %arg0, %c0_i32 : i32, i32
  }
  func.func @transform_1(%arg0: i32) -> (i32, i32) {
    %c0_i32 = arith.constant 0 : i32
    %c0_i32_0 = arith.constant 0 : i32
    %c0_i32_1 = arith.constant 0 : i32
    return %c0_i32, %c0_i32_0 : i32, i32
  }
  func.func @transform_2(%arg0: i32) -> (i32, i32) {
    %c0_i32 = arith.constant 0 : i32
    %c0_i32_0 = arith.constant 0 : i32
    %c0_i32_1 = arith.constant 0 : i32
    return %c0_i32, %c0_i32_0 : i32, i32
  }
  func.func @transform_3(%arg0: i32) -> (i32, i32) {
    %c0_i32 = arith.constant 0 : i32
    %c0_i32_0 = arith.constant 0 : i32
    %c0_i32_1 = arith.constant 0 : i32
    return %c0_i32, %c0_i32_0 : i32, i32
  }
  func.func @transform_4(%arg0: i32) -> (i32, i32) {
    %c0_i32 = arith.constant 0 : i32
    %c0_i32_0 = arith.constant 0 : i32
    %c0_i32_1 = arith.constant 0 : i32
    return %c0_i32, %c0_i32_0 : i32, i32
  }
  func.func @transform_5(%arg0: i32) -> (i32, i32) {
    %c0_i32 = arith.constant 0 : i32
    %c0_i32_0 = arith.constant 0 : i32
    return %arg0, %c0_i32 : i32, i32
  }
}

</mosaic_0001>

<llo_original>
// kernel: genki_forward.3
$region0: #{genki_forward.3}
  #allocation0 [shape = 'u32[]', space=smem, size = 0x4, offset = 0x4, fixed_abs, tag = 'smem constant byte address 0x4 - core index']
  #allocation1 [shape = 'u32[144,128]{1,0:T(1,128)}', space=vmem, size = 0x12000, scoped, tag = 'internal scratch']
  #allocation2 [shape = 'f32[1,1]{1,0:T(1,128)S(1)}', space=vmem, size = 0x200, scoped, tag = 'scoped memory for genki_forward.3']
  %s0 = inlined_call_operand.vmem [shape: f32[2,1024], index: 0, kind: input, shape index: {}]
  %s1 = inlined_call_operand.vmem [shape: f32[1024,128], index: 1, kind: input, shape index: {}]
  %s2 = inlined_call_operand.vmem [shape: f32[1,128], index: 2, kind: input, shape index: {}]
  %s3 = inlined_call_operand.vmem [shape: f32[128,1], index: 3, kind: input, shape index: {}]
  %s4 = inlined_call_operand.<no memory space> [shape: f32[1,1], index: 4, kind: input, shape index: {}]
  %s5 = inlined_call_operand.vmem [shape: f32[2,1], index: 5, kind: output, shape index: {}]
  %s6 = sld [smem:[#allocation0]]
  $region30: #{genki_forward.3} parent=0
    _
  %s8 = ssub.s32 1, %s6
  %s9 = scalar_select 0, %s8, %s6
  %v10 = vstv %s4
  %11 = vst [vmem:[#allocation2] sm:$0x1] %v10
  // Predicated region
  $region2: #{genki_forward.3} parent=0 // pred_check
    _
  $region3: #{genki_forward.3} parent=0 // pred_check_branch
    %13 = sbr.rel (0) target = $region5
  $region4: #{genki_forward.3} parent=0 // pred_region
    _
  $region5: #{genki_forward.3} parent=0 // pred_fallthru
    _
  // Predicated region
  $region6: #{genki_forward.3} parent=0 // pred_check
    _
  $region7: #{genki_forward.3} parent=0 // pred_check_branch
    %15 = sbr.rel (0) target = $region9
  $region8: #{genki_forward.3} parent=0 // pred_region
    _
  $region9: #{genki_forward.3} parent=0 // pred_fallthru
    _
  // Predicated region
  $region10: #{genki_forward.3} parent=0 // pred_check
    _
  $region11: #{genki_forward.3} parent=0 // pred_check_branch
    %17 = sbr.rel (0) target = $region13
  $region12: #{genki_forward.3} parent=0 // pred_region
    _
  $region13: #{genki_forward.3} parent=0 // pred_fallthru
    _
  // Predicated region
  $region14: #{genki_forward.3} parent=0 // pred_check
    _
  $region15: #{genki_forward.3} parent=0 // pred_check_branch
    %19 = sbr.rel (0) target = $region17
  $region16: #{genki_forward.3} parent=0 // pred_region
    _
  $region17: #{genki_forward.3} parent=0 // pred_fallthru
    _
  // Predicated region
  $region18: #{genki_forward.3} parent=0 // pred_check
    _
  $region19: #{genki_forward.3} parent=0 // pred_check_branch
    %21 = sbr.rel (0) target = $region21
  $region20: #{genki_forward.3} parent=0 // pred_region
    _
  $region21: #{genki_forward.3} parent=0 // pred_fallthru
    _
  %v22 = vld [vmem:[%s0] sm:$0xff]
  %v23 = vld [vmem:[%s0 + $0x8] sm:$0xff]
  %v24 = vld [vmem:[%s1] sm:$0xff]
  %v25 = vld [vmem:[%s1 + $0x8] sm:$0xff]
  %v26 = vld [vmem:[%s1 + $0x10] sm:$0xff]
  %v27 = vld [vmem:[%s1 + $0x18] sm:$0xff]
  %v28 = vld [vmem:[%s1 + $0x20] sm:$0xff]
  %v29 = vld [vmem:[%s1 + $0x28] sm:$0xff]
  %v30 = vld [vmem:[%s1 + $0x30] sm:$0xff]
  %v31 = vld [vmem:[%s1 + $0x38] sm:$0xff]
  %v32 = vld [vmem:[%s1 + $0x40] sm:$0xff]
  %v33 = vld [vmem:[%s1 + $0x48] sm:$0xff]
  %v34 = vld [vmem:[%s1 + $0x50] sm:$0xff]
  %v35 = vld [vmem:[%s1 + $0x58] sm:$0xff]
  %v36 = vld [vmem:[%s1 + $0x60] sm:$0xff]
  %v37 = vld [vmem:[%s1 + $0x68] sm:$0xff]
  %v38 = vld [vmem:[%s1 + $0x70] sm:$0xff]
  %v39 = vld [vmem:[%s1 + $0x78] sm:$0xff]
  %v40 = vld [vmem:[%s1 + $0x80] sm:$0xff]
  %v41 = vld [vmem:[%s1 + $0x88] sm:$0xff]
  %v42 = vld [vmem:[%s1 + $0x90] sm:$0xff]
  %v43 = vld [vmem:[%s1 + $0x98] sm:$0xff]
  %v44 = vld [vmem:[%s1 + $0xa0] sm:$0xff]
  %v45 = vld [vmem:[%s1 + $0xa8] sm:$0xff]
  %v46 = vld [vmem:[%s1 + $0xb0] sm:$0xff]
  %v47 = vld [vmem:[%s1 + $0xb8] sm:$0xff]
  %v48 = vld [vmem:[%s1 + $0xc0] sm:$0xff]
  %v49 = vld [vmem:[%s1 + $0xc8] sm:$0xff]
  %v50 = vld [vmem:[%s1 + $0xd0] sm:$0xff]
  %v51 = vld [vmem:[%s1 + $0xd8] sm:$0xff]
  %v52 = vld [vmem:[%s1 + $0xe0] sm:$0xff]
  %v53 = vld [vmem:[%s1 + $0xe8] sm:$0xff]
  %v54 = vld [vmem:[%s1 + $0xf0] sm:$0xff]
  %v55 = vld [vmem:[%s1 + $0xf8] sm:$0xff]
  %v56 = vld [vmem:[%s1 + $0x100] sm:$0xff]
  %v57 = vld [vmem:[%s1 + $0x108] sm:$0xff]
  %v58 = vld [vmem:[%s1 + $0x110] sm:$0xff]
  %v59 = vld [vmem:[%s1 + $0x118] sm:$0xff]
  %v60 = vld [vmem:[%s1 + $0x120] sm:$0xff]
  %v61 = vld [vmem:[%s1 + $0x128] sm:$0xff]
  %v62 = vld [vmem:[%s1 + $0x130] sm:$0xff]
  %v63 = vld [vmem:[%s1 + $0x138] sm:$0xff]
  %v64 = vld [vmem:[%s1 + $0x140] sm:$0xff]
  %v65 = vld [vmem:[%s1 + $0x148] sm:$0xff]
  %v66 = vld [vmem:[%s1 + $0x150] sm:$0xff]
  %v67 = vld [vmem:[%s1 + $0x158] sm:$0xff]
  %v68 = vld [vmem:[%s1 + $0x160] sm:$0xff]
  %v69 = vld [vmem:[%s1 + $0x168] sm:$0xff]
  %v70 = vld [vmem:[%s1 + $0x170] sm:$0xff]
  %v71 = vld [vmem:[%s1 + $0x178] sm:$0xff]
  %v72 = vld [vmem:[%s1 + $0x180] sm:$0xff]
  %v73 = vld [vmem:[%s1 + $0x188] sm:$0xff]
  %v74 = vld [vmem:[%s1 + $0x190] sm:$0xff]
  %v75 = vld [vmem:[%s1 + $0x198] sm:$0xff]
  %v76 = vld [vmem:[%s1 + $0x1a0] sm:$0xff]
  %v77 = vld [vmem:[%s1 + $0x1a8] sm:$0xff]
  %v78 = vld [vmem:[%s1 + $0x1b0] sm:$0xff]
  %v79 = vld [vmem:[%s1 + $0x1b8] sm:$0xff]
  %v80 = vld [vmem:[%s1 + $0x1c0] sm:$0xff]
  %v81 = vld [vmem:[%s1 + $0x1c8] sm:$0xff]
  %v82 = vld [vmem:[%s1 + $0x1d0] sm:$0xff]
  %v83 = vld [vmem:[%s1 + $0x1d8] sm:$0xff]
  %v84 = vld [vmem:[%s1 + $0x1e0] sm:$0xff]
  %v85 = vld [vmem:[%s1 + $0x1e8] sm:$0xff]
  %v86 = vld [vmem:[%s1 + $0x1f0] sm:$0xff]
  %v87 = vld [vmem:[%s1 + $0x1f8] sm:$0xff]
  %v88 = vld [vmem:[%s1 + $0x200] sm:$0xff]
  %v89 = vld [vmem:[%s1 + $0x208] sm:$0xff]
  %v90 = vld [vmem:[%s1 + $0x210] sm:$0xff]
  %v91 = vld [vmem:[%s1 + $0x218] sm:$0xff]
  %v92 = vld [vmem:[%s1 + $0x220] sm:$0xff]
  %v93 = vld [vmem:[%s1 + $0x228] sm:$0xff]
  %v94 = vld [vmem:[%s1 + $0x230] sm:$0xff]
  %v95 = vld [vmem:[%s1 + $0x238] sm:$0xff]
  %v96 = vld [vmem:[%s1 + $0x240] sm:$0xff]
  %v97 = vld [vmem:[%s1 + $0x248] sm:$0xff]
  %v98 = vld [vmem:[%s1 + $0x250] sm:$0xff]
  %v99 = vld [vmem:[%s1 + $0x258] sm:$0xff]
  %v100 = vld [vmem:[%s1 + $0x260] sm:$0xff]
  %v101 = vld [vmem:[%s1 + $0x268] sm:$0xff]
  %v102 = vld [vmem:[%s1 + $0x270] sm:$0xff]
  %v103 = vld [vmem:[%s1 + $0x278] sm:$0xff]
  %v104 = vld [vmem:[%s1 + $0x280] sm:$0xff]
  %v105 = vld [vmem:[%s1 + $0x288] sm:$0xff]
  %v106 = vld [vmem:[%s1 + $0x290] sm:$0xff]
  %v107 = vld [vmem:[%s1 + $0x298] sm:$0xff]
  %v108 = vld [vmem:[%s1 + $0x2a0] sm:$0xff]
  %v109 = vld [vmem:[%s1 + $0x2a8] sm:$0xff]
  %v110 = vld [vmem:[%s1 + $0x2b0] sm:$0xff]
  %v111 = vld [vmem:[%s1 + $0x2b8] sm:$0xff]
  %v112 = vld [vmem:[%s1 + $0x2c0] sm:$0xff]
  %v113 = vld [vmem:[%s1 + $0x2c8] sm:$0xff]
  %v114 = vld [vmem:[%s1 + $0x2d0] sm:$0xff]
  %v115 = vld [vmem:[%s1 + $0x2d8] sm:$0xff]
  %v116 = vld [vmem:[%s1 + $0x2e0] sm:$0xff]
  %v117 = vld [vmem:[%s1 + $0x2e8] sm:$0xff]
  %v118 = vld [vmem:[%s1 + $0x2f0] sm:$0xff]
  %v119 = vld [vmem:[%s1 + $0x2f8] sm:$0xff]
  %v120 = vld [vmem:[%s1 + $0x300] sm:$0xff]
  %v121 = vld [vmem:[%s1 + $0x308] sm:$0xff]
  %v122 = vld [vmem:[%s1 + $0x310] sm:$0xff]
  %v123 = vld [vmem:[%s1 + $0x318] sm:$0xff]
  %v124 = vld [vmem:[%s1 + $0x320] sm:$0xff]
  %v125 = vld [vmem:[%s1 + $0x328] sm:$0xff]
  %v126 = vld [vmem:[%s1 + $0x330] sm:$0xff]
  %v127 = vld [vmem:[%s1 + $0x338] sm:$0xff]
  %v128 = vld [vmem:[%s1 + $0x340] sm:$0xff]
  %v129 = vld [vmem:[%s1 + $0x348] sm:$0xff]
  %v130 = vld [vmem:[%s1 + $0x350] sm:$0xff]
  %v131 = vld [vmem:[%s1 + $0x358] sm:$0xff]
  %v132 = vld [vmem:[%s1 + $0x360] sm:$0xff]
  %v133 = vld [vmem:[%s1 + $0x368] sm:$0xff]
  %v134 = vld [vmem:[%s1 + $0x370] sm:$0xff]
  %v135 = vld [vmem:[%s1 + $0x378] sm:$0xff]
  %v136 = vld [vmem:[%s1 + $0x380] sm:$0xff]
  %v137 = vld [vmem:[%s1 + $0x388] sm:$0xff]
  %v138 = vld [vmem:[%s1 + $0x390] sm:$0xff]
  %v139 = vld [vmem:[%s1 + $0x398] sm:$0xff]
  %v140 = vld [vmem:[%s1 + $0x3a0] sm:$0xff]
  %v141 = vld [vmem:[%s1 + $0x3a8] sm:$0xff]
  %v142 = vld [vmem:[%s1 + $0x3b0] sm:$0xff]
  %v143 = vld [vmem:[%s1 + $0x3b8] sm:$0xff]
  %v144 = vld [vmem:[%s1 + $0x3c0] sm:$0xff]
  %v145 = vld [vmem:[%s1 + $0x3c8] sm:$0xff]
  %v146 = vld [vmem:[%s1 + $0x3d0] sm:$0xff]
  %v147 = vld [vmem:[%s1 + $0x3d8] sm:$0xff]
  %v148 = vld [vmem:[%s1 + $0x3e0] sm:$0xff]
  %v149 = vld [vmem:[%s1 + $0x3e8] sm:$0xff]
  %v150 = vld [vmem:[%s1 + $0x3f0] sm:$0xff]
  %v151 = vld [vmem:[%s1 + $0x3f8] sm:$0xff]
  %v152 = vld [vmem:[%s2] sm:$0x1]
  %v154 = vlaneseq
  %v155 = vshrl.u32 %v154, 7
  %v156 = vsub.s32 0, %v155
  %v157 = vrot.slane %v152, %v156
  %v161 = vcombine.high %v22, %v22
  %v163 = vunpack.c.l.s4 1983009808
  %v164 = vunpack.c.0.s8 %v163
  %v165 = vlaneseq
  %v166 = vshrl.u32 %v165, 7
  %v167 = vsub.s32 %v164, %v166
  %v168 = vrot.slane %v22, %v167
  %v170 = vunpack.c.l.s4 1983009808
  %v171 = vunpack.c.0.s8 %v170
  %v172 = vlaneseq
  %v173 = vshrl.u32 %v172, 7
  %v174 = vsub.s32 %v171, %v173
  %v175 = vrot.slane %v161, %v174
  %v176 = vcombine.high %v168, %v168
  %v177 = vcombine.high %v175, %v175
  %v178 = vcombine.high %v23, %v23
  %v180 = vunpack.c.l.s4 1983009808
  %v181 = vunpack.c.0.s8 %v180
  %v182 = vlaneseq
  %v183 = vshrl.u32 %v182, 7
  %v184 = vsub.s32 %v181, %v183
  %v185 = vrot.slane %v23, %v184
  %v187 = vunpack.c.l.s4 1983009808
  %v188 = vunpack.c.0.s8 %v187
  %v189 = vlaneseq
  %v190 = vshrl.u32 %v189, 7
  %v191 = vsub.s32 %v188, %v190
  %v192 = vrot.slane %v178, %v191
  %v193 = vcombine.high %v185, %v185
  %v194 = vcombine.high %v192, %v192
  %203 = vmatprep.subr.mxu0 0.0
  %204 = vmatpush1.msra.mxu0 %v24
  %205 = vmatprep.subr.mxu0 0.0
  %206 = vmatpush1.msra.mxu0 %v25
  %207 = vmatprep.subr.mxu0 0.0
  %208 = vmatpush1.msra.mxu0 %v26
  %209 = vmatprep.subr.mxu0 0.0
  %210 = vmatpush1.msra.mxu0 %v27
  %211 = vmatprep.subr.mxu0 0.0
  %212 = vmatpush1.msra.mxu0 %v28
  %213 = vmatprep.subr.mxu0 0.0
  %214 = vmatpush1.msra.mxu0 %v29
  %215 = vmatprep.subr.mxu0 0.0
  %216 = vmatpush1.msra.mxu0 %v30
  %217 = vmatprep.subr.mxu0 0.0
  %218 = vmatpush1.msra.mxu0 %v31
  %219 = vmatprep.subr.mxu0 0.0
  %220 = vmatpush1.msra.mxu0 %v32
  %221 = vmatprep.subr.mxu0 0.0
  %222 = vmatpush1.msra.mxu0 %v33
  %223 = vmatprep.subr.mxu0 0.0
  %224 = vmatpush1.msra.mxu0 %v34
  %225 = vmatprep.subr.mxu0 0.0
  %226 = vmatpush1.msra.mxu0 %v35
  %227 = vmatprep.subr.mxu0 0.0
  %228 = vmatpush1.msra.mxu0 %v36
  %229 = vmatprep.subr.mxu0 0.0
  %230 = vmatpush1.msra.mxu0 %v37
  %231 = vmatprep.subr.mxu0 0.0
  %232 = vmatpush1.msra.mxu0 %v38
  %233 = vmatprep.subr.mxu0 0.0
  %234 = vmatpush1.msra.mxu0 %v39
  %235 = vmatprep.subr.mxu0 0.0
  %236 = vmatpush1.msra.mxu0 %v40
  %237 = vmatprep.subr.mxu0 0.0
  %238 = vmatpush1.msra.mxu0 %v41
  %239 = vmatprep.subr.mxu0 0.0
  %240 = vmatpush1.msra.mxu0 %v42
  %241 = vmatprep.subr.mxu0 0.0
  %242 = vmatpush1.msra.mxu0 %v43
  %243 = vmatprep.subr.mxu0 0.0
  %244 = vmatpush1.msra.mxu0 %v44
  %245 = vmatprep.subr.mxu0 0.0
  %246 = vmatpush1.msra.mxu0 %v45
  %247 = vmatprep.subr.mxu0 0.0
  %248 = vmatpush1.msra.mxu0 %v46
  %249 = vmatprep.subr.mxu0 0.0
  %250 = vmatpush1.msra.mxu0 %v47
  %251 = vmatprep.subr.mxu0 0.0
  %252 = vmatpush1.msra.mxu0 %v48
  %253 = vmatprep.subr.mxu0 0.0
  %254 = vmatpush1.msra.mxu0 %v49
  %255 = vmatprep.subr.mxu0 0.0
  %256 = vmatpush1.msra.mxu0 %v50
  %257 = vmatprep.subr.mxu0 0.0
  %258 = vmatpush1.msra.mxu0 %v51
  %259 = vmatprep.subr.mxu0 0.0
  %260 = vmatpush1.msra.mxu0 %v52
  %261 = vmatprep.subr.mxu0 0.0
  %262 = vmatpush1.msra.mxu0 %v53
  %263 = vmatprep.subr.mxu0 0.0
  %264 = vmatpush1.msra.mxu0 %v54
  %265 = vmatprep.subr.mxu0 0.0
  %266 = vmatpush1.msra.mxu0 %v55
  %267 = vmatprep.mubr.f32.mxu0 %v176
  %268 = vmatmul.mubr.f32.gmra.mrb[0].mxu0 %v168
  %v269 = vpop.f32.mrb[0].mxu0
  %v270 = vadd.f32 %v157, %v269
  %v271 = vpop.f32.mrb[0].mxu0
  %272 = vdwg.mxu0
  %273 = vmatprep.subr.mxu0 0.0
  %274 = vmatpush1.msra.mxu0 %v56
  %275 = vmatprep.subr.mxu0 0.0
  %276 = vmatpush1.msra.mxu0 %v57
  %277 = vmatprep.subr.mxu0 0.0
  %278 = vmatpush1.msra.mxu0 %v58
  %279 = vmatprep.subr.mxu0 0.0
  %280 = vmatpush1.msra.mxu0 %v59
  %281 = vmatprep.subr.mxu0 0.0
  %282 = vmatpush1.msra.mxu0 %v60
  %283 = vmatprep.subr.mxu0 0.0
  %284 = vmatpush1.msra.mxu0 %v61
  %285 = vmatprep.subr.mxu0 0.0
  %286 = vmatpush1.msra.mxu0 %v62
  %287 = vmatprep.subr.mxu0 0.0
  %288 = vmatpush1.msra.mxu0 %v63
  %289 = vmatprep.subr.mxu0 0.0
  %290 = vmatpush1.msra.mxu0 %v64
  %291 = vmatprep.subr.mxu0 0.0
  %292 = vmatpush1.msra.mxu0 %v65
  %293 = vmatprep.subr.mxu0 0.0
  %294 = vmatpush1.msra.mxu0 %v66
  %295 = vmatprep.subr.mxu0 0.0
  %296 = vmatpush1.msra.mxu0 %v67
  %297 = vmatprep.subr.mxu0 0.0
  %298 = vmatpush1.msra.mxu0 %v68
  %299 = vmatprep.subr.mxu0 0.0
  %300 = vmatpush1.msra.mxu0 %v69
  %301 = vmatprep.subr.mxu0 0.0
  %302 = vmatpush1.msra.mxu0 %v70
  %303 = vmatprep.subr.mxu0 0.0
  %304 = vmatpush1.msra.mxu0 %v71
  %305 = vmatprep.subr.mxu0 0.0
  %306 = vmatpush1.msra.mxu0 %v72
  %307 = vmatprep.subr.mxu0 0.0
  %308 = vmatpush1.msra.mxu0 %v73
  %309 = vmatprep.subr.mxu0 0.0
  %310 = vmatpush1.msra.mxu0 %v74
  %311 = vmatprep.subr.mxu0 0.0
  %312 = vmatpush1.msra.mxu0 %v75
  %313 = vmatprep.subr.mxu0 0.0
  %314 = vmatpush1.msra.mxu0 %v76
  %315 = vmatprep.subr.mxu0 0.0
  %316 = vmatpush1.msra.mxu0 %v77
  %317 = vmatprep.subr.mxu0 0.0
  %318 = vmatpush1.msra.mxu0 %v78
  %319 = vmatprep.subr.mxu0 0.0
  %320 = vmatpush1.msra.mxu0 %v79
  %321 = vmatprep.subr.mxu0 0.0
  %322 = vmatpush1.msra.mxu0 %v80
  %323 = vmatprep.subr.mxu0 0.0
  %324 = vmatpush1.msra.mxu0 %v81
  %325 = vmatprep.subr.mxu0 0.0
  %326 = vmatpush1.msra.mxu0 %v82
  %327 = vmatprep.subr.mxu0 0.0
  %328 = vmatpush1.msra.mxu0 %v83
  %329 = vmatprep.subr.mxu0 0.0
  %330 = vmatpush1.msra.mxu0 %v84
  %331 = vmatprep.subr.mxu0 0.0
  %332 = vmatpush1.msra.mxu0 %v85
  %333 = vmatprep.subr.mxu0 0.0
  %334 = vmatpush1.msra.mxu0 %v86
  %335 = vmatprep.subr.mxu0 0.0
  %336 = vmatpush1.msra.mxu0 %v87
  %337 = vmatprep.mubr.f32.mxu0 %v177
  %338 = vmatmul.mubr.f32.gmra.mrb[0].mxu0 %v175
  %v339 = vpop.f32.mrb[0].mxu0
  %v340 = vadd.f32 %v270, %v339
  %v341 = vpop.f32.mrb[0].mxu0
  %342 = vdwg.mxu0
  %343 = vmatprep.subr.mxu0 0.0
  %344 = vmatpush1.msra.mxu0 %v88
  %345 = vmatprep.subr.mxu0 0.0
  %346 = vmatpush1.msra.mxu0 %v89
  %347 = vmatprep.subr.mxu0 0.0
  %348 = vmatpush1.msra.mxu0 %v90
  %349 = vmatprep.subr.mxu0 0.0
  %350 = vmatpush1.msra.mxu0 %v91
  %351 = vmatprep.subr.mxu0 0.0
  %352 = vmatpush1.msra.mxu0 %v92
  %353 = vmatprep.subr.mxu0 0.0
  %354 = vmatpush1.msra.mxu0 %v93
  %355 = vmatprep.subr.mxu0 0.0
  %356 = vmatpush1.msra.mxu0 %v94
  %357 = vmatprep.subr.mxu0 0.0
  %358 = vmatpush1.msra.mxu0 %v95
  %359 = vmatprep.subr.mxu0 0.0
  %360 = vmatpush1.msra.mxu0 %v96
  %361 = vmatprep.subr.mxu0 0.0
  %362 = vmatpush1.msra.mxu0 %v97
  %363 = vmatprep.subr.mxu0 0.0
  %364 = vmatpush1.msra.mxu0 %v98
  %365 = vmatprep.subr.mxu0 0.0
  %366 = vmatpush1.msra.mxu0 %v99
  %367 = vmatprep.subr.mxu0 0.0
  %368 = vmatpush1.msra.mxu0 %v100
  %369 = vmatprep.subr.mxu0 0.0
  %370 = vmatpush1.msra.mxu0 %v101
  %371 = vmatprep.subr.mxu0 0.0
  %372 = vmatpush1.msra.mxu0 %v102
  %373 = vmatprep.subr.mxu0 0.0
  %374 = vmatpush1.msra.mxu0 %v103
  %375 = vmatprep.subr.mxu0 0.0
  %376 = vmatpush1.msra.mxu0 %v104
  %377 = vmatprep.subr.mxu0 0.0
  %378 = vmatpush1.msra.mxu0 %v105
  %379 = vmatprep.subr.mxu0 0.0
  %380 = vmatpush1.msra.mxu0 %v106
  %381 = vmatprep.subr.mxu0 0.0
  %382 = vmatpush1.msra.mxu0 %v107
  %383 = vmatprep.subr.mxu0 0.0
  %384 = vmatpush1.msra.mxu0 %v108
  %385 = vmatprep.subr.mxu0 0.0
  %386 = vmatpush1.msra.mxu0 %v109
  %387 = vmatprep.subr.mxu0 0.0
  %388 = vmatpush1.msra.mxu0 %v110
  %389 = vmatprep.subr.mxu0 0.0
  %390 = vmatpush1.msra.mxu0 %v111
  %391 = vmatprep.subr.mxu0 0.0
  %392 = vmatpush1.msra.mxu0 %v112
  %393 = vmatprep.subr.mxu0 0.0
  %394 = vmatpush1.msra.mxu0 %v113
  %395 = vmatprep.subr.mxu0 0.0
  %396 = vmatpush1.msra.mxu0 %v114
  %397 = vmatprep.subr.mxu0 0.0
  %398 = vmatpush1.msra.mxu0 %v115
  %399 = vmatprep.subr.mxu0 0.0
  %400 = vmatpush1.msra.mxu0 %v116
  %401 = vmatprep.subr.mxu0 0.0
  %402 = vmatpush1.msra.mxu0 %v117
  %403 = vmatprep.subr.mxu0 0.0
  %404 = vmatpush1.msra.mxu0 %v118
  %405 = vmatprep.subr.mxu0 0.0
  %406 = vmatpush1.msra.mxu0 %v119
  %407 = vmatprep.mubr.f32.mxu0 %v193
  %408 = vmatmul.mubr.f32.gmra.mrb[0].mxu0 %v185
  %v409 = vpop.f32.mrb[0].mxu0
  %v410 = vadd.f32 %v340, %v409
  %v411 = vpop.f32.mrb[0].mxu0
  %412 = vdwg.mxu0
  %413 = vmatprep.subr.mxu0 0.0
  %414 = vmatpush1.msra.mxu0 %v120
  %415 = vmatprep.subr.mxu0 0.0
  %416 = vmatpush1.msra.mxu0 %v121
  %417 = vmatprep.subr.mxu0 0.0
  %418 = vmatpush1.msra.mxu0 %v122
  %419 = vmatprep.subr.mxu0 0.0
  %420 = vmatpush1.msra.mxu0 %v123
  %421 = vmatprep.subr.mxu0 0.0
  %422 = vmatpush1.msra.mxu0 %v124
  %423 = vmatprep.subr.mxu0 0.0
  %424 = vmatpush1.msra.mxu0 %v125
  %425 = vmatprep.subr.mxu0 0.0
  %426 = vmatpush1.msra.mxu0 %v126
  %427 = vmatprep.subr.mxu0 0.0
  %428 = vmatpush1.msra.mxu0 %v127
  %429 = vmatprep.subr.mxu0 0.0
  %430 = vmatpush1.msra.mxu0 %v128
  %431 = vmatprep.subr.mxu0 0.0
  %432 = vmatpush1.msra.mxu0 %v129
  %433 = vmatprep.subr.mxu0 0.0
  %434 = vmatpush1.msra.mxu0 %v130
  %435 = vmatprep.subr.mxu0 0.0
  %436 = vmatpush1.msra.mxu0 %v131
  %437 = vmatprep.subr.mxu0 0.0
  %438 = vmatpush1.msra.mxu0 %v132
  %439 = vmatprep.subr.mxu0 0.0
  %440 = vmatpush1.msra.mxu0 %v133
  %441 = vmatprep.subr.mxu0 0.0
  %442 = vmatpush1.msra.mxu0 %v134
  %443 = vmatprep.subr.mxu0 0.0
  %444 = vmatpush1.msra.mxu0 %v135
  %445 = vmatprep.subr.mxu0 0.0
  %446 = vmatpush1.msra.mxu0 %v136
  %447 = vmatprep.subr.mxu0 0.0
  %448 = vmatpush1.msra.mxu0 %v137
  %449 = vmatprep.subr.mxu0 0.0
  %450 = vmatpush1.msra.mxu0 %v138
  %451 = vmatprep.subr.mxu0 0.0
  %452 = vmatpush1.msra.mxu0 %v139
  %453 = vmatprep.subr.mxu0 0.0
  %454 = vmatpush1.msra.mxu0 %v140
  %455 = vmatprep.subr.mxu0 0.0
  %456 = vmatpush1.msra.mxu0 %v141
  %457 = vmatprep.subr.mxu0 0.0
  %458 = vmatpush1.msra.mxu0 %v142
  %459 = vmatprep.subr.mxu0 0.0
  %460 = vmatpush1.msra.mxu0 %v143
  %461 = vmatprep.subr.mxu0 0.0
  %462 = vmatpush1.msra.mxu0 %v144
  %463 = vmatprep.subr.mxu0 0.0
  %464 = vmatpush1.msra.mxu0 %v145
  %465 = vmatprep.subr.mxu0 0.0
  %466 = vmatpush1.msra.mxu0 %v146
  %467 = vmatprep.subr.mxu0 0.0
  %468 = vmatpush1.msra.mxu0 %v147
  %469 = vmatprep.subr.mxu0 0.0
  %470 = vmatpush1.msra.mxu0 %v148
  %471 = vmatprep.subr.mxu0 0.0
  %472 = vmatpush1.msra.mxu0 %v149
  %473 = vmatprep.subr.mxu0 0.0
  %474 = vmatpush1.msra.mxu0 %v150
  %475 = vmatprep.subr.mxu0 0.0
  %476 = vmatpush1.msra.mxu0 %v151
  %477 = vmatprep.mubr.f32.mxu0 %v194
  %478 = vmatmul.mubr.f32.gmra.mrb[0].mxu0 %v192
  %v479 = vpop.f32.mrb[0].mxu0
  %v480 = vadd.f32 %v410, %v479
  %v481 = vpop.f32.mrb[0].mxu0
  %482 = vdwg.mxu0
  %v483 = vmax.f32 %v480, 0.0
  %v484 = vld [vmem:[%s3] sm:$0xff]
  %v485 = vld [vmem:[%s3 + $0x8] sm:$0xff]
  %v486 = vld [vmem:[%s3 + $0x10] sm:$0xff]
  %v487 = vld [vmem:[%s3 + $0x18] sm:$0xff]
  %v488 = vld [vmem:[%s3 + $0x20] sm:$0xff]
  %v489 = vld [vmem:[%s3 + $0x28] sm:$0xff]
  %v490 = vld [vmem:[%s3 + $0x30] sm:$0xff]
  %v491 = vld [vmem:[%s3 + $0x38] sm:$0xff]
  %v492 = vld [vmem:[%s3 + $0x40] sm:$0xff]
  %v493 = vld [vmem:[%s3 + $0x48] sm:$0xff]
  %v494 = vld [vmem:[%s3 + $0x50] sm:$0xff]
  %v495 = vld [vmem:[%s3 + $0x58] sm:$0xff]
  %v496 = vld [vmem:[%s3 + $0x60] sm:$0xff]
  %v497 = vld [vmem:[%s3 + $0x68] sm:$0xff]
  %v498 = vld [vmem:[%s3 + $0x70] sm:$0xff]
  %v499 = vld [vmem:[%s3 + $0x78] sm:$0xff]
  %v500 = vld [vmem:[#allocation2] sm:$0x1]
  %v502 = vlaneseq
  %v503 = vshrl.u32 %v502, 7
  %v504 = vsub.s32 0, %v503
  %v505 = vrot.slane %v500, %v504
  %507 = vmatprep.subr.mxu0 0.0
  %508 = vmatpush1.msra.mxu0 %v484
  %509 = vmatprep.subr.mxu0 0.0
  %510 = vmatpush1.msra.mxu0 %v485
  %511 = vmatprep.subr.mxu0 0.0
  %512 = vmatpush1.msra.mxu0 %v486
  %513 = vmatprep.subr.mxu0 0.0
  %514 = vmatpush1.msra.mxu0 %v487
  %515 = vmatprep.subr.mxu0 0.0
  %516 = vmatpush1.msra.mxu0 %v488
  %517 = vmatprep.subr.mxu0 0.0
  %518 = vmatpush1.msra.mxu0 %v489
  %519 = vmatprep.subr.mxu0 0.0
  %520 = vmatpush1.msra.mxu0 %v490
  %521 = vmatprep.subr.mxu0 0.0
  %522 = vmatpush1.msra.mxu0 %v491
  %523 = vmatprep.subr.mxu0 0.0
  %524 = vmatpush1.msra.mxu0 %v492
  %525 = vmatprep.subr.mxu0 0.0
  %526 = vmatpush1.msra.mxu0 %v493
  %527 = vmatprep.subr.mxu0 0.0
  %528 = vmatpush1.msra.mxu0 %v494
  %529 = vmatprep.subr.mxu0 0.0
  %530 = vmatpush1.msra.mxu0 %v495
  %531 = vmatprep.subr.mxu0 0.0
  %532 = vmatpush1.msra.mxu0 %v496
  %533 = vmatprep.subr.mxu0 0.0
  %534 = vmatpush1.msra.mxu0 %v497
  %535 = vmatprep.subr.mxu0 0.0
  %536 = vmatpush1.msra.mxu0 %v498
  %537 = vmatprep.subr.mxu0 0.0
  %538 = vmatpush1.msra.mxu0 %v499
  %539 = vmatprep.subr.mxu0 0.0
  %540 = vmatpush1.msra.mxu0 0.0
  %541 = vmatprep.subr.mxu0 0.0
  %542 = vmatpush1.msra.mxu0 0.0
  %543 = vmatprep.subr.mxu0 0.0
  %544 = vmatpush1.msra.mxu0 0.0
  %545 = vmatprep.subr.mxu0 0.0
  %546 = vmatpush1.msra.mxu0 0.0
  %547 = vmatprep.subr.mxu0 0.0
  %548 = vmatpush1.msra.mxu0 0.0
  %549 = vmatprep.subr.mxu0 0.0
  %550 = vmatpush1.msra.mxu0 0.0
  %551 = vmatprep.subr.mxu0 0.0
  %552 = vmatpush1.msra.mxu0 0.0
  %553 = vmatprep.subr.mxu0 0.0
  %554 = vmatpush1.msra.mxu0 0.0
  %555 = vmatprep.subr.mxu0 0.0
  %556 = vmatpush1.msra.mxu0 0.0
  %557 = vmatprep.subr.mxu0 0.0
  %558 = vmatpush1.msra.mxu0 0.0
  %559 = vmatprep.subr.mxu0 0.0
  %560 = vmatpush1.msra.mxu0 0.0
  %561 = vmatprep.subr.mxu0 0.0
  %562 = vmatpush1.msra.mxu0 0.0
  %563 = vmatprep.subr.mxu0 0.0
  %564 = vmatpush1.msra.mxu0 0.0
  %565 = vmatprep.subr.mxu0 0.0
  %566 = vmatpush1.msra.mxu0 0.0
  %567 = vmatprep.subr.mxu0 0.0
  %568 = vmatpush1.msra.mxu0 0.0
  %569 = vmatprep.subr.mxu0 0.0
  %570 = vmatpush1.msra.mxu0 0.0
  %571 = vmatprep.mubr.f32.mxu0 0.0
  %572 = vmatmul.mubr.f32.gmra.mrb[0].mxu0 %v483
  %v573 = vpop.f32.mrb[0].mxu0
  %v574 = vadd.f32 %v505, %v573
  %v575 = vpop.f32.mrb[0].mxu0
  %576 = vdwg.mxu0
  %v577 = vsub.f32 0.0, %v574
  %v578 = vmul.f32 %v577, 1.442695
  %v579 = vpow.pop %v578
  %v580 = vadd.f32 %v579, 1.0
  %v581 = vrcp.pop %v580
  %v582 = vmul.f32 1.0, %v581
  %vm583 = vcmask 1024
  %584 = vst.msk [vmem:[%s5] sm:$0x3] %vm583, %v582
  // Predicated region
  $region22: #{genki_forward.3} parent=0 // pred_check
    _
  $region23: #{genki_forward.3} parent=0 // pred_check_branch
    %586 = sbr.rel (0) target = $region25
  $region24: #{genki_forward.3} parent=0 // pred_region
    _
  $region25: #{genki_forward.3} parent=0 // pred_fallthru
    _
  // Predicated region
  $region26: #{genki_forward.3} parent=0 // pred_check
    _
  $region27: #{genki_forward.3} parent=0 // pred_check_branch
    %588 = sbr.rel (0) target = $region29
  $region28: #{genki_forward.3} parent=0 // pred_region
    _
  $region29: #{genki_forward.3} parent=0 // pred_fallthru
    _

// kernel: genki_forward.2
$region0: #{genki_forward.2}
  #allocation0 [shape = 'u32[]', space=smem, size = 0x4, offset = 0x4, fixed_abs, tag = 'smem constant byte address 0x4 - core index']
  #allocation1 [shape = 'u32[144,128]{1,0:T(1,128)}', space=vmem, size = 0x12000, scoped, tag = 'internal scratch']
  #allocation2 [shape = 'f32[34,48,32]{2,1,0:T(8,128)}', space=vmem, size = 0xcc000, scoped, tag = 'scratch operand']
  #allocation3 [shape = 'f32[18,32,32]{2,1,0:T(8,128)}', space=vmem, size = 0x48000, scoped, tag = 'scratch operand']
  #allocation4 [shape = 'f32[2,64,32]{2,1,0:T(8,128)}', space=vmem, size = 0x10000, scoped, tag = 'scratch operand']
  #allocation5 [shape = 'f32[2,32,32]{2,1,0:T(8,128)}', space=vmem, size = 0x8000, scoped, tag = 'scratch operand']
  #allocation6 [shape = 'f32[2,16,16]{2,1,0:T(8,128)}', space=vmem, size = 0x4000, scoped, tag = 'scratch operand']
  %s0 = inlined_call_operand.vmem [shape: f32[2,4096,32], index: 0, kind: input, shape index: {}]
  %s1 = inlined_call_operand.vmem [shape: f32[32,32], index: 1, kind: input, shape index: {}]
  %s2 = inlined_call_operand.hbm [shape: f32[1,32], index: 2, kind: input, shape index: {}]
  %s3 = inlined_call_operand.hbm [shape: f32[288,32], index: 3, kind: input, shape index: {}]
  %s4 = inlined_call_operand.hbm [shape: f32[1,32], index: 4, kind: input, shape index: {}]
  %s5 = inlined_call_operand.vmem [shape: f32[288,16], index: 5, kind: input, shape index: {}]
  %s6 = inlined_call_operand.hbm [shape: f32[1,16], index: 6, kind: input, shape index: {}]
  %s7 = inlined_call_operand.vmem [shape: f32[2,64,16], index: 7, kind: output, shape index: {}]
  %s8 = sld [smem:[#allocation0]]
  $region98: #{genki_forward.2} parent=0
    _
  %s10 = ssub.s32 1, %s8
  %s11 = scalar_select 0, %s10, %s8
  $region1: #{genki_forward.2} parent=0
    #allocation7 [shape = 'u8[512]{0}', space=vmem, size = 0x400, scoped, tag = 'input window, operand 2, single buffered']
    #allocation8 [shape = 's32[2]{0}', space=sflag, size = 0x8, scoped, tag = 'scoped memory for genki_forward.2']
    #allocation9 [shape = 'u8[147456]{0}', space=vmem, size = 0x24000, scoped, tag = 'input window, operand 3, single buffered']
    #allocation10 [shape = 's32[1]{0}', space=sflag, size = 0x4, scoped, tag = 'scoped memory for genki_forward.2']
    #allocation11 [shape = 'u8[512]{0}', space=vmem, size = 0x400, scoped, tag = 'input window, operand 4, single buffered']
    #allocation12 [shape = 'u8[512]{0}', space=vmem, size = 0x400, scoped, tag = 'input window, operand 6, single buffered']
    #allocation13 [shape = 's32[1]{0}', space=sflag, size = 0x4, scoped, tag = 'scoped memory for genki_forward.2']
    %12 = vsyncpa [#allocation8], 0
    %13 = vsyncpa [#allocation10], 0
    %14 = vsyncpa [#allocation13], 0
    loop: start=0, step=1, limit=4
    $region2: #{genki_forward.2} parent=1 // loop_pre_header
      _
    $region3: #{genki_forward.2} parent=1 // loop_header
      %s16 = sphi 0, %s20
      %p17 = scmp.ge.s32.totalorder %s16, 4
      %s26 = sphi 0, %s28
      %s29 = sphi 0, %s26
      %s30 = sphi 0, %s29
      %s46 = sphi 0, %s30
      %s50 = sphi 0, %s50
      %s52 = sphi 0, %s50
      %s53 = sphi 0, %s52
      %s67 = sphi 0, %s53
      %s71 = sphi 0, %s71
      %s73 = sphi 0, %s71
      %s74 = sphi 0, %s73
      %s88 = sphi 0, %s74
      %s92 = sphi 0, %s92
      %s94 = sphi 0, %s92
      %s95 = sphi 0, %s94
      %s109 = sphi 0, %s95
      %s113 = sphi 0, %s113
      %s115 = sphi 0, %s113
      %s116 = sphi 0, %s115
      %s130 = sphi 0, %s116
      %s134 = sphi 0, %s134
      %s136 = sphi 0, %s134
      %s137 = sphi 0, %s136
      %s151 = sphi 0, %s137
      %s155 = sphi 0, %s155
      %s157 = sphi 0, %s155
      %s158 = sphi 0, %s157
      %s172 = sphi 0, %s158
      %s178 = sphi 0, %s180
      %s181 = sphi 0, %s178
      %s182 = sphi 0, %s181
      %s198 = sphi 0, %s182
    $region4: #{genki_forward.2} parent=1 // loop_header_branch
      %19 = sbr.rel (%p17) target = $region8
    $region5: #{genki_forward.2} parent=1 // loop_body
      %s21 = ssub.s32 %s16, 1
      %s22 = ssub.s32 %s16, 2
      %s23 = sadd.s32 %s16, 1
      %s24 = ssub.s32 %s16, %s23
      %p25 = scmp.eq.s32.totalorder %s24, 0
      %s27 = sadd.s32 %s26, 1
      %s28 = scalar_select %p25, %s26, %s27
      %p31 = pneg %p25
      %p32 = scmp.eq.s32.totalorder %s16, 1
      %p33 = por %p31, %p32
      %p34 = scmp.ne.s32.totalorder %s26, %s29
      %p35 = scmp.eq.s32.totalorder %s16, 0
      %p36 = por %p34, %p35
      %p37 = scmp.ne.s32.totalorder %s26, %s29
      %p38 = scmp.eq.s32.totalorder %s21, 1
      %p39 = por %p37, %p38
      %p40 = scmp.ne.s32.totalorder %s29, %s30
      %p41 = scmp.eq.s32.totalorder %s21, 0
      %p42 = por %p40, %p41
      %p43 = scmp.ne.s32.totalorder %s29, %s30
      %p44 = scmp.eq.s32.totalorder %s22, 1
      %p45 = por %p43, %p44
      %p47 = scmp.ne.s32.totalorder %s30, %s46
      %p48 = scmp.eq.s32.totalorder %s22, 0
      %p49 = por %p47, %p48
      %s51 = sadd.s32 %s50, 1
      %p54 = scmp.eq.s32.totalorder %s16, 1
      %p55 = scmp.ne.s32.totalorder %s50, %s52
      %p56 = scmp.eq.s32.totalorder %s16, 0
      %p57 = por %p55, %p56
      %p58 = scmp.ne.s32.totalorder %s50, %s52
      %p59 = scmp.eq.s32.totalorder %s21, 1
      %p60 = por %p58, %p59
      %p61 = scmp.ne.s32.totalorder %s52, %s53
      %p62 = scmp.eq.s32.totalorder %s21, 0
      %p63 = por %p61, %p62
      %p64 = scmp.ne.s32.totalorder %s52, %s53
      %p65 = scmp.eq.s32.totalorder %s22, 1
      %p66 = por %p64, %p65
      %p68 = scmp.ne.s32.totalorder %s53, %s67
      %p69 = scmp.eq.s32.totalorder %s22, 0
      %p70 = por %p68, %p69
      %s72 = sadd.s32 %s71, 1
      %p75 = scmp.eq.s32.totalorder %s16, 1
      %p76 = scmp.ne.s32.totalorder %s71, %s73
      %p77 = scmp.eq.s32.totalorder %s16, 0
      %p78 = por %p76, %p77
      %p79 = scmp.ne.s32.totalorder %s71, %s73
      %p80 = scmp.eq.s32.totalorder %s21, 1
      %p81 = por %p79, %p80
      %p82 = scmp.ne.s32.totalorder %s73, %s74
      %p83 = scmp.eq.s32.totalorder %s21, 0
      %p84 = por %p82, %p83
      %p85 = scmp.ne.s32.totalorder %s73, %s74
      %p86 = scmp.eq.s32.totalorder %s22, 1
      %p87 = por %p85, %p86
      %p89 = scmp.ne.s32.totalorder %s74, %s88
      %p90 = scmp.eq.s32.totalorder %s22, 0
      %p91 = por %p89, %p90
      %s93 = sadd.s32 %s92, 1
      %p96 = scmp.eq.s32.totalorder %s16, 1
      %p97 = scmp.ne.s32.totalorder %s92, %s94
      %p98 = scmp.eq.s32.totalorder %s16, 0
      %p99 = por %p97, %p98
      %p100 = scmp.ne.s32.totalorder %s92, %s94
      %p101 = scmp.eq.s32.totalorder %s21, 1
      %p102 = por %p100, %p101
      %p103 = scmp.ne.s32.totalorder %s94, %s95
      %p104 = scmp.eq.s32.totalorder %s21, 0
      %p105 = por %p103, %p104
      %p106 = scmp.ne.s32.totalorder %s94, %s95
      %p107 = scmp.eq.s32.totalorder %s22, 1
      %p108 = por %p106, %p107
      %p110 = scmp.ne.s32.totalorder %s95, %s109
      %p111 = scmp.eq.s32.totalorder %s22, 0
      %p112 = por %p110, %p111
      %s114 = sadd.s32 %s113, 1
      %p117 = scmp.eq.s32.totalorder %s16, 1
      %p118 = scmp.ne.s32.totalorder %s113, %s115
      %p119 = scmp.eq.s32.totalorder %s16, 0
      %p120 = por %p118, %p119
      %p121 = scmp.ne.s32.totalorder %s113, %s115
      %p122 = scmp.eq.s32.totalorder %s21, 1
      %p123 = por %p121, %p122
      %p124 = scmp.ne.s32.totalorder %s115, %s116
      %p125 = scmp.eq.s32.totalorder %s21, 0
      %p126 = por %p124, %p125
      %p127 = scmp.ne.s32.totalorder %s115, %s116
      %p128 = scmp.eq.s32.totalorder %s22, 1
      %p129 = por %p127, %p128
      %p131 = scmp.ne.s32.totalorder %s116, %s130
      %p132 = scmp.eq.s32.totalorder %s22, 0
      %p133 = por %p131, %p132
      %s135 = sadd.s32 %s134, 1
      %p138 = scmp.eq.s32.totalorder %s16, 1
      %p139 = scmp.ne.s32.totalorder %s134, %s136
      %p140 = scmp.eq.s32.totalorder %s16, 0
      %p141 = por %p139, %p140
      %p142 = scmp.ne.s32.totalorder %s134, %s136
      %p143 = scmp.eq.s32.totalorder %s21, 1
      %p144 = por %p142, %p143
      %p145 = scmp.ne.s32.totalorder %s136, %s137
      %p146 = scmp.eq.s32.totalorder %s21, 0
      %p147 = por %p145, %p146
      %p148 = scmp.ne.s32.totalorder %s136, %s137
      %p149 = scmp.eq.s32.totalorder %s22, 1
      %p150 = por %p148, %p149
      %p152 = scmp.ne.s32.totalorder %s137, %s151
      %p153 = scmp.eq.s32.totalorder %s22, 0
      %p154 = por %p152, %p153
      %s156 = sadd.s32 %s155, 1
      %p159 = scmp.eq.s32.totalorder %s16, 1
      %p160 = scmp.ne.s32.totalorder %s155, %s157
      %p161 = scmp.eq.s32.totalorder %s16, 0
      %p162 = por %p160, %p161
      %p163 = scmp.ne.s32.totalorder %s155, %s157
      %p164 = scmp.eq.s32.totalorder %s21, 1
      %p165 = por %p163, %p164
      %p166 = scmp.ne.s32.totalorder %s157, %s158
      %p167 = scmp.eq.s32.totalorder %s21, 0
      %p168 = por %p166, %p167
      %p169 = scmp.ne.s32.totalorder %s157, %s158
      %p170 = scmp.eq.s32.totalorder %s22, 1
      %p171 = por %p169, %p170
      %p173 = scmp.ne.s32.totalorder %s158, %s172
      %p174 = scmp.eq.s32.totalorder %s22, 0
      %p175 = por %p173, %p174
      %s176 = ssub.s32 %s16, %s23
      %p177 = scmp.eq.s32.totalorder %s176, 0
      %s179 = sadd.s32 %s178, 1
      %s180 = scalar_select %p177, %s178, %s179
      %p183 = pneg %p177
      %p184 = scmp.eq.s32.totalorder %s16, 1
      %p185 = por %p183, %p184
      %p186 = scmp.ne.s32.totalorder %s178, %s181
      %p187 = scmp.eq.s32.totalorder %s16, 0
      %p188 = por %p186, %p187
      %p189 = scmp.ne.s32.totalorder %s178, %s181
      %p190 = scmp.eq.s32.totalorder %s21, 1
      %p191 = por %p189, %p190
      %p192 = scmp.ne.s32.totalorder %s181, %s182
      %p193 = scmp.eq.s32.totalorder %s21, 0
      %p194 = por %p192, %p193
      %p195 = scmp.ne.s32.totalorder %s181, %s182
      %p196 = scmp.eq.s32.totalorder %s22, 1
      %p197 = por %p195, %p196
      %p199 = scmp.ne.s32.totalorder %s182, %s198
      %p200 = scmp.eq.s32.totalorder %s22, 0
      %p201 = por %p199, %p200
      %p202 = scmp.le.s32.totalorder 1, %s16
      %p203 = scmp.lt.s32.totalorder %s16, 3
      %p204 = pnand %p202, %p203
      %p205 = pneg %p204
      // Predicated region
      $region9: #{genki_forward.2} parent=5 // pred_check
        _
      $region10: #{genki_forward.2} parent=5 // pred_check_branch
        %207 = sbr.rel (%p204) target = $region12
      $region11: #{genki_forward.2} parent=5 // pred_region
        %s208 = ssub.s32 %s16, 1
        // Predicated region
        $region13: #{genki_forward.2} parent=11 // pred_check
          %p209 = pneg %p63
        $region14: #{genki_forward.2} parent=11 // pred_check_branch
          %211 = sbr.rel (%p209) target = $region16
        $region15: #{genki_forward.2} parent=11 // pred_region
          _
        $region16: #{genki_forward.2} parent=11 // pred_fallthru
          _
        // Predicated region
        $region17: #{genki_forward.2} parent=11 // pred_check
          %p212 = pneg %p84
        $region18: #{genki_forward.2} parent=11 // pred_check_branch
          %214 = sbr.rel (%p212) target = $region20
        $region19: #{genki_forward.2} parent=11 // pred_region
          %s216 = ssub.s32 16, 16
          %217 = vsyncadd [#allocation8], %s216
          %s219 = sshll.u32 [#allocation7], 4
          %s220 = int_to_ptr.vmem [resolvable:$true] %s219
          %222 = dma.hbm_to_vmem [thread:$0]  %s2, 16, %s220, [#allocation8]
        $region20: #{genki_forward.2} parent=11 // pred_fallthru
          _
        // Predicated region
        $region21: #{genki_forward.2} parent=11 // pred_check
          %p223 = pneg %p105
        $region22: #{genki_forward.2} parent=11 // pred_check_branch
          %225 = sbr.rel (%p223) target = $region24
        $region23: #{genki_forward.2} parent=11 // pred_region
          %s227 = ssub.s32 4608, 4608
          %228 = vsyncadd [#allocation10], %s227
          %s229 = sshll.u32 [#allocation9], 4
          %s230 = int_to_ptr.vmem [resolvable:$true] %s229
          %235 = dma.hbm_to_vmem [thread:$0]  %s3, 4608, %s230, [#allocation10], 128, 128, 8
        $region24: #{genki_forward.2} parent=11 // pred_fallthru
          _
        // Predicated region
        $region25: #{genki_forward.2} parent=11 // pred_check
          %p236 = pneg %p126
        $region26: #{genki_forward.2} parent=11 // pred_check_branch
          %238 = sbr.rel (%p236) target = $region28
        $region27: #{genki_forward.2} parent=11 // pred_region
          %s240 = ssub.s32 16, 16
          %241 = vsyncadd [#allocation10], %s240
          %s243 = sshll.u32 [#allocation11], 4
          %s244 = int_to_ptr.vmem [resolvable:$true] %s243
          %246 = dma.hbm_to_vmem [thread:$0]  %s4, 16, %s244, [#allocation10]
        $region28: #{genki_forward.2} parent=11 // pred_fallthru
          _
        // Predicated region
        $region29: #{genki_forward.2} parent=11 // pred_check
          %p247 = pneg %p147
        $region30: #{genki_forward.2} parent=11 // pred_check_branch
          %249 = sbr.rel (%p247) target = $region32
        $region31: #{genki_forward.2} parent=11 // pred_region
          _
        $region32: #{genki_forward.2} parent=11 // pred_fallthru
          _
        // Predicated region
        $region33: #{genki_forward.2} parent=11 // pred_check
          %p250 = pneg %p168
        $region34: #{genki_forward.2} parent=11 // pred_check_branch
          %252 = sbr.rel (%p250) target = $region36
        $region35: #{genki_forward.2} parent=11 // pred_region
          %s254 = ssub.s32 16, 16
          %255 = vsyncadd [#allocation13], %s254
          %s257 = sshll.u32 [#allocation12], 4
          %s258 = int_to_ptr.vmem [resolvable:$true] %s257
          %260 = dma.hbm_to_vmem [thread:$0]  %s6, 16, %s258, [#allocation13]
        $region36: #{genki_forward.2} parent=11 // pred_fallthru
          _
      $region12: #{genki_forward.2} parent=5 // pred_fallthru
        _
      %p261 = scmp.lt.s32.totalorder %s16, 2
      // Predicated region
      $region37: #{genki_forward.2} parent=5 // pred_check
        %p262 = pneg %p261
      $region38: #{genki_forward.2} parent=5 // pred_check_branch
        %264 = sbr.rel (%p262) target = $region40
      $region39: #{genki_forward.2} parent=5 // pred_region
        // Predicated region
        $region41: #{genki_forward.2} parent=39 // pred_check
          %p265 = pneg %p36
        $region42: #{genki_forward.2} parent=39 // pred_check_branch
          %267 = sbr.rel (%p265) target = $region44
        $region43: #{genki_forward.2} parent=39 // pred_region
          %p268 = scmp.lt.s32.totalorder %s16, 1
          %s269 = scalar_select %p268, %s16, 1
          %s270 = smul.addr %s269, 512
          %s271 = smul.addr %s270, 8
          %s272 = scalar_lea.vmem %s0, %s271
        $region44: #{genki_forward.2} parent=39 // pred_fallthru
          _
      $region40: #{genki_forward.2} parent=5 // pred_fallthru
        _
      %p273 = scmp.le.s32.totalorder 1, %s16
      %p274 = scmp.lt.s32.totalorder %s16, 3
      %p275 = pnand %p273, %p274
      %p276 = pneg %p275
      // Predicated region
      $region45: #{genki_forward.2} parent=5 // pred_check
        _
      $region46: #{genki_forward.2} parent=5 // pred_check_branch
        %278 = sbr.rel (%p275) target = $region48
      $region47: #{genki_forward.2} parent=5 // pred_region
        %s279 = ssub.s32 %s16, 1
        // Predicated region
        $region49: #{genki_forward.2} parent=47 // pred_check
          %p280 = pneg %p84
        $region50: #{genki_forward.2} parent=47 // pred_check_branch
          %282 = sbr.rel (%p280) target = $region52
        $region51: #{genki_forward.2} parent=47 // pred_region
          %283 = dma.done [#allocation8], 16
        $region52: #{genki_forward.2} parent=47 // pred_fallthru
          _
        // Predicated region
        $region53: #{genki_forward.2} parent=47 // pred_check
          %p284 = pneg %p105
        $region54: #{genki_forward.2} parent=47 // pred_check_branch
          %286 = sbr.rel (%p284) target = $region56
        $region55: #{genki_forward.2} parent=47 // pred_region
          %287 = dma.done [#allocation10], 4608
        $region56: #{genki_forward.2} parent=47 // pred_fallthru
          _
        // Predicated region
        $region57: #{genki_forward.2} parent=47 // pred_check
          %p288 = pneg %p126
        $region58: #{genki_forward.2} parent=47 // pred_check_branch
          %290 = sbr.rel (%p288) target = $region60
        $region59: #{genki_forward.2} parent=47 // pred_region
          %291 = dma.done [#allocation10], 16
        $region60: #{genki_forward.2} parent=47 // pred_fallthru
          _
        // Predicated region
        $region61: #{genki_forward.2} parent=47 // pred_check
          %p292 = pneg %p168
        $region62: #{genki_forward.2} parent=47 // pred_check_branch
          %294 = sbr.rel (%p292) target = $region64
        $region63: #{genki_forward.2} parent=47 // pred_region
          %295 = dma.done [#allocation13], 16
        $region64: #{genki_forward.2} parent=47 // pred_fallthru
          _
        %p296 = scmp.lt.s32.totalorder %s21, 1
        %s297 = scalar_select %p296, %s21, 1
        %s298 = smul.addr %s297, 512
        %s299 = smul.addr %s298, 8
        %s300 = scalar_lea.vmem %s0, %s299
        %p301 = pneg %p42
        %p302 = pneg %p39
        %p303 = pneg %p63
        %p304 = pneg %p60
        %p305 = pneg %p84
        %p306 = pneg %p81
        %p307 = pneg %p105
        %p308 = pneg %p102
        %p309 = pneg %p126
        %p310 = pneg %p123
        %p311 = pneg %p147
        %p312 = pneg %p144
        %p313 = pneg %p168
        %p314 = pneg %p165
        %p315 = pneg %p194
        %p316 = pneg %p191
        %p317 = scmp.lt.s32.totalorder %s21, 1
        %s318 = scalar_select %p317, %s21, 1
        %s319 = smul.addr %s318, 8
        %s320 = smul.addr %s319, 8
        %s321 = scalar_lea.vmem %s7, %s320
        %p322 = scmp.lt.s32.totalorder %s21, 1
        %s323 = scalar_select %p322, %s21, 1
        %s324 = smul.addr %s323, 512
        %s325 = smul.addr %s324, 8
        %s326 = scalar_lea.vmem %s0, %s325
        %p327 = scmp.lt.s32.totalorder %s21, 1
        %s328 = scalar_select %p327, %s21, 1
        %s329 = smul.addr %s328, 8
        %s330 = smul.addr %s329, 8
        %s331 = scalar_lea.vmem %s7, %s330
        %vm332 = vcmask 261120
        %333 = vst.msk [vmem:[#allocation2] sm:$0xff] %vm332, 0.0
        %334 = vst.msk [vmem:[#allocation2 + $0x8] sm:$0xff] %vm332, 0.0
        %335 = vst.msk [vmem:[#allocation2 + $0x10] sm:$0xff] %vm332, 0.0
        %336 = vst.msk [vmem:[#allocation2 + $0x18] sm:$0xff] %vm332, 0.0
        %337 = vst.msk [vmem:[#allocation2 + $0x20] sm:$0xff] %vm332, 0.0
        %338 = vst.msk [vmem:[#allocation2 + $0x28] sm:$0xff] %vm332, 0.0
        %s339 = scalar_lea.vmem [#allocation2], 1584
        %340 = vst.msk [vmem:[%s339] sm:$0xff] %vm332, 0.0
        %341 = vst.msk [vmem:[%s339 + $0x8] sm:$0xff] %vm332, 0.0
        %342 = vst.msk [vmem:[%s339 + $0x10] sm:$0xff] %vm332, 0.0
        %343 = vst.msk [vmem:[%s339 + $0x18] sm:$0xff] %vm332, 0.0
        %344 = vst.msk [vmem:[%s339 + $0x20] sm:$0xff] %vm332, 0.0
        %345 = vst.msk [vmem:[%s339 + $0x28] sm:$0xff] %vm332, 0.0
        %346 = vst.msk [vmem:[#allocation2] sm:$0xff] %vm332, 0.0
        %347 = vst.msk [vmem:[#allocation2 + $0x30] sm:$0xff] %vm332, 0.0
        %348 = vst.msk [vmem:[#allocation2 + $0x60] sm:$0xff] %vm332, 0.0
        %349 = vst.msk [vmem:[#allocation2 + $0x90] sm:$0xff] %vm332, 0.0
        %350 = vst.msk [vmem:[#allocation2 + $0xc0] sm:$0xff] %vm332, 0.0
        %351 = vst.msk [vmem:[#allocation2 + $0xf0] sm:$0xff] %vm332, 0.0
        %352 = vst.msk [vmem:[#allocation2 + $0x120] sm:$0xff] %vm332, 0.0
        %353 = vst.msk [vmem:[#allocation2 + $0x150] sm:$0xff] %vm332, 0.0
        %354 = vst.msk [vmem:[#allocation2 + $0x180] sm:$0xff] %vm332, 0.0
        %355 = vst.msk [vmem:[#allocation2 + $0x1b0] sm:$0xff] %vm332, 0.0
        %356 = vst.msk [vmem:[#allocation2 + $0x1e0] sm:$0xff] %vm332, 0.0
        %357 = vst.msk [vmem:[#allocation2 + $0x210] sm:$0xff] %vm332, 0.0
        %358 = vst.msk [vmem:[#allocation2 + $0x240] sm:$0xff] %vm332, 0.0
        %359 = vst.msk [vmem:[#allocation2 + $0x270] sm:$0xff] %vm332, 0.0
        %360 = vst.msk [vmem:[#allocation2 + $0x2a0] sm:$0xff] %vm332, 0.0
        %361 = vst.msk [vmem:[#allocation2 + $0x2d0] sm:$0xff] %vm332, 0.0
        %362 = vst.msk [vmem:[#allocation2 + $0x300] sm:$0xff] %vm332, 0.0
        %363 = vst.msk [vmem:[#allocation2 + $0x330] sm:$0xff] %vm332, 0.0
        %364 = vst.msk [vmem:[#allocation2 + $0x360] sm:$0xff] %vm332, 0.0
        %365 = vst.msk [vmem:[#allocation2 + $0x390] sm:$0xff] %vm332, 0.0
        %366 = vst.msk [vmem:[#allocation2 + $0x3c0] sm:$0xff] %vm332, 0.0
        %367 = vst.msk [vmem:[#allocation2 + $0x3f0] sm:$0xff] %vm332, 0.0
        %368 = vst.msk [vmem:[#allocation2 + $0x420] sm:$0xff] %vm332, 0.0
        %369 = vst.msk [vmem:[#allocation2 + $0x450] sm:$0xff] %vm332, 0.0
        %370 = vst.msk [vmem:[#allocation2 + $0x480] sm:$0xff] %vm332, 0.0
        %371 = vst.msk [vmem:[#allocation2 + $0x4b0] sm:$0xff] %vm332, 0.0
        %372 = vst.msk [vmem:[#allocation2 + $0x4e0] sm:$0xff] %vm332, 0.0
        %373 = vst.msk [vmem:[#allocation2 + $0x510] sm:$0xff] %vm332, 0.0
        %374 = vst.msk [vmem:[#allocation2 + $0x540] sm:$0xff] %vm332, 0.0
        %375 = vst.msk [vmem:[#allocation2 + $0x570] sm:$0xff] %vm332, 0.0
        %376 = vst.msk [vmem:[#allocation2 + $0x5a0] sm:$0xff] %vm332, 0.0
        %377 = vst.msk [vmem:[#allocation2 + $0x5d0] sm:$0xff] %vm332, 0.0
        %378 = vst.msk [vmem:[#allocation2 + $0x600] sm:$0xff] %vm332, 0.0
        %379 = vst.msk [vmem:[#allocation2 + $0x630] sm:$0xff] %vm332, 0.0
        %380 = vst.msk [vmem:[#allocation2 + $0x28] sm:$0xff] %vm332, 0.0
        %381 = vst.msk [vmem:[#allocation2 + $0x58] sm:$0xff] %vm332, 0.0
        %382 = vst.msk [vmem:[#allocation2 + $0x88] sm:$0xff] %vm332, 0.0
        %383 = vst.msk [vmem:[#allocation2 + $0xb8] sm:$0xff] %vm332, 0.0
        %384 = vst.msk [vmem:[#allocation2 + $0xe8] sm:$0xff] %vm332, 0.0
        %385 = vst.msk [vmem:[#allocation2 + $0x118] sm:$0xff] %vm332, 0.0
        %386 = vst.msk [vmem:[#allocation2 + $0x148] sm:$0xff] %vm332, 0.0
        %387 = vst.msk [vmem:[#allocation2 + $0x178] sm:$0xff] %vm332, 0.0
        %388 = vst.msk [vmem:[#allocation2 + $0x1a8] sm:$0xff] %vm332, 0.0
        %389 = vst.msk [vmem:[#allocation2 + $0x1d8] sm:$0xff] %vm332, 0.0
        %390 = vst.msk [vmem:[#allocation2 + $0x208] sm:$0xff] %vm332, 0.0
        %391 = vst.msk [vmem:[#allocation2 + $0x238] sm:$0xff] %vm332, 0.0
        %392 = vst.msk [vmem:[#allocation2 + $0x268] sm:$0xff] %vm332, 0.0
        %393 = vst.msk [vmem:[#allocation2 + $0x298] sm:$0xff] %vm332, 0.0
        %394 = vst.msk [vmem:[#allocation2 + $0x2c8] sm:$0xff] %vm332, 0.0
        %395 = vst.msk [vmem:[#allocation2 + $0x2f8] sm:$0xff] %vm332, 0.0
        %396 = vst.msk [vmem:[#allocation2 + $0x328] sm:$0xff] %vm332, 0.0
        %397 = vst.msk [vmem:[#allocation2 + $0x358] sm:$0xff] %vm332, 0.0
        %398 = vst.msk [vmem:[#allocation2 + $0x388] sm:$0xff] %vm332, 0.0
        %399 = vst.msk [vmem:[#allocation2 + $0x3b8] sm:$0xff] %vm332, 0.0
        %400 = vst.msk [vmem:[#allocation2 + $0x3e8] sm:$0xff] %vm332, 0.0
        %401 = vst.msk [vmem:[#allocation2 + $0x418] sm:$0xff] %vm332, 0.0
        %402 = vst.msk [vmem:[#allocation2 + $0x448] sm:$0xff] %vm332, 0.0
        %403 = vst.msk [vmem:[#allocation2 + $0x478] sm:$0xff] %vm332, 0.0
        %404 = vst.msk [vmem:[#allocation2 + $0x4a8] sm:$0xff] %vm332, 0.0
        %405 = vst.msk [vmem:[#allocation2 + $0x4d8] sm:$0xff] %vm332, 0.0
        %406 = vst.msk [vmem:[#allocation2 + $0x508] sm:$0xff] %vm332, 0.0
        %407 = vst.msk [vmem:[#allocation2 + $0x538] sm:$0xff] %vm332, 0.0
        %408 = vst.msk [vmem:[#allocation2 + $0x568] sm:$0xff] %vm332, 0.0
        %409 = vst.msk [vmem:[#allocation2 + $0x598] sm:$0xff] %vm332, 0.0
        %410 = vst.msk [vmem:[#allocation2 + $0x5c8] sm:$0xff] %vm332, 0.0
        %411 = vst.msk [vmem:[#allocation2 + $0x5f8] sm:$0xff] %vm332, 0.0
        %412 = vst.msk [vmem:[#allocation2 + $0x628] sm:$0xff] %vm332, 0.0
        %413 = vst.msk [vmem:[#allocation2 + $0x658] sm:$0xff] %vm332, 0.0
        %414 = vst.msk [vmem:[#allocation3] sm:$0xff] %vm332, 0.0
        %415 = vst.msk [vmem:[#allocation3 + $0x8] sm:$0xff] %vm332, 0.0
        %416 = vst.msk [vmem:[#allocation3 + $0x10] sm:$0xff] %vm332, 0.0
        %417 = vst.msk [vmem:[#allocation3 + $0x18] sm:$0xff] %vm332, 0.0
        %s418 = scalar_lea.vmem [#allocation3], 544
        %419 = vst.msk [vmem:[%s418] sm:$0xff] %vm332, 0.0
        %420 = vst.msk [vmem:[%s418 + $0x8] sm:$0xff] %vm332, 0.0
        %421 = vst.msk [vmem:[%s418 + $0x10] sm:$0xff] %vm332, 0.0
        %422 = vst.msk [vmem:[%s418 + $0x18] sm:$0xff] %vm332, 0.0
        %423 = vst.msk [vmem:[#allocation3] sm:$0xff] %vm332, 0.0
        %424 = vst.msk [vmem:[#allocation3 + $0x20] sm:$0xff] %vm332, 0.0
        %425 = vst.msk [vmem:[#allocation3 + $0x40] sm:$0xff] %vm332, 0.0
        %426 = vst.msk [vmem:[#allocation3 + $0x60] sm:$0xff] %vm332, 0.0
        %427 = vst.msk [vmem:[#allocation3 + $0x80] sm:$0xff] %vm332, 0.0
        %428 = vst.msk [vmem:[#allocation3 + $0xa0] sm:$0xff] %vm332, 0.0
        %429 = vst.msk [vmem:[#allocation3 + $0xc0] sm:$0xff] %vm332, 0.0
        %430 = vst.msk [vmem:[#allocation3 + $0xe0] sm:$0xff] %vm332, 0.0
        %431 = vst.msk [vmem:[#allocation3 + $0x100] sm:$0xff] %vm332, 0.0
        %432 = vst.msk [vmem:[#allocation3 + $0x120] sm:$0xff] %vm332, 0.0
        %433 = vst.msk [vmem:[#allocation3 + $0x140] sm:$0xff] %vm332, 0.0
        %434 = vst.msk [vmem:[#allocation3 + $0x160] sm:$0xff] %vm332, 0.0
        %435 = vst.msk [vmem:[#allocation3 + $0x180] sm:$0xff] %vm332, 0.0
        %436 = vst.msk [vmem:[#allocation3 + $0x1a0] sm:$0xff] %vm332, 0.0
        %437 = vst.msk [vmem:[#allocation3 + $0x1c0] sm:$0xff] %vm332, 0.0
        %438 = vst.msk [vmem:[#allocation3 + $0x1e0] sm:$0xff] %vm332, 0.0
        %439 = vst.msk [vmem:[#allocation3 + $0x200] sm:$0xff] %vm332, 0.0
        %440 = vst.msk [vmem:[#allocation3 + $0x220] sm:$0xff] %vm332, 0.0
        %441 = vst.msk [vmem:[#allocation3 + $0x18] sm:$0xff] %vm332, 0.0
        %442 = vst.msk [vmem:[#allocation3 + $0x38] sm:$0xff] %vm332, 0.0
        %443 = vst.msk [vmem:[#allocation3 + $0x58] sm:$0xff] %vm332, 0.0
        %444 = vst.msk [vmem:[#allocation3 + $0x78] sm:$0xff] %vm332, 0.0
        %445 = vst.msk [vmem:[#allocation3 + $0x98] sm:$0xff] %vm332, 0.0
        %446 = vst.msk [vmem:[#allocation3 + $0xb8] sm:$0xff] %vm332, 0.0
        %447 = vst.msk [vmem:[#allocation3 + $0xd8] sm:$0xff] %vm332, 0.0
        %448 = vst.msk [vmem:[#allocation3 + $0xf8] sm:$0xff] %vm332, 0.0
        %449 = vst.msk [vmem:[#allocation3 + $0x118] sm:$0xff] %vm332, 0.0
        %450 = vst.msk [vmem:[#allocation3 + $0x138] sm:$0xff] %vm332, 0.0
        %451 = vst.msk [vmem:[#allocation3 + $0x158] sm:$0xff] %vm332, 0.0
        %452 = vst.msk [vmem:[#allocation3 + $0x178] sm:$0xff] %vm332, 0.0
        %453 = vst.msk [vmem:[#allocation3 + $0x198] sm:$0xff] %vm332, 0.0
        %454 = vst.msk [vmem:[#allocation3 + $0x1b8] sm:$0xff] %vm332, 0.0
        %455 = vst.msk [vmem:[#allocation3 + $0x1d8] sm:$0xff] %vm332, 0.0
        %456 = vst.msk [vmem:[#allocation3 + $0x1f8] sm:$0xff] %vm332, 0.0
        %457 = vst.msk [vmem:[#allocation3 + $0x218] sm:$0xff] %vm332, 0.0
        %458 = vst.msk [vmem:[#allocation3 + $0x238] sm:$0xff] %vm332, 0.0
        %v459 = vld [vmem:[%s1] sm:$0xff]
        %v460 = vld [vmem:[%s1 + $0x8] sm:$0xff]
        %v461 = vld [vmem:[%s1 + $0x10] sm:$0xff]
        %v462 = vld [vmem:[%s1 + $0x18] sm:$0xff]
        %v463 = vld [vmem:[#allocation7] sm:$0x1]
        %v464 = vld [vmem:[#allocation11] sm:$0x1]
        %v465 = vld [vmem:[#allocation12] sm:$0x1]
        loop: start=0, step=1, limit=16
        $region65: #{genki_forward.2} parent=47 // loop_pre_header
          _
        $region66: #{genki_forward.2} parent=47 // loop_header
          %s467 = sphi 0, %s471
          %p468 = scmp.ge.s32.totalorder %s467, 16
        $region67: #{genki_forward.2} parent=47 // loop_header_branch
          %470 = sbr.rel (%p468) target = $region71
        $region68: #{genki_forward.2} parent=47 // loop_body
          %s472 = smul.u32 %s467, 256
          %s473 = scalar_lea.vmem %s326, %s472
          %v474 = vld [vmem:[%s473] sm:$0xff]
          %v475 = vld [vmem:[%s473 + $0x8] sm:$0xff]
          %v476 = vld [vmem:[%s473 + $0x10] sm:$0xff]
          %v477 = vld [vmem:[%s473 + $0x18] sm:$0xff]
          %v478 = vld [vmem:[%s473 + $0x20] sm:$0xff]
          %v479 = vld [vmem:[%s473 + $0x28] sm:$0xff]
          %v480 = vld [vmem:[%s473 + $0x30] sm:$0xff]
          %v481 = vld [vmem:[%s473 + $0x38] sm:$0xff]
          %v482 = vld [vmem:[%s473 + $0x40] sm:$0xff]
          %v483 = vld [vmem:[%s473 + $0x48] sm:$0xff]
          %v484 = vld [vmem:[%s473 + $0x50] sm:$0xff]
          %v485 = vld [vmem:[%s473 + $0x58] sm:$0xff]
          %v486 = vld [vmem:[%s473 + $0x60] sm:$0xff]
          %v487 = vld [vmem:[%s473 + $0x68] sm:$0xff]
          %v488 = vld [vmem:[%s473 + $0x70] sm:$0xff]
          %v489 = vld [vmem:[%s473 + $0x78] sm:$0xff]
          %v490 = vld [vmem:[%s473 + $0x80] sm:$0xff]
          %v491 = vld [vmem:[%s473 + $0x88] sm:$0xff]
          %v492 = vld [vmem:[%s473 + $0x90] sm:$0xff]
          %v493 = vld [vmem:[%s473 + $0x98] sm:$0xff]
          %v494 = vld [vmem:[%s473 + $0xa0] sm:$0xff]
          %v495 = vld [vmem:[%s473 + $0xa8] sm:$0xff]
          %v496 = vld [vmem:[%s473 + $0xb0] sm:$0xff]
          %v497 = vld [vmem:[%s473 + $0xb8] sm:$0xff]
          %v498 = vld [vmem:[%s473 + $0xc0] sm:$0xff]
          %v499 = vld [vmem:[%s473 + $0xc8] sm:$0xff]
          %v500 = vld [vmem:[%s473 + $0xd0] sm:$0xff]
          %v501 = vld [vmem:[%s473 + $0xd8] sm:$0xff]
          %v502 = vld [vmem:[%s473 + $0xe0] sm:$0xff]
          %v503 = vld [vmem:[%s473 + $0xe8] sm:$0xff]
          %v504 = vld [vmem:[%s473 + $0xf0] sm:$0xff]
          %v505 = vld [vmem:[%s473 + $0xf8] sm:$0xff]
          %v507 = vlaneseq
          %v508 = vshrl.u32 %v507, 7
          %v509 = vsub.s32 0, %v508
          %v510 = vrot.slane %v463, %v509
          %v513 = vsel %vm332, %v474, 0
          %v516 = vsel %vm332, %v475, 0
          %v519 = vsel %vm332, %v476, 0
          %v522 = vsel %vm332, %v477, 0
          %v525 = vsel %vm332, %v478, 0
          %v528 = vsel %vm332, %v479, 0
          %v531 = vsel %vm332, %v480, 0
          %v534 = vsel %vm332, %v481, 0
          %v537 = vsel %vm332, %v482, 0
          %v540 = vsel %vm332, %v483, 0
          %v543 = vsel %vm332, %v484, 0
          %v546 = vsel %vm332, %v485, 0
          %v549 = vsel %vm332, %v486, 0
          %v552 = vsel %vm332, %v487, 0
          %v555 = vsel %vm332, %v488, 0
          %v558 = vsel %vm332, %v489, 0
          %v561 = vsel %vm332, %v490, 0
          %v564 = vsel %vm332, %v491, 0
          %v567 = vsel %vm332, %v492, 0
          %v570 = vsel %vm332, %v493, 0
          %v573 = vsel %vm332, %v494, 0
          %v576 = vsel %vm332, %v495, 0
          %v579 = vsel %vm332, %v496, 0
          %v582 = vsel %vm332, %v497, 0
          %v585 = vsel %vm332, %v498, 0
          %v588 = vsel %vm332, %v499, 0
          %v591 = vsel %vm332, %v500, 0
          %v594 = vsel %vm332, %v501, 0
          %v597 = vsel %vm332, %v502, 0
          %v600 = vsel %vm332, %v503, 0
          %v603 = vsel %vm332, %v504, 0
          %v606 = vsel %vm332, %v505, 0
          %608 = vmatprep.subr.mxu0 0.0
          %609 = vmatpush1.msra.mxu0 %v459
          %610 = vmatprep.subr.mxu0 0.0
          %611 = vmatpush1.msra.mxu0 %v460
          %612 = vmatprep.subr.mxu0 0.0
          %613 = vmatpush1.msra.mxu0 %v461
          %614 = vmatprep.subr.mxu0 0.0
          %615 = vmatpush1.msra.mxu0 %v462
          %616 = vmatprep.subr.mxu0 0.0
          %617 = vmatpush1.msra.mxu0 0.0
          %618 = vmatprep.subr.mxu0 0.0
          %619 = vmatpush1.msra.mxu0 0.0
          %620 = vmatprep.subr.mxu0 0.0
          %621 = vmatpush1.msra.mxu0 0.0
          %622 = vmatprep.subr.mxu0 0.0
          %623 = vmatpush1.msra.mxu0 0.0
          %624 = vmatprep.subr.mxu0 0.0
          %625 = vmatpush1.msra.mxu0 0.0
          %626 = vmatprep.subr.mxu0 0.0
          %627 = vmatpush1.msra.mxu0 0.0
          %628 = vmatprep.subr.mxu0 0.0
          %629 = vmatpush1.msra.mxu0 0.0
          %630 = vmatprep.subr.mxu0 0.0
          %631 = vmatpush1.msra.mxu0 0.0
          %632 = vmatprep.subr.mxu0 0.0
          %633 = vmatpush1.msra.mxu0 0.0
          %634 = vmatprep.subr.mxu0 0.0
          %635 = vmatpush1.msra.mxu0 0.0
          %636 = vmatprep.subr.mxu0 0.0
          %637 = vmatpush1.msra.mxu0 0.0
          %638 = vmatprep.subr.mxu0 0.0
          %639 = vmatpush1.msra.mxu0 0.0
          %640 = vmatprep.subr.mxu0 0.0
          %641 = vmatpush1.msra.mxu0 0.0
          %642 = vmatprep.subr.mxu0 0.0
          %643 = vmatpush1.msra.mxu0 0.0
          %644 = vmatprep.subr.mxu0 0.0
          %645 = vmatpush1.msra.mxu0 0.0
          %646 = vmatprep.subr.mxu0 0.0
          %647 = vmatpush1.msra.mxu0 0.0
          %648 = vmatprep.subr.mxu0 0.0
          %649 = vmatpush1.msra.mxu0 0.0
          %650 = vmatprep.subr.mxu0 0.0
          %651 = vmatpush1.msra.mxu0 0.0
          %652 = vmatprep.subr.mxu0 0.0
          %653 = vmatpush1.msra.mxu0 0.0
          %654 = vmatprep.subr.mxu0 0.0
          %655 = vmatpush1.msra.mxu0 0.0
          %656 = vmatprep.subr.mxu0 0.0
          %657 = vmatpush1.msra.mxu0 0.0
          %658 = vmatprep.subr.mxu0 0.0
          %659 = vmatpush1.msra.mxu0 0.0
          %660 = vmatprep.subr.mxu0 0.0
          %661 = vmatpush1.msra.mxu0 0.0
          %662 = vmatprep.subr.mxu0 0.0
          %663 = vmatpush1.msra.mxu0 0.0
          %664 = vmatprep.subr.mxu0 0.0
          %665 = vmatpush1.msra.mxu0 0.0
          %666 = vmatprep.subr.mxu0 0.0
          %667 = vmatpush1.msra.mxu0 0.0
          %668 = vmatprep.subr.mxu0 0.0
          %669 = vmatpush1.msra.mxu0 0.0
          %670 = vmatprep.subr.mxu0 0.0
          %671 = vmatpush1.msra.mxu0 0.0
          %672 = vmatprep.mubr.f32.mxu0 0.0
          %673 = vmatmul.mubr.f32.gmra.mrb[0].mxu0 %v513
          %v674 = vpop.f32.mrb[0].mxu0
          %v675 = vadd.f32 %v510, %v674
          %v676 = vpop.f32.mrb[0].mxu0
          %677 = vmatprep.mubr.f32.mxu0 0.0
          %678 = vmatmul.mubr.f32.gmra.mrb[0].mxu0 %v516
          %v679 = vpop.f32.mrb[0].mxu0
          %v680 = vadd.f32 %v510, %v679
          %v681 = vpop.f32.mrb[0].mxu0
          %682 = vmatprep.mubr.f32.mxu0 0.0
          %683 = vmatmul.mubr.f32.gmra.mrb[0].mxu0 %v519
          %v684 = vpop.f32.mrb[0].mxu0
          %v685 = vadd.f32 %v510, %v684
          %v686 = vpop.f32.mrb[0].mxu0
          %687 = vmatprep.mubr.f32.mxu0 0.0
          %688 = vmatmul.mubr.f32.gmra.mrb[0].mxu0 %v522
          %v689 = vpop.f32.mrb[0].mxu0
          %v690 = vadd.f32 %v510, %v689
          %v691 = vpop.f32.mrb[0].mxu0
          %692 = vmatprep.mubr.f32.mxu0 0.0
          %693 = vmatmul.mubr.f32.gmra.mrb[0].mxu0 %v525
          %v694 = vpop.f32.mrb[0].mxu0
          %v695 = vadd.f32 %v510, %v694
          %v696 = vpop.f32.mrb[0].mxu0
          %697 = vmatprep.mubr.f32.mxu0 0.0
          %698 = vmatmul.mubr.f32.gmra.mrb[0].mxu0 %v528
          %v699 = vpop.f32.mrb[0].mxu0
          %v700 = vadd.f32 %v510, %v699
          %v701 = vpop.f32.mrb[0].mxu0
          %702 = vmatprep.mubr.f32.mxu0 0.0
          %703 = vmatmul.mubr.f32.gmra.mrb[0].mxu0 %v531
          %v704 = vpop.f32.mrb[0].mxu0
          %v705 = vadd.f32 %v510, %v704
          %v706 = vpop.f32.mrb[0].mxu0
          %707 = vmatprep.mubr.f32.mxu0 0.0
          %708 = vmatmul.mubr.f32.gmra.mrb[0].mxu0 %v534
          %v709 = vpop.f32.mrb[0].mxu0
          %v710 = vadd.f32 %v510, %v709
          %v711 = vpop.f32.mrb[0].mxu0
          %712 = vmatprep.mubr.f32.mxu0 0.0
          %713 = vmatmul.mubr.f32.gmra.mrb[0].mxu0 %v537
          %v714 = vpop.f32.mrb[0].mxu0
          %v715 = vadd.f32 %v510, %v714
          %v716 = vpop.f32.mrb[0].mxu0
          %717 = vmatprep.mubr.f32.mxu0 0.0
          %718 = vmatmul.mubr.f32.gmra.mrb[0].mxu0 %v540
          %v719 = vpop.f32.mrb[0].mxu0
          %v720 = vadd.f32 %v510, %v719
          %v721 = vpop.f32.mrb[0].mxu0
          %722 = vmatprep.mubr.f32.mxu0 0.0
          %723 = vmatmul.mubr.f32.gmra.mrb[0].mxu0 %v543
          %v724 = vpop.f32.mrb[0].mxu0
          %v725 = vadd.f32 %v510, %v724
          %v726 = vpop.f32.mrb[0].mxu0
          %727 = vmatprep.mubr.f32.mxu0 0.0
          %728 = vmatmul.mubr.f32.gmra.mrb[0].mxu0 %v546
          %v729 = vpop.f32.mrb[0].mxu0
          %v730 = vadd.f32 %v510, %v729
          %v731 = vpop.f32.mrb[0].mxu0
          %732 = vmatprep.mubr.f32.mxu0 0.0
          %733 = vmatmul.mubr.f32.gmra.mrb[0].mxu0 %v549
          %v734 = vpop.f32.mrb[0].mxu0
          %v735 = vadd.f32 %v510, %v734
          %v736 = vpop.f32.mrb[0].mxu0
          %737 = vmatprep.mubr.f32.mxu0 0.0
          %738 = vmatmul.mubr.f32.gmra.mrb[0].mxu0 %v552
          %v739 = vpop.f32.mrb[0].mxu0
          %v740 = vadd.f32 %v510, %v739
          %v741 = vpop.f32.mrb[0].mxu0
          %742 = vmatprep.mubr.f32.mxu0 0.0
          %743 = vmatmul.mubr.f32.gmra.mrb[0].mxu0 %v555
          %v744 = vpop.f32.mrb[0].mxu0
          %v745 = vadd.f32 %v510, %v744
          %v746 = vpop.f32.mrb[0].mxu0
          %747 = vmatprep.mubr.f32.mxu0 0.0
          %748 = vmatmul.mubr.f32.gmra.mrb[0].mxu0 %v558
          %v749 = vpop.f32.mrb[0].mxu0
          %v750 = vadd.f32 %v510, %v749
          %v751 = vpop.f32.mrb[0].mxu0
          %752 = vmatprep.mubr.f32.mxu0 0.0
          %753 = vmatmul.mubr.f32.gmra.mrb[0].mxu0 %v561
          %v754 = vpop.f32.mrb[0].mxu0
          %v755 = vadd.f32 %v510, %v754
          %v756 = vpop.f32.mrb[0].mxu0
          %757 = vmatprep.mubr.f32.mxu0 0.0
          %758 = vmatmul.mubr.f32.gmra.mrb[0].mxu0 %v564
          %v759 = vpop.f32.mrb[0].mxu0
          %v760 = vadd.f32 %v510, %v759
          %v761 = vpop.f32.mrb[0].mxu0
          %762 = vmatprep.mubr.f32.mxu0 0.0
          %763 = vmatmul.mubr.f32.gmra.mrb[0].mxu0 %v567
          %v764 = vpop.f32.mrb[0].mxu0
          %v765 = vadd.f32 %v510, %v764
          %v766 = vpop.f32.mrb[0].mxu0
          %767 = vmatprep.mubr.f32.mxu0 0.0
          %768 = vmatmul.mubr.f32.gmra.mrb[0].mxu0 %v570
          %v769 = vpop.f32.mrb[0].mxu0
          %v770 = vadd.f32 %v510, %v769
          %v771 = vpop.f32.mrb[0].mxu0
          %772 = vmatprep.mubr.f32.mxu0 0.0
          %773 = vmatmul.mubr.f32.gmra.mrb[0].mxu0 %v573
          %v774 = vpop.f32.mrb[0].mxu0
          %v775 = vadd.f32 %v510, %v774
          %v776 = vpop.f32.mrb[0].mxu0
          %777 = vmatprep.mubr.f32.mxu0 0.0
          %778 = vmatmul.mubr.f32.gmra.mrb[0].mxu0 %v576
          %v779 = vpop.f32.mrb[0].mxu0
          %v780 = vadd.f32 %v510, %v779
          %v781 = vpop.f32.mrb[0].mxu0
          %782 = vmatprep.mubr.f32.mxu0 0.0
          %783 = vmatmul.mubr.f32.gmra.mrb[0].mxu0 %v579
          %v784 = vpop.f32.mrb[0].mxu0
          %v785 = vadd.f32 %v510, %v784
          %v786 = vpop.f32.mrb[0].mxu0
          %787 = vmatprep.mubr.f32.mxu0 0.0
          %788 = vmatmul.mubr.f32.gmra.mrb[0].mxu0 %v582
          %v789 = vpop.f32.mrb[0].mxu0
          %v790 = vadd.f32 %v510, %v789
          %v791 = vpop.f32.mrb[0].mxu0
          %792 = vmatprep.mubr.f32.mxu0 0.0
          %793 = vmatmul.mubr.f32.gmra.mrb[0].mxu0 %v585
          %v794 = vpop.f32.mrb[0].mxu0
          %v795 = vadd.f32 %v510, %v794
          %v796 = vpop.f32.mrb[0].mxu0
          %797 = vmatprep.mubr.f32.mxu0 0.0
          %798 = vmatmul.mubr.f32.gmra.mrb[0].mxu0 %v588
          %v799 = vpop.f32.mrb[0].mxu0
          %v800 = vadd.f32 %v510, %v799
          %v801 = vpop.f32.mrb[0].mxu0
          %802 = vmatprep.mubr.f32.mxu0 0.0
          %803 = vmatmul.mubr.f32.gmra.mrb[0].mxu0 %v591
          %v804 = vpop.f32.mrb[0].mxu0
          %v805 = vadd.f32 %v510, %v804
          %v806 = vpop.f32.mrb[0].mxu0
          %807 = vmatprep.mubr.f32.mxu0 0.0
          %808 = vmatmul.mubr.f32.gmra.mrb[0].mxu0 %v594
          %v809 = vpop.f32.mrb[0].mxu0
          %v810 = vadd.f32 %v510, %v809
          %v811 = vpop.f32.mrb[0].mxu0
          %812 = vmatprep.mubr.f32.mxu0 0.0
          %813 = vmatmul.mubr.f32.gmra.mrb[0].mxu0 %v597
          %v814 = vpop.f32.mrb[0].mxu0
          %v815 = vadd.f32 %v510, %v814
          %v816 = vpop.f32.mrb[0].mxu0
          %817 = vmatprep.mubr.f32.mxu0 0.0
          %818 = vmatmul.mubr.f32.gmra.mrb[0].mxu0 %v600
          %v819 = vpop.f32.mrb[0].mxu0
          %v820 = vadd.f32 %v510, %v819
          %v821 = vpop.f32.mrb[0].mxu0
          %822 = vmatprep.mubr.f32.mxu0 0.0
          %823 = vmatmul.mubr.f32.gmra.mrb[0].mxu0 %v603
          %v824 = vpop.f32.mrb[0].mxu0
          %v825 = vadd.f32 %v510, %v824
          %v826 = vpop.f32.mrb[0].mxu0
          %827 = vmatprep.mubr.f32.mxu0 0.0
          %828 = vmatmul.mubr.f32.gmra.mrb[0].mxu0 %v606
          %v829 = vpop.f32.mrb[0].mxu0
          %v830 = vadd.f32 %v510, %v829
          %v831 = vpop.f32.mrb[0].mxu0
          %832 = vdwg.mxu0
          %v833 = vmax.f32 %v675, 0.0
          %v834 = vmax.f32 %v680, 0.0
          %v835 = vmax.f32 %v685, 0.0
          %v836 = vmax.f32 %v690, 0.0
          %v837 = vmax.f32 %v695, 0.0
          %v838 = vmax.f32 %v700, 0.0
          %v839 = vmax.f32 %v705, 0.0
          %v840 = vmax.f32 %v710, 0.0
          %v841 = vmax.f32 %v715, 0.0
          %v842 = vmax.f32 %v720, 0.0
          %v843 = vmax.f32 %v725, 0.0
          %v844 = vmax.f32 %v730, 0.0
          %v845 = vmax.f32 %v735, 0.0
          %v846 = vmax.f32 %v740, 0.0
          %v847 = vmax.f32 %v745, 0.0
          %v848 = vmax.f32 %v750, 0.0
          %v849 = vmax.f32 %v755, 0.0
          %v850 = vmax.f32 %v760, 0.0
          %v851 = vmax.f32 %v765, 0.0
          %v852 = vmax.f32 %v770, 0.0
          %v853 = vmax.f32 %v775, 0.0
          %v854 = vmax.f32 %v780, 0.0
          %v855 = vmax.f32 %v785, 0.0
          %v856 = vmax.f32 %v790, 0.0
          %v857 = vmax.f32 %v795, 0.0
          %v858 = vmax.f32 %v800, 0.0
          %v859 = vmax.f32 %v805, 0.0
          %v860 = vmax.f32 %v810, 0.0
          %v861 = vmax.f32 %v815, 0.0
          %v862 = vmax.f32 %v820, 0.0
          %v863 = vmax.f32 %v825, 0.0
          %v864 = vmax.f32 %v830, 0.0
          %v865 = vmax.f32 %v833, %v841
          %v866 = vmax.f32 %v834, %v842
          %v867 = vmax.f32 %v835, %v843
          %v868 = vmax.f32 %v836, %v844
          %v869 = vmax.f32 %v837, %v845
          %v870 = vmax.f32 %v838, %v846
          %v871 = vmax.f32 %v839, %v847
          %v872 = vmax.f32 %v840, %v848
          %v873 = vmax.f32 %v849, %v857
          %v874 = vmax.f32 %v850, %v858
          %v875 = vmax.f32 %v851, %v859
          %v876 = vmax.f32 %v852, %v860
          %v877 = vmax.f32 %v853, %v861
          %v878 = vmax.f32 %v854, %v862
          %v879 = vmax.f32 %v855, %v863
          %v880 = vmax.f32 %v856, %v864
          %881 = vst.msk [vmem:[#allocation4] sm:$0xff] %vm332, %v865
          %882 = vst.msk [vmem:[#allocation4 + $0x8] sm:$0xff] %vm332, %v866
          %883 = vst.msk [vmem:[#allocation4 + $0x10] sm:$0xff] %vm332, %v867
          %884 = vst.msk [vmem:[#allocation4 + $0x18] sm:$0xff] %vm332, %v868
          %885 = vst.msk [vmem:[#allocation4 + $0x20] sm:$0xff] %vm332, %v869
          %886 = vst.msk [vmem:[#allocation4 + $0x28] sm:$0xff] %vm332, %v870
          %887 = vst.msk [vmem:[#allocation4 + $0x30] sm:$0xff] %vm332, %v871
          %888 = vst.msk [vmem:[#allocation4 + $0x38] sm:$0xff] %vm332, %v872
          %889 = vst.msk [vmem:[#allocation4 + $0x40] sm:$0xff] %vm332, %v873
          %890 = vst.msk [vmem:[#allocation4 + $0x48] sm:$0xff] %vm332, %v874
          %891 = vst.msk [vmem:[#allocation4 + $0x50] sm:$0xff] %vm332, %v875
          %892 = vst.msk [vmem:[#allocation4 + $0x58] sm:$0xff] %vm332, %v876
          %893 = vst.msk [vmem:[#allocation4 + $0x60] sm:$0xff] %vm332, %v877
          %894 = vst.msk [vmem:[#allocation4 + $0x68] sm:$0xff] %vm332, %v878
          %895 = vst.msk [vmem:[#allocation4 + $0x70] sm:$0xff] %vm332, %v879
          %896 = vst.msk [vmem:[#allocation4 + $0x78] sm:$0xff] %vm332, %v880
          %v897 = vld [vmem:[#allocation4] ss:$2 sm:$0xff]
          %s898 = scalar_lea.vmem [#allocation4], 16
          %v899 = vld [vmem:[%s898] ss:$2 sm:$0xff]
          %s900 = scalar_lea.vmem [#allocation4], 32
          %v901 = vld [vmem:[%s900] ss:$2 sm:$0xff]
          %s902 = scalar_lea.vmem [#allocation4], 48
          %v903 = vld [vmem:[%s902] ss:$2 sm:$0xff]
          %s904 = scalar_lea.vmem [#allocation4], 64
          %v905 = vld [vmem:[%s904] ss:$2 sm:$0xff]
          %s906 = scalar_lea.vmem [#allocation4], 80
          %v907 = vld [vmem:[%s906] ss:$2 sm:$0xff]
          %s908 = scalar_lea.vmem [#allocation4], 96
          %v909 = vld [vmem:[%s908] ss:$2 sm:$0xff]
          %s910 = scalar_lea.vmem [#allocation4], 112
          %v911 = vld [vmem:[%s910] ss:$2 sm:$0xff]
          %s912 = scalar_lea.vmem [#allocation4], 1
          %v913 = vld [vmem:[%s912] ss:$2 sm:$0xff]
          %s914 = scalar_lea.vmem [#allocation4], 17
          %v915 = vld [vmem:[%s914] ss:$2 sm:$0xff]
          %s916 = scalar_lea.vmem [#allocation4], 33
          %v917 = vld [vmem:[%s916] ss:$2 sm:$0xff]
          %s918 = scalar_lea.vmem [#allocation4], 49
          %v919 = vld [vmem:[%s918] ss:$2 sm:$0xff]
          %s920 = scalar_lea.vmem [#allocation4], 65
          %v921 = vld [vmem:[%s920] ss:$2 sm:$0xff]
          %s922 = scalar_lea.vmem [#allocation4], 81
          %v923 = vld [vmem:[%s922] ss:$2 sm:$0xff]
          %s924 = scalar_lea.vmem [#allocation4], 97
          %v925 = vld [vmem:[%s924] ss:$2 sm:$0xff]
          %s926 = scalar_lea.vmem [#allocation4], 113
          %v927 = vld [vmem:[%s926] ss:$2 sm:$0xff]
          %v928 = vmax.f32 %v897, %v913
          %v929 = vmax.f32 %v899, %v915
          %v930 = vmax.f32 %v901, %v917
          %v931 = vmax.f32 %v903, %v919
          %v932 = vmax.f32 %v905, %v921
          %v933 = vmax.f32 %v907, %v923
          %v934 = vmax.f32 %v909, %v925
          %v935 = vmax.f32 %v911, %v927
          %s936 = smul.u32 %s467, 2
          %s937 = sadd.s32 %s936, 1
          %s938 = smul.u32 %s937, 48
          %s939 = scalar_lea.vmem [#allocation2], %s938
          %940 = vst.msk [vmem:[%s939 + $0x8] sm:$0xff] %vm332, %v928
          %941 = vst.msk [vmem:[%s939 + $0x10] sm:$0xff] %vm332, %v929
          %942 = vst.msk [vmem:[%s939 + $0x18] sm:$0xff] %vm332, %v930
          %943 = vst.msk [vmem:[%s939 + $0x20] sm:$0xff] %vm332, %v931
          %944 = vst.msk [vmem:[%s939 + $0x38] sm:$0xff] %vm332, %v932
          %945 = vst.msk [vmem:[%s939 + $0x40] sm:$0xff] %vm332, %v933
          %946 = vst.msk [vmem:[%s939 + $0x48] sm:$0xff] %vm332, %v934
          %947 = vst.msk [vmem:[%s939 + $0x50] sm:$0xff] %vm332, %v935
        $region69: #{genki_forward.2} parent=47 // loop_footer
          %s471 = sadd.s32 1, %s467
        $region70: #{genki_forward.2} parent=47 // loop_footer_branch
          %466 = sbr.rel target = $region66
        $region71: #{genki_forward.2} parent=47 // loop_exit
          _
        loop: start=0, step=1, limit=8
        $region72: #{genki_forward.2} parent=47 // loop_pre_header
          _
        $region73: #{genki_forward.2} parent=47 // loop_header
          %s949 = sphi 0, %s953
          %p950 = scmp.ge.s32.totalorder %s949, 8
        $region74: #{genki_forward.2} parent=47 // loop_header_branch
          %952 = sbr.rel (%p950) target = $region78
        $region75: #{genki_forward.2} parent=47 // loop_body
          %s954 = smul.u32 %s949, 4
          %s955 = smul.u32 %s954, 48
          %s956 = scalar_lea.vmem [#allocation2], %s955
          %v957 = vld [vmem:[%s956 + $0x7] sm:$0xff]
          %v958 = vld [vmem:[%s956 + $0xf] sm:$0xff]
          %v959 = vld [vmem:[%s956 + $0x17] sm:$0xff]
          %v960 = vld [vmem:[%s956 + $0x1f] sm:$0xff]
          %v961 = vld [vmem:[%s956 + $0x37] sm:$0xff]
          %v962 = vld [vmem:[%s956 + $0x3f] sm:$0xff]
          %v963 = vld [vmem:[%s956 + $0x47] sm:$0xff]
          %v964 = vld [vmem:[%s956 + $0x4f] sm:$0xff]
          %v965 = vld [vmem:[%s956 + $0x67] sm:$0xff]
          %v966 = vld [vmem:[%s956 + $0x6f] sm:$0xff]
          %v967 = vld [vmem:[%s956 + $0x77] sm:$0xff]
          %v968 = vld [vmem:[%s956 + $0x7f] sm:$0xff]
          %v969 = vld [vmem:[%s956 + $0x97] sm:$0xff]
          %v970 = vld [vmem:[%s956 + $0x9f] sm:$0xff]
          %v971 = vld [vmem:[%s956 + $0xa7] sm:$0xff]
          %v972 = vld [vmem:[%s956 + $0xaf] sm:$0xff]
          %v973 = vld [vmem:[#allocation9] sm:$0xff]
          %v974 = vld [vmem:[#allocation9 + $0x8] sm:$0xff]
          %v975 = vld [vmem:[#allocation9 + $0x10] sm:$0xff]
          %v976 = vld [vmem:[#allocation9 + $0x18] sm:$0xff]
          %v977 = vld [vmem:[%s956 + $0x8] sm:$0xff]
          %v978 = vld [vmem:[%s956 + $0x10] sm:$0xff]
          %v979 = vld [vmem:[%s956 + $0x18] sm:$0xff]
          %v980 = vld [vmem:[%s956 + $0x20] sm:$0xff]
          %v981 = vld [vmem:[%s956 + $0x38] sm:$0xff]
          %v982 = vld [vmem:[%s956 + $0x40] sm:$0xff]
          %v983 = vld [vmem:[%s956 + $0x48] sm:$0xff]
          %v984 = vld [vmem:[%s956 + $0x50] sm:$0xff]
          %v985 = vld [vmem:[%s956 + $0x68] sm:$0xff]
          %v986 = vld [vmem:[%s956 + $0x70] sm:$0xff]
          %v987 = vld [vmem:[%s956 + $0x78] sm:$0xff]
          %v988 = vld [vmem:[%s956 + $0x80] sm:$0xff]
          %v989 = vld [vmem:[%s956 + $0x98] sm:$0xff]
          %v990 = vld [vmem:[%s956 + $0xa0] sm:$0xff]
          %v991 = vld [vmem:[%s956 + $0xa8] sm:$0xff]
          %v992 = vld [vmem:[%s956 + $0xb0] sm:$0xff]
          %v993 = vld [vmem:[#allocation9 + $0x20] sm:$0xff]
          %v994 = vld [vmem:[#allocation9 + $0x28] sm:$0xff]
          %v995 = vld [vmem:[#allocation9 + $0x30] sm:$0xff]
          %v996 = vld [vmem:[#allocation9 + $0x38] sm:$0xff]
          %v998 = vsel %vm332, %v977, 0
          %v1001 = vsel %vm332, %v978, 0
          %v1004 = vsel %vm332, %v979, 0
          %v1007 = vsel %vm332, %v980, 0
          %v1010 = vsel %vm332, %v981, 0
          %v1013 = vsel %vm332, %v982, 0
          %v1016 = vsel %vm332, %v983, 0
          %v1019 = vsel %vm332, %v984, 0
          %v1022 = vsel %vm332, %v985, 0
          %v1025 = vsel %vm332, %v986, 0
          %v1028 = vsel %vm332, %v987, 0
          %v1031 = vsel %vm332, %v988, 0
          %v1034 = vsel %vm332, %v989, 0
          %v1037 = vsel %vm332, %v990, 0
          %v1040 = vsel %vm332, %v991, 0
          %v1043 = vsel %vm332, %v992, 0
          %1045 = vmatprep.subr.mxu0 0.0
          %1046 = vmatpush1.msra.mxu0 %v993
          %1047 = vmatprep.subr.mxu0 0.0
          %1048 = vmatpush1.msra.mxu0 %v994
          %1049 = vmatprep.subr.mxu0 0.0
          %1050 = vmatpush1.msra.mxu0 %v995
          %1051 = vmatprep.subr.mxu0 0.0
          %1052 = vmatpush1.msra.mxu0 %v996
          %1053 = vmatprep.subr.mxu0 0.0
          %1054 = vmatpush1.msra.mxu0 0.0
          %1055 = vmatprep.subr.mxu0 0.0
          %1056 = vmatpush1.msra.mxu0 0.0
          %1057 = vmatprep.subr.mxu0 0.0
          %1058 = vmatpush1.msra.mxu0 0.0
          %1059 = vmatprep.subr.mxu0 0.0
          %1060 = vmatpush1.msra.mxu0 0.0
          %1061 = vmatprep.subr.mxu0 0.0
          %1062 = vmatpush1.msra.mxu0 0.0
          %1063 = vmatprep.subr.mxu0 0.0
          %1064 = vmatpush1.msra.mxu0 0.0
          %1065 = vmatprep.subr.mxu0 0.0
          %1066 = vmatpush1.msra.mxu0 0.0
          %1067 = vmatprep.subr.mxu0 0.0
          %1068 = vmatpush1.msra.mxu0 0.0
          %1069 = vmatprep.subr.mxu0 0.0
          %1070 = vmatpush1.msra.mxu0 0.0
          %1071 = vmatprep.subr.mxu0 0.0
          %1072 = vmatpush1.msra.mxu0 0.0
          %1073 = vmatprep.subr.mxu0 0.0
          %1074 = vmatpush1.msra.mxu0 0.0
          %1075 = vmatprep.subr.mxu0 0.0
          %1076 = vmatpush1.msra.mxu0 0.0
          %1077 = vmatprep.subr.mxu0 0.0
          %1078 = vmatpush1.msra.mxu0 0.0
          %1079 = vmatprep.subr.mxu0 0.0
          %1080 = vmatpush1.msra.mxu0 0.0
          %1081 = vmatprep.subr.mxu0 0.0
          %1082 = vmatpush1.msra.mxu0 0.0
          %1083 = vmatprep.subr.mxu0 0.0
          %1084 = vmatpush1.msra.mxu0 0.0
          %1085 = vmatprep.subr.mxu0 0.0
          %1086 = vmatpush1.msra.mxu0 0.0
          %1087 = vmatprep.subr.mxu0 0.0
          %1088 = vmatpush1.msra.mxu0 0.0
          %1089 = vmatprep.subr.mxu0 0.0
          %1090 = vmatpush1.msra.mxu0 0.0
          %1091 = vmatprep.subr.mxu0 0.0
          %1092 = vmatpush1.msra.mxu0 0.0
          %1093 = vmatprep.subr.mxu0 0.0
          %1094 = vmatpush1.msra.mxu0 0.0
          %1095 = vmatprep.subr.mxu0 0.0
          %1096 = vmatpush1.msra.mxu0 0.0
          %1097 = vmatprep.subr.mxu0 0.0
          %1098 = vmatpush1.msra.mxu0 0.0
          %1099 = vmatprep.subr.mxu0 0.0
          %1100 = vmatpush1.msra.mxu0 0.0
          %1101 = vmatprep.subr.mxu0 0.0
          %1102 = vmatpush1.msra.mxu0 0.0
          %1103 = vmatprep.subr.mxu0 0.0
          %1104 = vmatpush1.msra.mxu0 0.0
          %1105 = vmatprep.subr.mxu0 0.0
          %1106 = vmatpush1.msra.mxu0 0.0
          %1107 = vmatprep.subr.mxu0 0.0
          %1108 = vmatpush1.msra.mxu0 0.0
          %1109 = vmatprep.mubr.f32.mxu0 0.0
          %1110 = vmatmul.mubr.f32.gmra.mrb[0].mxu0 %v998
          %v1111 = vpop.f32.mrb[0].mxu0
          %v1112 = vadd.f32 0.0, %v1111
          %v1113 = vpop.f32.mrb[0].mxu0
          %1114 = vmatprep.mubr.f32.mxu0 0.0
          %1115 = vmatmul.mubr.f32.gmra.mrb[0].mxu0 %v1001
          %v1116 = vpop.f32.mrb[0].mxu0
          %v1117 = vadd.f32 0.0, %v1116
          %v1118 = vpop.f32.mrb[0].mxu0
          %1119 = vmatprep.mubr.f32.mxu0 0.0
          %1120 = vmatmul.mubr.f32.gmra.mrb[0].mxu0 %v1004
          %v1121 = vpop.f32.mrb[0].mxu0
          %v1122 = vadd.f32 0.0, %v1121
          %v1123 = vpop.f32.mrb[0].mxu0
          %1124 = vmatprep.mubr.f32.mxu0 0.0
          %1125 = vmatmul.mubr.f32.gmra.mrb[0].mxu0 %v1007
          %v1126 = vpop.f32.mrb[0].mxu0
          %v1127 = vadd.f32 0.0, %v1126
          %v1128 = vpop.f32.mrb[0].mxu0
          %1129 = vmatprep.mubr.f32.mxu0 0.0
          %1130 = vmatmul.mubr.f32.gmra.mrb[0].mxu0 %v1010
          %v1131 = vpop.f32.mrb[0].mxu0
          %v1132 = vadd.f32 0.0, %v1131
          %v1133 = vpop.f32.mrb[0].mxu0
          %1134 = vmatprep.mubr.f32.mxu0 0.0
          %1135 = vmatmul.mubr.f32.gmra.mrb[0].mxu0 %v1013
          %v1136 = vpop.f32.mrb[0].mxu0
          %v1137 = vadd.f32 0.0, %v1136
          %v1138 = vpop.f32.mrb[0].mxu0
          %1139 = vmatprep.mubr.f32.mxu0 0.0
          %1140 = vmatmul.mubr.f32.gmra.mrb[0].mxu0 %v1016
          %v1141 = vpop.f32.mrb[0].mxu0
          %v1142 = vadd.f32 0.0, %v1141
          %v1143 = vpop.f32.mrb[0].mxu0
          %1144 = vmatprep.mubr.f32.mxu0 0.0
          %1145 = vmatmul.mubr.f32.gmra.mrb[0].mxu0 %v1019
          %v1146 = vpop.f32.mrb[0].mxu0
          %v1147 = vadd.f32 0.0, %v1146
          %v1148 = vpop.f32.mrb[0].mxu0
          %1149 = vmatprep.mubr.f32.mxu0 0.0
          %1150 = vmatmul.mubr.f32.gmra.mrb[0].mxu0 %v1022
          %v1151 = vpop.f32.mrb[0].mxu0
          %v1152 = vadd.f32 0.0, %v1151
          %v1153 = vpop.f32.mrb[0].mxu0
          %1154 = vmatprep.mubr.f32.mxu0 0.0
          %1155 = vmatmul.mubr.f32.gmra.mrb[0].mxu0 %v1025
          %v1156 = vpop.f32.mrb[0].mxu0
          %v1157 = vadd.f32 0.0, %v1156
          %v1158 = vpop.f32.mrb[0].mxu0
          %1159 = vmatprep.mubr.f32.mxu0 0.0
          %1160 = vmatmul.mubr.f32.gmra.mrb[0].mxu0 %v1028
          %v1161 = vpop.f32.mrb[0].mxu0
          %v1162 = vadd.f32 0.0, %v1161
          %v1163 = vpop.f32.mrb[0].mxu0
          %1164 = vmatprep.mubr.f32.mxu0 0.0
          %1165 = vmatmul.mubr.f32.gmra.mrb[0].mxu0 %v1031
          %v1166 = vpop.f32.mrb[0].mxu0
          %v1167 = vadd.f32 0.0, %v1166
          %v1168 = vpop.f32.mrb[0].mxu0
          %1169 = vmatprep.mubr.f32.mxu0 0.0
          %1170 = vmatmul.mubr.f32.gmra.mrb[0].mxu0 %v1034
          %v1171 = vpop.f32.mrb[0].mxu0
          %v1172 = vadd.f32 0.0, %v1171
          %v1173 = vpop.f32.mrb[0].mxu0
          %1174 = vmatprep.mubr.f32.mxu0 0.0
          %1175 = vmatmul.mubr.f32.gmra.mrb[0].mxu0 %v1037
          %v1176 = vpop.f32.mrb[0].mxu0
          %v1177 = vadd.f32 0.0, %v1176
          %v1178 = vpop.f32.mrb[0].mxu0
          %1179 = vmatprep.mubr.f32.mxu0 0.0
          %1180 = vmatmul.mubr.f32.gmra.mrb[0].mxu0 %v1040
          %v1181 = vpop.f32.mrb[0].mxu0
          %v1182 = vadd.f32 0.0, %v1181
          %v1183 = vpop.f32.mrb[0].mxu0
          %1184 = vmatprep.mubr.f32.mxu0 0.0
          %1185 = vmatmul.mubr.f32.gmra.mrb[0].mxu0 %v1043
          %v1186 = vpop.f32.mrb[0].mxu0
          %v1187 = vadd.f32 0.0, %v1186
          %v1188 = vpop.f32.mrb[0].mxu0
          %1189 = vdwg.mxu0
          %v1191 = vsel %vm332, %v957, 0
          %v1194 = vsel %vm332, %v958, 0
          %v1197 = vsel %vm332, %v959, 0
          %v1200 = vsel %vm332, %v960, 0
          %v1203 = vsel %vm332, %v961, 0
          %v1206 = vsel %vm332, %v962, 0
          %v1209 = vsel %vm332, %v963, 0
          %v1212 = vsel %vm332, %v964, 0
          %v1215 = vsel %vm332, %v965, 0
          %v1218 = vsel %vm332, %v966, 0
          %v1221 = vsel %vm332, %v967, 0
          %v1224 = vsel %vm332, %v968, 0
          %v1227 = vsel %vm332, %v969, 0
          %v1230 = vsel %vm332, %v970, 0
          %v1233 = vsel %vm332, %v971, 0
          %v1236 = vsel %vm332, %v972, 0
          %1238 = vmatprep.subr.mxu0 0.0
          %1239 = vmatpush1.msra.mxu0 %v973
          %1240 = vmatprep.subr.mxu0 0.0
          %1241 = vmatpush1.msra.mxu0 %v974
          %1242 = vmatprep.subr.mxu0 0.0
          %1243 = vmatpush1.msra.mxu0 %v975
          %1244 = vmatprep.subr.mxu0 0.0
          %1245 = vmatpush1.msra.mxu0 %v976
          %1246 = vmatprep.subr.mxu0 0.0
          %1247 = vmatpush1.msra.mxu0 0.0
          %1248 = vmatprep.subr.mxu0 0.0
          %1249 = vmatpush1.msra.mxu0 0.0
          %1250 = vmatprep.subr.mxu0 0.0
          %1251 = vmatpush1.msra.mxu0 0.0
          %1252 = vmatprep.subr.mxu0 0.0
          %1253 = vmatpush1.msra.mxu0 0.0
          %1254 = vmatprep.subr.mxu0 0.0
          %1255 = vmatpush1.msra.mxu0 0.0
          %1256 = vmatprep.subr.mxu0 0.0
          %1257 = vmatpush1.msra.mxu0 0.0
          %1258 = vmatprep.subr.mxu0 0.0
          %1259 = vmatpush1.msra.mxu0 0.0
          %1260 = vmatprep.subr.mxu0 0.0
          %1261 = vmatpush1.msra.mxu0 0.0
          %1262 = vmatprep.subr.mxu0 0.0
          %1263 = vmatpush1.msra.mxu0 0.0
          %1264 = vmatprep.subr.mxu0 0.0
          %1265 = vmatpush1.msra.mxu0 0.0
          %1266 = vmatprep.subr.mxu0 0.0
          %1267 = vmatpush1.msra.mxu0 0.0
          %1268 = vmatprep.subr.mxu0 0.0
          %1269 = vmatpush1.msra.mxu0 0.0
          %1270 = vmatprep.subr.mxu0 0.0
          %1271 = vmatpush1.msra.mxu0 0.0
          %1272 = vmatprep.subr.mxu0 0.0
          %1273 = vmatpush1.msra.mxu0 0.0
          %1274 = vmatprep.subr.mxu0 0.0
          %1275 = vmatpush1.msra.mxu0 0.0
          %1276 = vmatprep.subr.mxu0 0.0
          %1277 = vmatpush1.msra.mxu0 0.0
          %1278 = vmatprep.subr.mxu0 0.0
          %1279 = vmatpush1.msra.mxu0 0.0
          %1280 = vmatprep.subr.mxu0 0.0
          %1281 = vmatpush1.msra.mxu0 0.0
          %1282 = vmatprep.subr.mxu0 0.0
          %1283 = vmatpush1.msra.mxu0 0.0
          %1284 = vmatprep.subr.mxu0 0.0
          %1285 = vmatpush1.msra.mxu0 0.0
          %1286 = vmatprep.subr.mxu0 0.0
          %1287 = vmatpush1.msra.mxu0 0.0
          %1288 = vmatprep.subr.mxu0 0.0
          %1289 = vmatpush1.msra.mxu0 0.0
          %1290 = vmatprep.subr.mxu0 0.0
          %1291 = vmatpush1.msra.mxu0 0.0
          %1292 = vmatprep.subr.mxu0 0.0
          %1293 = vmatpush1.msra.mxu0 0.0
          %1294 = vmatprep.subr.mxu0 0.0
          %1295 = vmatpush1.msra.mxu0 0.0
          %1296 = vmatprep.subr.mxu0 0.0
          %1297 = vmatpush1.msra.mxu0 0.0
          %1298 = vmatprep.subr.mxu0 0.0
          %1299 = vmatpush1.msra.mxu0 0.0
          %1300 = vmatprep.subr.mxu0 0.0
          %1301 = vmatpush1.msra.mxu0 0.0
          %1302 = vmatprep.mubr.f32.mxu0 0.0
          %1303 = vmatmul.mubr.f32.gmra.mrb[0].mxu0 %v1191
          %v1304 = vpop.f32.mrb[0].mxu0
          %v1305 = vadd.f32 %v1112, %v1304
          %v1306 = vpop.f32.mrb[0].mxu0
          %1307 = vmatprep.mubr.f32.mxu0 0.0
          %1308 = vmatmul.mubr.f32.gmra.mrb[0].mxu0 %v1194
          %v1309 = vpop.f32.mrb[0].mxu0
          %v1310 = vadd.f32 %v1117, %v1309
          %v1311 = vpop.f32.mrb[0].mxu0
          %1312 = vmatprep.mubr.f32.mxu0 0.0
          %1313 = vmatmul.mubr.f32.gmra.mrb[0].mxu0 %v1197
          %v1314 = vpop.f32.mrb[0].mxu0
          %v1315 = vadd.f32 %v1122, %v1314
          %v1316 = vpop.f32.mrb[0].mxu0
          %1317 = vmatprep.mubr.f32.mxu0 0.0
          %1318 = vmatmul.mubr.f32.gmra.mrb[0].mxu0 %v1200
          %v1319 = vpop.f32.mrb[0].mxu0
          %v1320 = vadd.f32 %v1127, %v1319
          %v1321 = vpop.f32.mrb[0].mxu0
          %1322 = vmatprep.mubr.f32.mxu0 0.0
          %1323 = vmatmul.mubr.f32.gmra.mrb[0].mxu0 %v1203
          %v1324 = vpop.f32.mrb[0].mxu0
          %v1325 = vadd.f32 %v1132, %v1324
          %v1326 = vpop.f32.mrb[0].mxu0
          %1327 = vmatprep.mubr.f32.mxu0 0.0
          %1328 = vmatmul.mubr.f32.gmra.mrb[0].mxu0 %v1206
          %v1329 = vpop.f32.mrb[0].mxu0
          %v1330 = vadd.f32 %v1137, %v1329
          %v1331 = vpop.f32.mrb[0].mxu0
          %1332 = vmatprep.mubr.f32.mxu0 0.0
          %1333 = vmatmul.mubr.f32.gmra.mrb[0].mxu0 %v1209
          %v1334 = vpop.f32.mrb[0].mxu0
          %v1335 = vadd.f32 %v1142, %v1334
          %v1336 = vpop.f32.mrb[0].mxu0
          %1337 = vmatprep.mubr.f32.mxu0 0.0
          %1338 = vmatmul.mubr.f32.gmra.mrb[0].mxu0 %v1212
          %v1339 = vpop.f32.mrb[0].mxu0
          %v1340 = vadd.f32 %v1147, %v1339
          %v1341 = vpop.f32.mrb[0].mxu0
          %1342 = vmatprep.mubr.f32.mxu0 0.0
          %1343 = vmatmul.mubr.f32.gmra.mrb[0].mxu0 %v1215
          %v1344 = vpop.f32.mrb[0].mxu0
          %v1345 = vadd.f32 %v1152, %v1344
          %v1346 = vpop.f32.mrb[0].mxu0
          %1347 = vmatprep.mubr.f32.mxu0 0.0
          %1348 = vmatmul.mubr.f32.gmra.mrb[0].mxu0 %v1218
          %v1349 = vpop.f32.mrb[0].mxu0
          %v1350 = vadd.f32 %v1157, %v1349
          %v1351 = vpop.f32.mrb[0].mxu0
          %1352 = vmatprep.mubr.f32.mxu0 0.0
          %1353 = vmatmul.mubr.f32.gmra.mrb[0].mxu0 %v1221
          %v1354 = vpop.f32.mrb[0].mxu0
          %v1355 = vadd.f32 %v1162, %v1354
          %v1356 = vpop.f32.mrb[0].mxu0
          %1357 = vmatprep.mubr.f32.mxu0 0.0
          %1358 = vmatmul.mubr.f32.gmra.mrb[0].mxu0 %v1224
          %v1359 = vpop.f32.mrb[0].mxu0
          %v1360 = vadd.f32 %v1167, %v1359
          %v1361 = vpop.f32.mrb[0].mxu0
          %1362 = vmatprep.mubr.f32.mxu0 0.0
          %1363 = vmatmul.mubr.f32.gmra.mrb[0].mxu0 %v1227
          %v1364 = vpop.f32.mrb[0].mxu0
          %v1365 = vadd.f32 %v1172, %v1364
          %v1366 = vpop.f32.mrb[0].mxu0
          %1367 = vmatprep.mubr.f32.mxu0 0.0
          %1368 = vmatmul.mubr.f32.gmra.mrb[0].mxu0 %v1230
          %v1369 = vpop.f32.mrb[0].mxu0
          %v1370 = vadd.f32 %v1177, %v1369
          %v1371 = vpop.f32.mrb[0].mxu0
          %1372 = vmatprep.mubr.f32.mxu0 0.0
          %1373 = vmatmul.mubr.f32.gmra.mrb[0].mxu0 %v1233
          %v1374 = vpop.f32.mrb[0].mxu0
          %v1375 = vadd.f32 %v1182, %v1374
          %v1376 = vpop.f32.mrb[0].mxu0
          %1377 = vmatprep.mubr.f32.mxu0 0.0
          %1378 = vmatmul.mubr.f32.gmra.mrb[0].mxu0 %v1236
          %v1379 = vpop.f32.mrb[0].mxu0
          %v1380 = vadd.f32 %v1187, %v1379
          %v1381 = vpop.f32.mrb[0].mxu0
          %1382 = vdwg.mxu0
          %v1383 = vld [vmem:[%s956 + $0x9] sm:$0xff]
          %v1384 = vld [vmem:[%s956 + $0x11] sm:$0xff]
          %v1385 = vld [vmem:[%s956 + $0x19] sm:$0xff]
          %v1386 = vld [vmem:[%s956 + $0x21] sm:$0xff]
          %v1387 = vld [vmem:[%s956 + $0x39] sm:$0xff]
          %v1388 = vld [vmem:[%s956 + $0x41] sm:$0xff]
          %v1389 = vld [vmem:[%s956 + $0x49] sm:$0xff]
          %v1390 = vld [vmem:[%s956 + $0x51] sm:$0xff]
          %v1391 = vld [vmem:[%s956 + $0x69] sm:$0xff]
          %v1392 = vld [vmem:[%s956 + $0x71] sm:$0xff]
          %v1393 = vld [vmem:[%s956 + $0x79] sm:$0xff]
          %v1394 = vld [vmem:[%s956 + $0x81] sm:$0xff]
          %v1395 = vld [vmem:[%s956 + $0x99] sm:$0xff]
          %v1396 = vld [vmem:[%s956 + $0xa1] sm:$0xff]
          %v1397 = vld [vmem:[%s956 + $0xa9] sm:$0xff]
          %v1398 = vld [vmem:[%s956 + $0xb1] sm:$0xff]
          %v1399 = vld [vmem:[#allocation9 + $0x40] sm:$0xff]
          %v1400 = vld [vmem:[#allocation9 + $0x48] sm:$0xff]
          %v1401 = vld [vmem:[#allocation9 + $0x50] sm:$0xff]
          %v1402 = vld [vmem:[#allocation9 + $0x58] sm:$0xff]
          %v1404 = vsel %vm332, %v1383, 0
          %v1407 = vsel %vm332, %v1384, 0
          %v1410 = vsel %vm332, %v1385, 0
          %v1413 = vsel %vm332, %v1386, 0
          %v1416 = vsel %vm332, %v1387, 0
          %v1419 = vsel %vm332, %v1388, 0
          %v1422 = vsel %vm332, %v1389, 0
          %v1425 = vsel %vm332, %v1390, 0
          %v1428 = vsel %vm332, %v1391, 0
          %v1431 = vsel %vm332, %v1392, 0
          %v1434 = vsel %vm332, %v1393, 0
          %v1437 = vsel %vm332, %v1394, 0
          %v1440 = vsel %vm332, %v1395, 0
          %v1443 = vsel %vm332, %v1396, 0
          %v1446 = vsel %vm332, %v1397, 0
          %v1449 = vsel %vm332, %v1398, 0
          %1451 = vmatprep.subr.mxu0 0.0
          %1452 = vmatpush1.msra.mxu0 %v1399
          %1453 = vmatprep.subr.mxu0 0.0
          %1454 = vmatpush1.msra.mxu0 %v1400
          %1455 = vmatprep.subr.mxu0 0.0
          %1456 = vmatpush1.msra.mxu0 %v1401
          %1457 = vmatprep.subr.mxu0 0.0
          %1458 = vmatpush1.msra.mxu0 %v1402
          %1459 = vmatprep.subr.mxu0 0.0
          %1460 = vmatpush1.msra.mxu0 0.0
          %1461 = vmatprep.subr.mxu0 0.0
          %1462 = vmatpush1.msra.mxu0 0.0
          %1463 = vmatprep.subr.mxu0 0.0
          %1464 = vmatpush1.msra.mxu0 0.0
          %1465 = vmatprep.subr.mxu0 0.0
          %1466 = vmatpush1.msra.mxu0 0.0
          %1467 = vmatprep.subr.mxu0 0.0
          %1468 = vmatpush1.msra.mxu0 0.0
          %1469 = vmatprep.subr.mxu0 0.0
          %1470 = vmatpush1.msra.mxu0 0.0
          %1471 = vmatprep.subr.mxu0 0.0
          %1472 = vmatpush1.msra.mxu0 0.0
          %1473 = vmatprep.subr.mxu0 0.0
          %1474 = vmatpush1.msra.mxu0 0.0
          %1475 = vmatprep.subr.mxu0 0.0
          %1476 = vmatpush1.msra.mxu0 0.0
          %1477 = vmatprep.subr.mxu0 0.0
          %1478 = vmatpush1.msra.mxu0 0.0
          %1479 = vmatprep.subr.mxu0 0.0
          %1480 = vmatpush1.msra.mxu0 0.0
          %1481 = vmatprep.subr.mxu0 0.0
          %1482 = vmatpush1.msra.mxu0 0.0
          %1483 = vmatprep.subr.mxu0 0.0
          %1484 = vmatpush1.msra.mxu0 0.0
          %1485 = vmatprep.subr.mxu0 0.0
          %1486 = vmatpush1.msra.mxu0 0.0
          %1487 = vmatprep.subr.mxu0 0.0
          %1488 = vmatpush1.msra.mxu0 0.0
          %1489 = vmatprep.subr.mxu0 0.0
          %1490 = vmatpush1.msra.mxu0 0.0
          %1491 = vmatprep.subr.mxu0 0.0
          %1492 = vmatpush1.msra.mxu0 0.0
          %1493 = vmatprep.subr.mxu0 0.0
          %1494 = vmatpush1.msra.mxu0 0.0
          %1495 = vmatprep.subr.mxu0 0.0
          %1496 = vmatpush1.msra.mxu0 0.0
          %1497 = vmatprep.subr.mxu0 0.0
          %1498 = vmatpush1.msra.mxu0 0.0
          %1499 = vmatprep.subr.mxu0 0.0
          %1500 = vmatpush1.msra.mxu0 0.0
          %1501 = vmatprep.subr.mxu0 0.0
          %1502 = vmatpush1.msra.mxu0 0.0
          %1503 = vmatprep.subr.mxu0 0.0
          %1504 = vmatpush1.msra.mxu0 0.0
          %1505 = vmatprep.subr.mxu0 0.0
          %1506 = vmatpush1.msra.mxu0 0.0
          %1507 = vmatprep.subr.mxu0 0.0
          %1508 = vmatpush1.msra.mxu0 0.0
          %1509 = vmatprep.subr.mxu0 0.0
          %1510 = vmatpush1.msra.mxu0 0.0
          %1511 = vmatprep.subr.mxu0 0.0
          %1512 = vmatpush1.msra.mxu0 0.0
          %1513 = vmatprep.subr.mxu0 0.0
          %1514 = vmatpush1.msra.mxu0 0.0
          %1515 = vmatprep.mubr.f32.mxu0 0.0
          %1516 = vmatmul.mubr.f32.gmra.mrb[0].mxu0 %v1404
          %v1517 = vpop.f32.mrb[0].mxu0
          %v1518 = vadd.f32 0.0, %v1517
          %v1519 = vpop.f32.mrb[0].mxu0
          %1520 = vmatprep.mubr.f32.mxu0 0.0
          %1521 = vmatmul.mubr.f32.gmra.mrb[0].mxu0 %v1407
          %v1522 = vpop.f32.mrb[0].mxu0
          %v1523 = vadd.f32 0.0, %v1522
          %v1524 = vpop.f32.mrb[0].mxu0
          %1525 = vmatprep.mubr.f32.mxu0 0.0
          %1526 = vmatmul.mubr.f32.gmra.mrb[0].mxu0 %v1410
          %v1527 = vpop.f32.mrb[0].mxu0
          %v1528 = vadd.f32 0.0, %v1527
          %v1529 = vpop.f32.mrb[0].mxu0
          %1530 = vmatprep.mubr.f32.mxu0 0.0
          %1531 = vmatmul.mubr.f32.gmra.mrb[0].mxu0 %v1413
          %v1532 = vpop.f32.mrb[0].mxu0
          %v1533 = vadd.f32 0.0, %v1532
          %v1534 = vpop.f32.mrb[0].mxu0
          %1535 = vmatprep.mubr.f32.mxu0 0.0
          %1536 = vmatmul.mubr.f32.gmra.mrb[0].mxu0 %v1416
          %v1537 = vpop.f32.mrb[0].mxu0
          %v1538 = vadd.f32 0.0, %v1537
          %v1539 = vpop.f32.mrb[0].mxu0
          %1540 = vmatprep.mubr.f32.mxu0 0.0
          %1541 = vmatmul.mubr.f32.gmra.mrb[0].mxu0 %v1419
          %v1542 = vpop.f32.mrb[0].mxu0
          %v1543 = vadd.f32 0.0, %v1542
          %v1544 = vpop.f32.mrb[0].mxu0
          %1545 = vmatprep.mubr.f32.mxu0 0.0
          %1546 = vmatmul.mubr.f32.gmra.mrb[0].mxu0 %v1422
          %v1547 = vpop.f32.mrb[0].mxu0
          %v1548 = vadd.f32 0.0, %v1547
          %v1549 = vpop.f32.mrb[0].mxu0
          %1550 = vmatprep.mubr.f32.mxu0 0.0
          %1551 = vmatmul.mubr.f32.gmra.mrb[0].mxu0 %v1425
          %v1552 = vpop.f32.mrb[0].mxu0
          %v1553 = vadd.f32 0.0, %v1552
          %v1554 = vpop.f32.mrb[0].mxu0
          %1555 = vmatprep.mubr.f32.mxu0 0.0
          %1556 = vmatmul.mubr.f32.gmra.mrb[0].mxu0 %v1428
          %v1557 = vpop.f32.mrb[0].mxu0
          %v1558 = vadd.f32 0.0, %v1557
          %v1559 = vpop.f32.mrb[0].mxu0
          %1560 = vmatprep.mubr.f32.mxu0 0.0
          %1561 = vmatmul.mubr.f32.gmra.mrb[0].mxu0 %v1431
          %v1562 = vpop.f32.mrb[0].mxu0
          %v1563 = vadd.f32 0.0, %v1562
          %v1564 = vpop.f32.mrb[0].mxu0
          %1565 = vmatprep.mubr.f32.mxu0 0.0
          %1566 = vmatmul.mubr.f32.gmra.mrb[0].mxu0 %v1434
          %v1567 = vpop.f32.mrb[0].mxu0
          %v1568 = vadd.f32 0.0, %v1567
          %v1569 = vpop.f32.mrb[0].mxu0
          %1570 = vmatprep.mubr.f32.mxu0 0.0
          %1571 = vmatmul.mubr.f32.gmra.mrb[0].mxu0 %v1437
          %v1572 = vpop.f32.mrb[0].mxu0
          %v1573 = vadd.f32 0.0, %v1572
          %v1574 = vpop.f32.mrb[0].mxu0
          %1575 = vmatprep.mubr.f32.mxu0 0.0
          %1576 = vmatmul.mubr.f32.gmra.mrb[0].mxu0 %v1440
          %v1577 = vpop.f32.mrb[0].mxu0
          %v1578 = vadd.f32 0.0, %v1577
          %v1579 = vpop.f32.mrb[0].mxu0
          %1580 = vmatprep.mubr.f32.mxu0 0.0
          %1581 = vmatmul.mubr.f32.gmra.mrb[0].mxu0 %v1443
          %v1582 = vpop.f32.mrb[0].mxu0
          %v1583 = vadd.f32 0.0, %v1582
          %v1584 = vpop.f32.mrb[0].mxu0
          %1585 = vmatprep.mubr.f32.mxu0 0.0
          %1586 = vmatmul.mubr.f32.gmra.mrb[0].mxu0 %v1446
          %v1587 = vpop.f32.mrb[0].mxu0
          %v1588 = vadd.f32 0.0, %v1587
          %v1589 = vpop.f32.mrb[0].mxu0
          %1590 = vmatprep.mubr.f32.mxu0 0.0
          %1591 = vmatmul.mubr.f32.gmra.mrb[0].mxu0 %v1449
          %v1592 = vpop.f32.mrb[0].mxu0
          %v1593 = vadd.f32 0.0, %v1592
          %v1594 = vpop.f32.mrb[0].mxu0
          %1595 = vdwg.mxu0
          %v1596 = vadd.f32 %v1305, %v1518
          %v1597 = vadd.f32 %v1310, %v1523
          %v1598 = vadd.f32 %v1315, %v1528
          %v1599 = vadd.f32 %v1320, %v1533
          %v1600 = vadd.f32 %v1325, %v1538
          %v1601 = vadd.f32 %v1330, %v1543
          %v1602 = vadd.f32 %v1335, %v1548
          %v1603 = vadd.f32 %v1340, %v1553
          %v1604 = vadd.f32 %v1345, %v1558
          %v1605 = vadd.f32 %v1350, %v1563
          %v1606 = vadd.f32 %v1355, %v1568
          %v1607 = vadd.f32 %v1360, %v1573
          %v1608 = vadd.f32 %v1365, %v1578
          %v1609 = vadd.f32 %v1370, %v1583
          %v1610 = vadd.f32 %v1375, %v1588
          %v1611 = vadd.f32 %v1380, %v1593
          %s1612 = sadd.s32 %s954, 1
          %s1613 = smul.u32 %s1612, 48
          %s1614 = scalar_lea.vmem [#allocation2], %s1613
          %v1615 = vld [vmem:[%s1614 + $0x7] sm:$0xff]
          %v1616 = vld [vmem:[%s1614 + $0xf] sm:$0xff]
          %v1617 = vld [vmem:[%s1614 + $0x17] sm:$0xff]
          %v1618 = vld [vmem:[%s1614 + $0x1f] sm:$0xff]
          %v1619 = vld [vmem:[%s1614 + $0x37] sm:$0xff]
          %v1620 = vld [vmem:[%s1614 + $0x3f] sm:$0xff]
          %v1621 = vld [vmem:[%s1614 + $0x47] sm:$0xff]
          %v1622 = vld [vmem:[%s1614 + $0x4f] sm:$0xff]
          %v1623 = vld [vmem:[%s1614 + $0x67] sm:$0xff]
          %v1624 = vld [vmem:[%s1614 + $0x6f] sm:$0xff]
          %v1625 = vld [vmem:[%s1614 + $0x77] sm:$0xff]
          %v1626 = vld [vmem:[%s1614 + $0x7f] sm:$0xff]
          %v1627 = vld [vmem:[%s1614 + $0x97] sm:$0xff]
          %v1628 = vld [vmem:[%s1614 + $0x9f] sm:$0xff]
          %v1629 = vld [vmem:[%s1614 + $0xa7] sm:$0xff]
          %v1630 = vld [vmem:[%s1614 + $0xaf] sm:$0xff]
          %v1631 = vld [vmem:[#allocation9 + $0x60] sm:$0xff]
          %v1632 = vld [vmem:[#allocation9 + $0x68] sm:$0xff]
          %v1633 = vld [vmem:[#allocation9 + $0x70] sm:$0xff]
          %v1634 = vld [vmem:[#allocation9 + $0x78] sm:$0xff]
          %v1636 = vsel %vm332, %v1615, 0
          %v1639 = vsel %vm332, %v1616, 0
          %v1642 = vsel %vm332, %v1617, 0
          %v1645 = vsel %vm332, %v1618, 0
          %v1648 = vsel %vm332, %v1619, 0
          %v1651 = vsel %vm332, %v1620, 0
          %v1654 = vsel %vm332, %v1621, 0
          %v1657 = vsel %vm332, %v1622, 0
          %v1660 = vsel %vm332, %v1623, 0
          %v1663 = vsel %vm332, %v1624, 0
          %v1666 = vsel %vm332, %v1625, 0
          %v1669 = vsel %vm332, %v1626, 0
          %v1672 = vsel %vm332, %v1627, 0
          %v1675 = vsel %vm332, %v1628, 0
          %v1678 = vsel %vm332, %v1629, 0
          %v1681 = vsel %vm332, %v1630, 0
          %1683 = vmatprep.subr.mxu0 0.0
          %1684 = vmatpush1.msra.mxu0 %v1631
          %1685 = vmatprep.subr.mxu0 0.0
          %1686 = vmatpush1.msra.mxu0 %v1632
          %1687 = vmatprep.subr.mxu0 0.0
          %1688 = vmatpush1.msra.mxu0 %v1633
          %1689 = vmatprep.subr.mxu0 0.0
          %1690 = vmatpush1.msra.mxu0 %v1634
          %1691 = vmatprep.subr.mxu0 0.0
          %1692 = vmatpush1.msra.mxu0 0.0
          %1693 = vmatprep.subr.mxu0 0.0
          %1694 = vmatpush1.msra.mxu0 0.0
          %1695 = vmatprep.subr.mxu0 0.0
          %1696 = vmatpush1.msra.mxu0 0.0
          %1697 = vmatprep.subr.mxu0 0.0
          %1698 = vmatpush1.msra.mxu0 0.0
          %1699 = vmatprep.subr.mxu0 0.0
          %1700 = vmatpush1.msra.mxu0 0.0
          %1701 = vmatprep.subr.mxu0 0.0
          %1702 = vmatpush1.msra.mxu0 0.0
          %1703 = vmatprep.subr.mxu0 0.0
          %1704 = vmatpush1.msra.mxu0 0.0
          %1705 = vmatprep.subr.mxu0 0.0
          %1706 = vmatpush1.msra.mxu0 0.0
          %1707 = vmatprep.subr.mxu0 0.0
          %1708 = vmatpush1.msra.mxu0 0.0
          %1709 = vmatprep.subr.mxu0 0.0
          %1710 = vmatpush1.msra.mxu0 0.0
          %1711 = vmatprep.subr.mxu0 0.0
          %1712 = vmatpush1.msra.mxu0 0.0
          %1713 = vmatprep.subr.mxu0 0.0
          %1714 = vmatpush1.msra.mxu0 0.0
          %1715 = vmatprep.subr.mxu0 0.0
          %1716 = vmatpush1.msra.mxu0 0.0
          %1717 = vmatprep.subr.mxu0 0.0
          %1718 = vmatpush1.msra.mxu0 0.0
          %1719 = vmatprep.subr.mxu0 0.0
          %1720 = vmatpush1.msra.mxu0 0.0
          %1721 = vmatprep.subr.mxu0 0.0
          %1722 = vmatpush1.msra.mxu0 0.0
          %1723 = vmatprep.subr.mxu0 0.0
          %1724 = vmatpush1.msra.mxu0 0.0
          %1725 = vmatprep.subr.mxu0 0.0
          %1726 = vmatpush1.msra.mxu0 0.0
          %1727 = vmatprep.subr.mxu0 0.0
          %1728 = vmatpush1.msra.mxu0 0.0
          %1729 = vmatprep.subr.mxu0 0.0
          %1730 = vmatpush1.msra.mxu0 0.0
          %1731 = vmatprep.subr.mxu0 0.0
          %1732 = vmatpush1.msra.mxu0 0.0
          %1733 = vmatprep.subr.mxu0 0.0
          %1734 = vmatpush1.msra.mxu0 0.0
          %1735 = vmatprep.subr.mxu0 0.0
          %1736 = vmatpush1.msra.mxu0 0.0
          %1737 = vmatprep.subr.mxu0 0.0
          %1738 = vmatpush1.msra.mxu0 0.0
          %1739 = vmatprep.subr.mxu0 0.0
          %1740 = vmatpush1.msra.mxu0 0.0
          %1741 = vmatprep.subr.mxu0 0.0
          %1742 = vmatpush1.msra.mxu0 0.0
          %1743 = vmatprep.subr.mxu0 0.0
          %1744 = vmatpush1.msra.mxu0 0.0
          %1745 = vmatprep.subr.mxu0 0.0
          %1746 = vmatpush1.msra.mxu0 0.0
          %1747 = vmatprep.mubr.f32.mxu0 0.0
          %1748 = vmatmul.mubr.f32.gmra.mrb[0].mxu0 %v1636
          %v1749 = vpop.f32.mrb[0].mxu0
          %v1750 = vadd.f32 0.0, %v1749
          %v1751 = vpop.f32.mrb[0].mxu0
          %1752 = vmatprep.mubr.f32.mxu0 0.0
          %1753 = vmatmul.mubr.f32.gmra.mrb[0].mxu0 %v1639
          %v1754 = vpop.f32.mrb[0].mxu0
          %v1755 = vadd.f32 0.0, %v1754
          %v1756 = vpop.f32.mrb[0].mxu0
          %1757 = vmatprep.mubr.f32.mxu0 0.0
          %1758 = vmatmul.mubr.f32.gmra.mrb[0].mxu0 %v1642
          %v1759 = vpop.f32.mrb[0].mxu0
          %v1760 = vadd.f32 0.0, %v1759
          %v1761 = vpop.f32.mrb[0].mxu0
          %1762 = vmatprep.mubr.f32.mxu0 0.0
          %1763 = vmatmul.mubr.f32.gmra.mrb[0].mxu0 %v1645
          %v1764 = vpop.f32.mrb[0].mxu0
          %v1765 = vadd.f32 0.0, %v1764
          %v1766 = vpop.f32.mrb[0].mxu0
          %1767 = vmatprep.mubr.f32.mxu0 0.0
          %1768 = vmatmul.mubr.f32.gmra.mrb[0].mxu0 %v1648
          %v1769 = vpop.f32.mrb[0].mxu0
          %v1770 = vadd.f32 0.0, %v1769
          %v1771 = vpop.f32.mrb[0].mxu0
          %1772 = vmatprep.mubr.f32.mxu0 0.0
          %1773 = vmatmul.mubr.f32.gmra.mrb[0].mxu0 %v1651
          %v1774 = vpop.f32.mrb[0].mxu0
          %v1775 = vadd.f32 0.0, %v1774
          %v1776 = vpop.f32.mrb[0].mxu0
          %1777 = vmatprep.mubr.f32.mxu0 0.0
          %1778 = vmatmul.mubr.f32.gmra.mrb[0].mxu0 %v1654
          %v1779 = vpop.f32.mrb[0].mxu0
          %v1780 = vadd.f32 0.0, %v1779
          %v1781 = vpop.f32.mrb[0].mxu0
          %1782 = vmatprep.mubr.f32.mxu0 0.0
          %1783 = vmatmul.mubr.f32.gmra.mrb[0].mxu0 %v1657
          %v1784 = vpop.f32.mrb[0].mxu0
          %v1785 = vadd.f32 0.0, %v1784
          %v1786 = vpop.f32.mrb[0].mxu0
          %1787 = vmatprep.mubr.f32.mxu0 0.0
          %1788 = vmatmul.mubr.f32.gmra.mrb[0].mxu0 %v1660
          %v1789 = vpop.f32.mrb[0].mxu0
          %v1790 = vadd.f32 0.0, %v1789
          %v1791 = vpop.f32.mrb[0].mxu0
          %1792 = vmatprep.mubr.f32.mxu0 0.0
          %1793 = vmatmul.mubr.f32.gmra.mrb[0].mxu0 %v1663
          %v1794 = vpop.f32.mrb[0].mxu0
          %v1795 = vadd.f32 0.0, %v1794
          %v1796 = vpop.f32.mrb[0].mxu0
          %1797 = vmatprep.mubr.f32.mxu0 0.0
          %1798 = vmatmul.mubr.f32.gmra.mrb[0].mxu0 %v1666
          %v1799 = vpop.f32.mrb[0].mxu0
          %v1800 = vadd.f32 0.0, %v1799
          %v1801 = vpop.f32.mrb[0].mxu0
          %1802 = vmatprep.mubr.f32.mxu0 0.0
          %1803 = vmatmul.mubr.f32.gmra.mrb[0].mxu0 %v1669
          %v1804 = vpop.f32.mrb[0].mxu0
          %v1805 = vadd.f32 0.0, %v1804
          %v1806 = vpop.f32.mrb[0].mxu0
          %1807 = vmatprep.mubr.f32.mxu0 0.0
          %1808 = vmatmul.mubr.f32.gmra.mrb[0].mxu0 %v1672
          %v1809 = vpop.f32.mrb[0].mxu0
          %v1810 = vadd.f32 0.0, %v1809
          %v1811 = vpop.f32.mrb[0].mxu0
          %1812 = vmatprep.mubr.f32.mxu0 0.0
          %1813 = vmatmul.mubr.f32.gmra.mrb[0].mxu0 %v1675
          %v1814 = vpop.f32.mrb[0].mxu0
          %v1815 = vadd.f32 0.0, %v1814
          %v1816 = vpop.f32.mrb[0].mxu0
          %1817 = vmatprep.mubr.f32.mxu0 0.0
          %1818 = vmatmul.mubr.f32.gmra.mrb[0].mxu0 %v1678
          %v1819 = vpop.f32.mrb[0].mxu0
          %v1820 = vadd.f32 0.0, %v1819
          %v1821 = vpop.f32.mrb[0].mxu0
          %1822 = vmatprep.mubr.f32.mxu0 0.0
          %1823 = vmatmul.mubr.f32.gmra.mrb[0].mxu0 %v1681
          %v1824 = vpop.f32.mrb[0].mxu0
          %v1825 = vadd.f32 0.0, %v1824
          %v1826 = vpop.f32.mrb[0].mxu0
          %1827 = vdwg.mxu0
          %v1828 = vadd.f32 %v1596, %v1750
          %v1829 = vadd.f32 %v1597, %v1755
          %v1830 = vadd.f32 %v1598, %v1760
          %v1831 = vadd.f32 %v1599, %v1765
          %v1832 = vadd.f32 %v1600, %v1770
          %v1833 = vadd.f32 %v1601, %v1775
          %v1834 = vadd.f32 %v1602, %v1780
          %v1835 = vadd.f32 %v1603, %v1785
          %v1836 = vadd.f32 %v1604, %v1790
          %v1837 = vadd.f32 %v1605, %v1795
          %v1838 = vadd.f32 %v1606, %v1800
          %v1839 = vadd.f32 %v1607, %v1805
          %v1840 = vadd.f32 %v1608, %v1810
          %v1841 = vadd.f32 %v1609, %v1815
          %v1842 = vadd.f32 %v1610, %v1820
          %v1843 = vadd.f32 %v1611, %v1825
          %v1844 = vld [vmem:[%s1614 + $0x8] sm:$0xff]
          %v1845 = vld [vmem:[%s1614 + $0x10] sm:$0xff]
          %v1846 = vld [vmem:[%s1614 + $0x18] sm:$0xff]
          %v1847 = vld [vmem:[%s1614 + $0x20] sm:$0xff]
          %v1848 = vld [vmem:[%s1614 + $0x38] sm:$0xff]
          %v1849 = vld [vmem:[%s1614 + $0x40] sm:$0xff]
          %v1850 = vld [vmem:[%s1614 + $0x48] sm:$0xff]
          %v1851 = vld [vmem:[%s1614 + $0x50] sm:$0xff]
          %v1852 = vld [vmem:[%s1614 + $0x68] sm:$0xff]
          %v1853 = vld [vmem:[%s1614 + $0x70] sm:$0xff]
          %v1854 = vld [vmem:[%s1614 + $0x78] sm:$0xff]
          %v1855 = vld [vmem:[%s1614 + $0x80] sm:$0xff]
          %v1856 = vld [vmem:[%s1614 + $0x98] sm:$0xff]
          %v1857 = vld [vmem:[%s1614 + $0xa0] sm:$0xff]
          %v1858 = vld [vmem:[%s1614 + $0xa8] sm:$0xff]
          %v1859 = vld [vmem:[%s1614 + $0xb0] sm:$0xff]
          %v1860 = vld [vmem:[#allocation9 + $0x80] sm:$0xff]
          %v1861 = vld [vmem:[#allocation9 + $0x88] sm:$0xff]
          %v1862 = vld [vmem:[#allocation9 + $0x90] sm:$0xff]
          %v1863 = vld [vmem:[#allocation9 + $0x98] sm:$0xff]
          %v1865 = vsel %vm332, %v1844, 0
          %v1868 = vsel %vm332, %v1845, 0
          %v1871 = vsel %vm332, %v1846, 0
          %v1874 = vsel %vm332, %v1847, 0
          %v1877 = vsel %vm332, %v1848, 0
          %v1880 = vsel %vm332, %v1849, 0
          %v1883 = vsel %vm332, %v1850, 0
          %v1886 = vsel %vm332, %v1851, 0
          %v1889 = vsel %vm332, %v1852, 0
          %v1892 = vsel %vm332, %v1853, 0
          %v1895 = vsel %vm332, %v1854, 0
          %v1898 = vsel %vm332, %v1855, 0
          %v1901 = vsel %vm332, %v1856, 0
          %v1904 = vsel %vm332, %v1857, 0
          %v1907 = vsel %vm332, %v1858, 0
          %v1910 = vsel %vm332, %v1859, 0
          %1912 = vmatprep.subr.mxu0 0.0
          %1913 = vmatpush1.msra.mxu0 %v1860
          %1914 = vmatprep.subr.mxu0 0.0
          %1915 = vmatpush1.msra.mxu0 %v1861
          %1916 = vmatprep.subr.mxu0 0.0
          %1917 = vmatpush1.msra.mxu0 %v1862
          %1918 = vmatprep.subr.mxu0 0.0
          %1919 = vmatpush1.msra.mxu0 %v1863
          %1920 = vmatprep.subr.mxu0 0.0
          %1921 = vmatpush1.msra.mxu0 0.0
          %1922 = vmatprep.subr.mxu0 0.0
          %1923 = vmatpush1.msra.mxu0 0.0
          %1924 = vmatprep.subr.mxu0 0.0
          %1925 = vmatpush1.msra.mxu0 0.0
          %1926 = vmatprep.subr.mxu0 0.0
          %1927 = vmatpush1.msra.mxu0 0.0
          %1928 = vmatprep.subr.mxu0 0.0
          %1929 = vmatpush1.msra.mxu0 0.0
          %1930 = vmatprep.subr.mxu0 0.0
          %1931 = vmatpush1.msra.mxu0 0.0
          %1932 = vmatprep.subr.mxu0 0.0
          %1933 = vmatpush1.msra.mxu0 0.0
          %1934 = vmatprep.subr.mxu0 0.0
          %1935 = vmatpush1.msra.mxu0 0.0
          %1936 = vmatprep.subr.mxu0 0.0
          %1937 = vmatpush1.msra.mxu0 0.0
          %1938 = vmatprep.subr.mxu0 0.0
          %1939 = vmatpush1.msra.mxu0 0.0
          %1940 = vmatprep.subr.mxu0 0.0
          %1941 = vmatpush1.msra.mxu0 0.0
          %1942 = vmatprep.subr.mxu0 0.0
          %1943 = vmatpush1.msra.mxu0 0.0
          %1944 = vmatprep.subr.mxu0 0.0
          %1945 = vmatpush1.msra.mxu0 0.0
          %1946 = vmatprep.subr.mxu0 0.0
          %1947 = vmatpush1.msra.mxu0 0.0
          %1948 = vmatprep.subr.mxu0 0.0
          %1949 = vmatpush1.msra.mxu0 0.0
          %1950 = vmatprep.subr.mxu0 0.0
          %1951 = vmatpush1.msra.mxu0 0.0
          %1952 = vmatprep.subr.mxu0 0.0
          %1953 = vmatpush1.msra.mxu0 0.0
          %1954 = vmatprep.subr.mxu0 0.0
          %1955 = vmatpush1.msra.mxu0 0.0
          %1956 = vmatprep.subr.mxu0 0.0
          %1957 = vmatpush1.msra.mxu0 0.0
          %1958 = vmatprep.subr.mxu0 0.0
          %1959 = vmatpush1.msra.mxu0 0.0
          %1960 = vmatprep.subr.mxu0 0.0
          %1961 = vmatpush1.msra.mxu0 0.0
          %1962 = vmatprep.subr.mxu0 0.0
          %1963 = vmatpush1.msra.mxu0 0.0
          %1964 = vmatprep.subr.mxu0 0.0
          %1965 = vmatpush1.msra.mxu0 0.0
          %1966 = vmatprep.subr.mxu0 0.0
          %1967 = vmatpush1.msra.mxu0 0.0
          %1968 = vmatprep.subr.mxu0 0.0
          %1969 = vmatpush1.msra.mxu0 0.0
          %1970 = vmatprep.subr.mxu0 0.0
          %1971 = vmatpush1.msra.mxu0 0.0
          %1972 = vmatprep.subr.mxu0 0.0
          %1973 = vmatpush1.msra.mxu0 0.0
          %1974 = vmatprep.subr.mxu0 0.0
          %1975 = vmatpush1.msra.mxu0 0.0
          %1976 = vmatprep.mubr.f32.mxu0 0.0
          %1977 = vmatmul.mubr.f32.gmra.mrb[0].mxu0 %v1865
          %v1978 = vpop.f32.mrb[0].mxu0
          %v1979 = vadd.f32 0.0, %v1978
          %v1980 = vpop.f32.mrb[0].mxu0
          %1981 = vmatprep.mubr.f32.mxu0 0.0
          %1982 = vmatmul.mubr.f32.gmra.mrb[0].mxu0 %v1868
          %v1983 = vpop.f32.mrb[0].mxu0
          %v1984 = vadd.f32 0.0, %v1983
          %v1985 = vpop.f32.mrb[0].mxu0
          %1986 = vmatprep.mubr.f32.mxu0 0.0
          %1987 = vmatmul.mubr.f32.gmra.mrb[0].mxu0 %v1871
          %v1988 = vpop.f32.mrb[0].mxu0
          %v1989 = vadd.f32 0.0, %v1988
          %v1990 = vpop.f32.mrb[0].mxu0
          %1991 = vmatprep.mubr.f32.mxu0 0.0
          %1992 = vmatmul.mubr.f32.gmra.mrb[0].mxu0 %v1874
          %v1993 = vpop.f32.mrb[0].mxu0
          %v1994 = vadd.f32 0.0, %v1993
          %v1995 = vpop.f32.mrb[0].mxu0
          %1996 = vmatprep.mubr.f32.mxu0 0.0
          %1997 = vmatmul.mubr.f32.gmra.mrb[0].mxu0 %v1877
          %v1998 = vpop.f32.mrb[0].mxu0
          %v1999 = vadd.f32 0.0, %v1998
          %v2000 = vpop.f32.mrb[0].mxu0
          %2001 = vmatprep.mubr.f32.mxu0 0.0
          %2002 = vmatmul.mubr.f32.gmra.mrb[0].mxu0 %v1880
          %v2003 = vpop.f32.mrb[0].mxu0
          %v2004 = vadd.f32 0.0, %v2003
          %v2005 = vpop.f32.mrb[0].mxu0
          %2006 = vmatprep.mubr.f32.mxu0 0.0
          %2007 = vmatmul.mubr.f32.gmra.mrb[0].mxu0 %v1883
          %v2008 = vpop.f32.mrb[0].mxu0
          %v2009 = vadd.f32 0.0, %v2008
          %v2010 = vpop.f32.mrb[0].mxu0
          %2011 = vmatprep.mubr.f32.mxu0 0.0
          %2012 = vmatmul.mubr.f32.gmra.mrb[0].mxu0 %v1886
          %v2013 = vpop.f32.mrb[0].mxu0
          %v2014 = vadd.f32 0.0, %v2013
          %v2015 = vpop.f32.mrb[0].mxu0
          %2016 = vmatprep.mubr.f32.mxu0 0.0
          %2017 = vmatmul.mubr.f32.gmra.mrb[0].mxu0 %v1889
          %v2018 = vpop.f32.mrb[0].mxu0
          %v2019 = vadd.f32 0.0, %v2018
          %v2020 = vpop.f32.mrb[0].mxu0
          %2021 = vmatprep.mubr.f32.mxu0 0.0
          %2022 = vmatmul.mubr.f32.gmra.mrb[0].mxu0 %v1892
          %v2023 = vpop.f32.mrb[0].mxu0
          %v2024 = vadd.f32 0.0, %v2023
          %v2025 = vpop.f32.mrb[0].mxu0
          %2026 = vmatprep.mubr.f32.mxu0 0.0
          %2027 = vmatmul.mubr.f32.gmra.mrb[0].mxu0 %v1895
          %v2028 = vpop.f32.mrb[0].mxu0
          %v2029 = vadd.f32 0.0, %v2028
          %v2030 = vpop.f32.mrb[0].mxu0
          %2031 = vmatprep.mubr.f32.mxu0 0.0
          %2032 = vmatmul.mubr.f32.gmra.mrb[0].mxu0 %v1898
          %v2033 = vpop.f32.mrb[0].mxu0
          %v2034 = vadd.f32 0.0, %v2033
          %v2035 = vpop.f32.mrb[0].mxu0
          %2036 = vmatprep.mubr.f32.mxu0 0.0
          %2037 = vmatmul.mubr.f32.gmra.mrb[0].mxu0 %v1901
          %v2038 = vpop.f32.mrb[0].mxu0
          %v2039 = vadd.f32 0.0, %v2038
          %v2040 = vpop.f32.mrb[0].mxu0
          %2041 = vmatprep.mubr.f32.mxu0 0.0
          %2042 = vmatmul.mubr.f32.gmra.mrb[0].mxu0 %v1904
          %v2043 = vpop.f32.mrb[0].mxu0
          %v2044 = vadd.f32 0.0, %v2043
          %v2045 = vpop.f32.mrb[0].mxu0
          %2046 = vmatprep.mubr.f32.mxu0 0.0
          %2047 = vmatmul.mubr.f32.gmra.mrb[0].mxu0 %v1907
          %v2048 = vpop.f32.mrb[0].mxu0
          %v2049 = vadd.f32 0.0, %v2048
          %v2050 = vpop.f32.mrb[0].mxu0
          %2051 = vmatprep.mubr.f32.mxu0 0.0
          %2052 = vmatmul.mubr.f32.gmra.mrb[0].mxu0 %v1910
          %v2053 = vpop.f32.mrb[0].mxu0
          %v2054 = vadd.f32 0.0, %v2053
          %v2055 = vpop.f32.mrb[0].mxu0
          %2056 = vdwg.mxu0
          %v2057 = vadd.f32 %v1828, %v1979
          %v2058 = vadd.f32 %v1829, %v1984
          %v2059 = vadd.f32 %v1830, %v1989
          %v2060 = vadd.f32 %v1831, %v1994
          %v2061 = vadd.f32 %v1832, %v1999
          %v2062 = vadd.f32 %v1833, %v2004
          %v2063 = vadd.f32 %v1834, %v2009
          %v2064 = vadd.f32 %v1835, %v2014
          %v2065 = vadd.f32 %v1836, %v2019
          %v2066 = vadd.f32 %v1837, %v2024
          %v2067 = vadd.f32 %v1838, %v2029
          %v2068 = vadd.f32 %v1839, %v2034
          %v2069 = vadd.f32 %v1840, %v2039
          %v2070 = vadd.f32 %v1841, %v2044
          %v2071 = vadd.f32 %v1842, %v2049
          %v2072 = vadd.f32 %v1843, %v2054
          %v2073 = vld [vmem:[%s1614 + $0x9] sm:$0xff]
          %v2074 = vld [vmem:[%s1614 + $0x11] sm:$0xff]
          %v2075 = vld [vmem:[%s1614 + $0x19] sm:$0xff]
          %v2076 = vld [vmem:[%s1614 + $0x21] sm:$0xff]
          %v2077 = vld [vmem:[%s1614 + $0x39] sm:$0xff]
          %v2078 = vld [vmem:[%s1614 + $0x41] sm:$0xff]
          %v2079 = vld [vmem:[%s1614 + $0x49] sm:$0xff]
          %v2080 = vld [vmem:[%s1614 + $0x51] sm:$0xff]
          %v2081 = vld [vmem:[%s1614 + $0x69] sm:$0xff]
          %v2082 = vld [vmem:[%s1614 + $0x71] sm:$0xff]
          %v2083 = vld [vmem:[%s1614 + $0x79] sm:$0xff]
          %v2084 = vld [vmem:[%s1614 + $0x81] sm:$0xff]
          %v2085 = vld [vmem:[%s1614 + $0x99] sm:$0xff]
          %v2086 = vld [vmem:[%s1614 + $0xa1] sm:$0xff]
          %v2087 = vld [vmem:[%s1614 + $0xa9] sm:$0xff]
          %v2088 = vld [vmem:[%s1614 + $0xb1] sm:$0xff]
          %v2089 = vld [vmem:[#allocation9 + $0xa0] sm:$0xff]
          %v2090 = vld [vmem:[#allocation9 + $0xa8] sm:$0xff]
          %v2091 = vld [vmem:[#allocation9 + $0xb0] sm:$0xff]
          %v2092 = vld [vmem:[#allocation9 + $0xb8] sm:$0xff]
          %v2094 = vsel %vm332, %v2073, 0
          %v2097 = vsel %vm332, %v2074, 0
          %v2100 = vsel %vm332, %v2075, 0
          %v2103 = vsel %vm332, %v2076, 0
          %v2106 = vsel %vm332, %v2077, 0
          %v2109 = vsel %vm332, %v2078, 0
          %v2112 = vsel %vm332, %v2079, 0
          %v2115 = vsel %vm332, %v2080, 0
          %v2118 = vsel %vm332, %v2081, 0
          %v2121 = vsel %vm332, %v2082, 0
          %v2124 = vsel %vm332, %v2083, 0
          %v2127 = vsel %vm332, %v2084, 0
          %v2130 = vsel %vm332, %v2085, 0
          %v2133 = vsel %vm332, %v2086, 0
          %v2136 = vsel %vm332, %v2087, 0
          %v2139 = vsel %vm332, %v2088, 0
          %2141 = vmatprep.subr.mxu0 0.0
          %2142 = vmatpush1.msra.mxu0 %v2089
          %2143 = vmatprep.subr.mxu0 0.0
          %2144 = vmatpush1.msra.mxu0 %v2090
          %2145 = vmatprep.subr.mxu0 0.0
          %2146 = vmatpush1.msra.mxu0 %v2091
          %2147 = vmatprep.subr.mxu0 0.0
          %2148 = vmatpush1.msra.mxu0 %v2092
          %2149 = vmatprep.subr.mxu0 0.0
          %2150 = vmatpush1.msra.mxu0 0.0
          %2151 = vmatprep.subr.mxu0 0.0
          %2152 = vmatpush1.msra.mxu0 0.0
          %2153 = vmatprep.subr.mxu0 0.0
          %2154 = vmatpush1.msra.mxu0 0.0
          %2155 = vmatprep.subr.mxu0 0.0
          %2156 = vmatpush1.msra.mxu0 0.0
          %2157 = vmatprep.subr.mxu0 0.0
          %2158 = vmatpush1.msra.mxu0 0.0
          %2159 = vmatprep.subr.mxu0 0.0
          %2160 = vmatpush1.msra.mxu0 0.0
          %2161 = vmatprep.subr.mxu0 0.0
          %2162 = vmatpush1.msra.mxu0 0.0
          %2163 = vmatprep.subr.mxu0 0.0
          %2164 = vmatpush1.msra.mxu0 0.0
          %2165 = vmatprep.subr.mxu0 0.0
          %2166 = vmatpush1.msra.mxu0 0.0
          %2167 = vmatprep.subr.mxu0 0.0
          %2168 = vmatpush1.msra.mxu0 0.0
          %2169 = vmatprep.subr.mxu0 0.0
          %2170 = vmatpush1.msra.mxu0 0.0
          %2171 = vmatprep.subr.mxu0 0.0
          %2172 = vmatpush1.msra.mxu0 0.0
          %2173 = vmatprep.subr.mxu0 0.0
          %2174 = vmatpush1.msra.mxu0 0.0
          %2175 = vmatprep.subr.mxu0 0.0
          %2176 = vmatpush1.msra.mxu0 0.0
          %2177 = vmatprep.subr.mxu0 0.0
          %2178 = vmatpush1.msra.mxu0 0.0
          %2179 = vmatprep.subr.mxu0 0.0
          %2180 = vmatpush1.msra.mxu0 0.0
          %2181 = vmatprep.subr.mxu0 0.0
          %2182 = vmatpush1.msra.mxu0 0.0
          %2183 = vmatprep.subr.mxu0 0.0
          %2184 = vmatpush1.msra.mxu0 0.0
          %2185 = vmatprep.subr.mxu0 0.0
          %2186 = vmatpush1.msra.mxu0 0.0
          %2187 = vmatprep.subr.mxu0 0.0
          %2188 = vmatpush1.msra.mxu0 0.0
          %2189 = vmatprep.subr.mxu0 0.0
          %2190 = vmatpush1.msra.mxu0 0.0
          %2191 = vmatprep.subr.mxu0 0.0
          %2192 = vmatpush1.msra.mxu0 0.0
          %2193 = vmatprep.subr.mxu0 0.0
          %2194 = vmatpush1.msra.mxu0 0.0
          %2195 = vmatprep.subr.mxu0 0.0
          %2196 = vmatpush1.msra.mxu0 0.0
          %2197 = vmatprep.subr.mxu0 0.0
          %2198 = vmatpush1.msra.mxu0 0.0
          %2199 = vmatprep.subr.mxu0 0.0
          %2200 = vmatpush1.msra.mxu0 0.0
          %2201 = vmatprep.subr.mxu0 0.0
          %2202 = vmatpush1.msra.mxu0 0.0
          %2203 = vmatprep.subr.mxu0 0.0
          %2204 = vmatpush1.msra.mxu0 0.0
          %2205 = vmatprep.mubr.f32.mxu0 0.0
          %2206 = vmatmul.mubr.f32.gmra.mrb[0].mxu0 %v2094
          %v2207 = vpop.f32.mrb[0].mxu0
          %v2208 = vadd.f32 0.0, %v2207
          %v2209 = vpop.f32.mrb[0].mxu0
          %2210 = vmatprep.mubr.f32.mxu0 0.0
          %2211 = vmatmul.mubr.f32.gmra.mrb[0].mxu0 %v2097
          %v2212 = vpop.f32.mrb[0].mxu0
          %v2213 = vadd.f32 0.0, %v2212
          %v2214 = vpop.f32.mrb[0].mxu0
          %2215 = vmatprep.mubr.f32.mxu0 0.0
          %2216 = vmatmul.mubr.f32.gmra.mrb[0].mxu0 %v2100
          %v2217 = vpop.f32.mrb[0].mxu0
          %v2218 = vadd.f32 0.0, %v2217
          %v2219 = vpop.f32.mrb[0].mxu0
          %2220 = vmatprep.mubr.f32.mxu0 0.0
          %2221 = vmatmul.mubr.f32.gmra.mrb[0].mxu0 %v2103
          %v2222 = vpop.f32.mrb[0].mxu0
          %v2223 = vadd.f32 0.0, %v2222
          %v2224 = vpop.f32.mrb[0].mxu0
          %2225 = vmatprep.mubr.f32.mxu0 0.0
          %2226 = vmatmul.mubr.f32.gmra.mrb[0].mxu0 %v2106
          %v2227 = vpop.f32.mrb[0].mxu0
          %v2228 = vadd.f32 0.0, %v2227
          %v2229 = vpop.f32.mrb[0].mxu0
          %2230 = vmatprep.mubr.f32.mxu0 0.0
          %2231 = vmatmul.mubr.f32.gmra.mrb[0].mxu0 %v2109
          %v2232 = vpop.f32.mrb[0].mxu0
          %v2233 = vadd.f32 0.0, %v2232
          %v2234 = vpop.f32.mrb[0].mxu0
          %2235 = vmatprep.mubr.f32.mxu0 0.0
          %2236 = vmatmul.mubr.f32.gmra.mrb[0].mxu0 %v2112
          %v2237 = vpop.f32.mrb[0].mxu0
          %v2238 = vadd.f32 0.0, %v2237
          %v2239 = vpop.f32.mrb[0].mxu0
          %2240 = vmatprep.mubr.f32.mxu0 0.0
          %2241 = vmatmul.mubr.f32.gmra.mrb[0].mxu0 %v2115
          %v2242 = vpop.f32.mrb[0].mxu0
          %v2243 = vadd.f32 0.0, %v2242
          %v2244 = vpop.f32.mrb[0].mxu0
          %2245 = vmatprep.mubr.f32.mxu0 0.0
          %2246 = vmatmul.mubr.f32.gmra.mrb[0].mxu0 %v2118
          %v2247 = vpop.f32.mrb[0].mxu0
          %v2248 = vadd.f32 0.0, %v2247
          %v2249 = vpop.f32.mrb[0].mxu0
          %2250 = vmatprep.mubr.f32.mxu0 0.0
          %2251 = vmatmul.mubr.f32.gmra.mrb[0].mxu0 %v2121
          %v2252 = vpop.f32.mrb[0].mxu0
          %v2253 = vadd.f32 0.0, %v2252
          %v2254 = vpop.f32.mrb[0].mxu0
          %2255 = vmatprep.mubr.f32.mxu0 0.0
          %2256 = vmatmul.mubr.f32.gmra.mrb[0].mxu0 %v2124
          %v2257 = vpop.f32.mrb[0].mxu0
          %v2258 = vadd.f32 0.0, %v2257
          %v2259 = vpop.f32.mrb[0].mxu0
          %2260 = vmatprep.mubr.f32.mxu0 0.0
          %2261 = vmatmul.mubr.f32.gmra.mrb[0].mxu0 %v2127
          %v2262 = vpop.f32.mrb[0].mxu0
          %v2263 = vadd.f32 0.0, %v2262
          %v2264 = vpop.f32.mrb[0].mxu0
          %2265 = vmatprep.mubr.f32.mxu0 0.0
          %2266 = vmatmul.mubr.f32.gmra.mrb[0].mxu0 %v2130
          %v2267 = vpop.f32.mrb[0].mxu0
          %v2268 = vadd.f32 0.0, %v2267
          %v2269 = vpop.f32.mrb[0].mxu0
          %2270 = vmatprep.mubr.f32.mxu0 0.0
          %2271 = vmatmul.mubr.f32.gmra.mrb[0].mxu0 %v2133
          %v2272 = vpop.f32.mrb[0].mxu0
          %v2273 = vadd.f32 0.0, %v2272
          %v2274 = vpop.f32.mrb[0].mxu0
          %2275 = vmatprep.mubr.f32.mxu0 0.0
          %2276 = vmatmul.mubr.f32.gmra.mrb[0].mxu0 %v2136
          %v2277 = vpop.f32.mrb[0].mxu0
          %v2278 = vadd.f32 0.0, %v2277
          %v2279 = vpop.f32.mrb[0].mxu0
          %2280 = vmatprep.mubr.f32.mxu0 0.0
          %2281 = vmatmul.mubr.f32.gmra.mrb[0].mxu0 %v2139
          %v2282 = vpop.f32.mrb[0].mxu0
          %v2283 = vadd.f32 0.0, %v2282
          %v2284 = vpop.f32.mrb[0].mxu0
          %2285 = vdwg.mxu0
          %v2286 = vadd.f32 %v2057, %v2208
          %v2287 = vadd.f32 %v2058, %v2213
          %v2288 = vadd.f32 %v2059, %v2218
          %v2289 = vadd.f32 %v2060, %v2223
          %v2290 = vadd.f32 %v2061, %v2228
          %v2291 = vadd.f32 %v2062, %v2233
          %v2292 = vadd.f32 %v2063, %v2238
          %v2293 = vadd.f32 %v2064, %v2243
          %v2294 = vadd.f32 %v2065, %v2248
          %v2295 = vadd.f32 %v2066, %v2253
          %v2296 = vadd.f32 %v2067, %v2258
          %v2297 = vadd.f32 %v2068, %v2263
          %v2298 = vadd.f32 %v2069, %v2268
          %v2299 = vadd.f32 %v2070, %v2273
          %v2300 = vadd.f32 %v2071, %v2278
          %v2301 = vadd.f32 %v2072, %v2283
          %s2302 = sadd.s32 %s954, 2
          %s2303 = smul.u32 %s2302, 48
          %s2304 = scalar_lea.vmem [#allocation2], %s2303
          %v2305 = vld [vmem:[%s2304 + $0x7] sm:$0xff]
          %v2306 = vld [vmem:[%s2304 + $0xf] sm:$0xff]
          %v2307 = vld [vmem:[%s2304 + $0x17] sm:$0xff]
          %v2308 = vld [vmem:[%s2304 + $0x1f] sm:$0xff]
          %v2309 = vld [vmem:[%s2304 + $0x37] sm:$0xff]
          %v2310 = vld [vmem:[%s2304 + $0x3f] sm:$0xff]
          %v2311 = vld [vmem:[%s2304 + $0x47] sm:$0xff]
          %v2312 = vld [vmem:[%s2304 + $0x4f] sm:$0xff]
          %v2313 = vld [vmem:[%s2304 + $0x67] sm:$0xff]
          %v2314 = vld [vmem:[%s2304 + $0x6f] sm:$0xff]
          %v2315 = vld [vmem:[%s2304 + $0x77] sm:$0xff]
          %v2316 = vld [vmem:[%s2304 + $0x7f] sm:$0xff]
          %v2317 = vld [vmem:[%s2304 + $0x97] sm:$0xff]
          %v2318 = vld [vmem:[%s2304 + $0x9f] sm:$0xff]
          %v2319 = vld [vmem:[%s2304 + $0xa7] sm:$0xff]
          %v2320 = vld [vmem:[%s2304 + $0xaf] sm:$0xff]
          %v2321 = vld [vmem:[#allocation9 + $0xc0] sm:$0xff]
          %v2322 = vld [vmem:[#allocation9 + $0xc8] sm:$0xff]
          %v2323 = vld [vmem:[#allocation9 + $0xd0] sm:$0xff]
          %v2324 = vld [vmem:[#allocation9 + $0xd8] sm:$0xff]
          %v2326 = vsel %vm332, %v2305, 0
          %v2329 = vsel %vm332, %v2306, 0
          %v2332 = vsel %vm332, %v2307, 0
          %v2335 = vsel %vm332, %v2308, 0
          %v2338 = vsel %vm332, %v2309, 0
          %v2341 = vsel %vm332, %v2310, 0
          %v2344 = vsel %vm332, %v2311, 0
          %v2347 = vsel %vm332, %v2312, 0
          %v2350 = vsel %vm332, %v2313, 0
          %v2353 = vsel %vm332, %v2314, 0
          %v2356 = vsel %vm332, %v2315, 0
          %v2359 = vsel %vm332, %v2316, 0
          %v2362 = vsel %vm332, %v2317, 0
          %v2365 = vsel %vm332, %v2318, 0
          %v2368 = vsel %vm332, %v2319, 0
          %v2371 = vsel %vm332, %v2320, 0
          %2373 = vmatprep.subr.mxu0 0.0
          %2374 = vmatpush1.msra.mxu0 %v2321
          %2375 = vmatprep.subr.mxu0 0.0
          %2376 = vmatpush1.msra.mxu0 %v2322
          %2377 = vmatprep.subr.mxu0 0.0
          %2378 = vmatpush1.msra.mxu0 %v2323
          %2379 = vmatprep.subr.mxu0 0.0
          %2380 = vmatpush1.msra.mxu0 %v2324
          %2381 = vmatprep.subr.mxu0 0.0
          %2382 = vmatpush1.msra.mxu0 0.0
          %2383 = vmatprep.subr.mxu0 0.0
          %2384 = vmatpush1.msra.mxu0 0.0
          %2385 = vmatprep.subr.mxu0 0.0
          %2386 = vmatpush1.msra.mxu0 0.0
          %2387 = vmatprep.subr.mxu0 0.0
          %2388 = vmatpush1.msra.mxu0 0.0
          %2389 = vmatprep.subr.mxu0 0.0
          %2390 = vmatpush1.msra.mxu0 0.0
          %2391 = vmatprep.subr.mxu0 0.0
          %2392 = vmatpush1.msra.mxu0 0.0
          %2393 = vmatprep.subr.mxu0 0.0
          %2394 = vmatpush1.msra.mxu0 0.0
          %2395 = vmatprep.subr.mxu0 0.0
          %2396 = vmatpush1.msra.mxu0 0.0
          %2397 = vmatprep.subr.mxu0 0.0
          %2398 = vmatpush1.msra.mxu0 0.0
          %2399 = vmatprep.subr.mxu0 0.0
          %2400 = vmatpush1.msra.mxu0 0.0
          %2401 = vmatprep.subr.mxu0 0.0
          %2402 = vmatpush1.msra.mxu0 0.0
          %2403 = vmatprep.subr.mxu0 0.0
          %2404 = vmatpush1.msra.mxu0 0.0
          %2405 = vmatprep.subr.mxu0 0.0
          %2406 = vmatpush1.msra.mxu0 0.0
          %2407 = vmatprep.subr.mxu0 0.0
          %2408 = vmatpush1.msra.mxu0 0.0
          %2409 = vmatprep.subr.mxu0 0.0
          %2410 = vmatpush1.msra.mxu0 0.0
          %2411 = vmatprep.subr.mxu0 0.0
          %2412 = vmatpush1.msra.mxu0 0.0
          %2413 = vmatprep.subr.mxu0 0.0
          %2414 = vmatpush1.msra.mxu0 0.0
          %2415 = vmatprep.subr.mxu0 0.0
          %2416 = vmatpush1.msra.mxu0 0.0
          %2417 = vmatprep.subr.mxu0 0.0
          %2418 = vmatpush1.msra.mxu0 0.0
          %2419 = vmatprep.subr.mxu0 0.0
          %2420 = vmatpush1.msra.mxu0 0.0
          %2421 = vmatprep.subr.mxu0 0.0
          %2422 = vmatpush1.msra.mxu0 0.0
          %2423 = vmatprep.subr.mxu0 0.0
          %2424 = vmatpush1.msra.mxu0 0.0
          %2425 = vmatprep.subr.mxu0 0.0
          %2426 = vmatpush1.msra.mxu0 0.0
          %2427 = vmatprep.subr.mxu0 0.0
          %2428 = vmatpush1.msra.mxu0 0.0
          %2429 = vmatprep.subr.mxu0 0.0
          %2430 = vmatpush1.msra.mxu0 0.0
          %2431 = vmatprep.subr.mxu0 0.0
          %2432 = vmatpush1.msra.mxu0 0.0
          %2433 = vmatprep.subr.mxu0 0.0
          %2434 = vmatpush1.msra.mxu0 0.0
          %2435 = vmatprep.subr.mxu0 0.0
          %2436 = vmatpush1.msra.mxu0 0.0
          %2437 = vmatprep.mubr.f32.mxu0 0.0
          %2438 = vmatmul.mubr.f32.gmra.mrb[0].mxu0 %v2326
          %v2439 = vpop.f32.mrb[0].mxu0
          %v2440 = vadd.f32 0.0, %v2439
          %v2441 = vpop.f32.mrb[0].mxu0
          %2442 = vmatprep.mubr.f32.mxu0 0.0
          %2443 = vmatmul.mubr.f32.gmra.mrb[0].mxu0 %v2329
          %v2444 = vpop.f32.mrb[0].mxu0
          %v2445 = vadd.f32 0.0, %v2444
          %v2446 = vpop.f32.mrb[0].mxu0
          %2447 = vmatprep.mubr.f32.mxu0 0.0
          %2448 = vmatmul.mubr.f32.gmra.mrb[0].mxu0 %v2332
          %v2449 = vpop.f32.mrb[0].mxu0
          %v2450 = vadd.f32 0.0, %v2449
          %v2451 = vpop.f32.mrb[0].mxu0
          %2452 = vmatprep.mubr.f32.mxu0 0.0
          %2453 = vmatmul.mubr.f32.gmra.mrb[0].mxu0 %v2335
          %v2454 = vpop.f32.mrb[0].mxu0
          %v2455 = vadd.f32 0.0, %v2454
          %v2456 = vpop.f32.mrb[0].mxu0
          %2457 = vmatprep.mubr.f32.mxu0 0.0
          %2458 = vmatmul.mubr.f32.gmra.mrb[0].mxu0 %v2338
          %v2459 = vpop.f32.mrb[0].mxu0
          %v2460 = vadd.f32 0.0, %v2459
          %v2461 = vpop.f32.mrb[0].mxu0
          %2462 = vmatprep.mubr.f32.mxu0 0.0
          %2463 = vmatmul.mubr.f32.gmra.mrb[0].mxu0 %v2341
          %v2464 = vpop.f32.mrb[0].mxu0
          %v2465 = vadd.f32 0.0, %v2464
          %v2466 = vpop.f32.mrb[0].mxu0
          %2467 = vmatprep.mubr.f32.mxu0 0.0
          %2468 = vmatmul.mubr.f32.gmra.mrb[0].mxu0 %v2344
          %v2469 = vpop.f32.mrb[0].mxu0
          %v2470 = vadd.f32 0.0, %v2469
          %v2471 = vpop.f32.mrb[0].mxu0
          %2472 = vmatprep.mubr.f32.mxu0 0.0
          %2473 = vmatmul.mubr.f32.gmra.mrb[0].mxu0 %v2347
          %v2474 = vpop.f32.mrb[0].mxu0
          %v2475 = vadd.f32 0.0, %v2474
          %v2476 = vpop.f32.mrb[0].mxu0
          %2477 = vmatprep.mubr.f32.mxu0 0.0
          %2478 = vmatmul.mubr.f32.gmra.mrb[0].mxu0 %v2350
          %v2479 = vpop.f32.mrb[0].mxu0
          %v2480 = vadd.f32 0.0, %v2479
          %v2481 = vpop.f32.mrb[0].mxu0
          %2482 = vmatprep.mubr.f32.mxu0 0.0
          %2483 = vmatmul.mubr.f32.gmra.mrb[0].mxu0 %v2353
          %v2484 = vpop.f32.mrb[0].mxu0
          %v2485 = vadd.f32 0.0, %v2484
          %v2486 = vpop.f32.mrb[0].mxu0
          %2487 = vmatprep.mubr.f32.mxu0 0.0
          %2488 = vmatmul.mubr.f32.gmra.mrb[0].mxu0 %v2356
          %v2489 = vpop.f32.mrb[0].mxu0
          %v2490 = vadd.f32 0.0, %v2489
          %v2491 = vpop.f32.mrb[0].mxu0
          %2492 = vmatprep.mubr.f32.mxu0 0.0
          %2493 = vmatmul.mubr.f32.gmra.mrb[0].mxu0 %v2359
          %v2494 = vpop.f32.mrb[0].mxu0
          %v2495 = vadd.f32 0.0, %v2494
          %v2496 = vpop.f32.mrb[0].mxu0
          %2497 = vmatprep.mubr.f32.mxu0 0.0
          %2498 = vmatmul.mubr.f32.gmra.mrb[0].mxu0 %v2362
          %v2499 = vpop.f32.mrb[0].mxu0
          %v2500 = vadd.f32 0.0, %v2499
          %v2501 = vpop.f32.mrb[0].mxu0
          %2502 = vmatprep.mubr.f32.mxu0 0.0
          %2503 = vmatmul.mubr.f32.gmra.mrb[0].mxu0 %v2365
          %v2504 = vpop.f32.mrb[0].mxu0
          %v2505 = vadd.f32 0.0, %v2504
          %v2506 = vpop.f32.mrb[0].mxu0
          %2507 = vmatprep.mubr.f32.mxu0 0.0
          %2508 = vmatmul.mubr.f32.gmra.mrb[0].mxu0 %v2368
          %v2509 = vpop.f32.mrb[0].mxu0
          %v2510 = vadd.f32 0.0, %v2509
          %v2511 = vpop.f32.mrb[0].mxu0
          %2512 = vmatprep.mubr.f32.mxu0 0.0
          %2513 = vmatmul.mubr.f32.gmra.mrb[0].mxu0 %v2371
          %v2514 = vpop.f32.mrb[0].mxu0
          %v2515 = vadd.f32 0.0, %v2514
          %v2516 = vpop.f32.mrb[0].mxu0
          %2517 = vdwg.mxu0
          %v2518 = vadd.f32 %v2286, %v2440
          %v2519 = vadd.f32 %v2287, %v2445
          %v2520 = vadd.f32 %v2288, %v2450
          %v2521 = vadd.f32 %v2289, %v2455
          %v2522 = vadd.f32 %v2290, %v2460
          %v2523 = vadd.f32 %v2291, %v2465
          %v2524 = vadd.f32 %v2292, %v2470
          %v2525 = vadd.f32 %v2293, %v2475
          %v2526 = vadd.f32 %v2294, %v2480
          %v2527 = vadd.f32 %v2295, %v2485
          %v2528 = vadd.f32 %v2296, %v2490
          %v2529 = vadd.f32 %v2297, %v2495
          %v2530 = vadd.f32 %v2298, %v2500
          %v2531 = vadd.f32 %v2299, %v2505
          %v2532 = vadd.f32 %v2300, %v2510
          %v2533 = vadd.f32 %v2301, %v2515
          %v2534 = vld [vmem:[%s2304 + $0x8] sm:$0xff]
          %v2535 = vld [vmem:[%s2304 + $0x10] sm:$0xff]
          %v2536 = vld [vmem:[%s2304 + $0x18] sm:$0xff]
          %v2537 = vld [vmem:[%s2304 + $0x20] sm:$0xff]
          %v2538 = vld [vmem:[%s2304 + $0x38] sm:$0xff]
          %v2539 = vld [vmem:[%s2304 + $0x40] sm:$0xff]
          %v2540 = vld [vmem:[%s2304 + $0x48] sm:$0xff]
          %v2541 = vld [vmem:[%s2304 + $0x50] sm:$0xff]
          %v2542 = vld [vmem:[%s2304 + $0x68] sm:$0xff]
          %v2543 = vld [vmem:[%s2304 + $0x70] sm:$0xff]
          %v2544 = vld [vmem:[%s2304 + $0x78] sm:$0xff]
          %v2545 = vld [vmem:[%s2304 + $0x80] sm:$0xff]
          %v2546 = vld [vmem:[%s2304 + $0x98] sm:$0xff]
          %v2547 = vld [vmem:[%s2304 + $0xa0] sm:$0xff]
          %v2548 = vld [vmem:[%s2304 + $0xa8] sm:$0xff]
          %v2549 = vld [vmem:[%s2304 + $0xb0] sm:$0xff]
          %v2550 = vld [vmem:[#allocation9 + $0xe0] sm:$0xff]
          %v2551 = vld [vmem:[#allocation9 + $0xe8] sm:$0xff]
          %v2552 = vld [vmem:[#allocation9 + $0xf0] sm:$0xff]
          %v2553 = vld [vmem:[#allocation9 + $0xf8] sm:$0xff]
          %v2555 = vsel %vm332, %v2534, 0
          %v2558 = vsel %vm332, %v2535, 0
          %v2561 = vsel %vm332, %v2536, 0
          %v2564 = vsel %vm332, %v2537, 0
          %v2567 = vsel %vm332, %v2538, 0
          %v2570 = vsel %vm332, %v2539, 0
          %v2573 = vsel %vm332, %v2540, 0
          %v2576 = vsel %vm332, %v2541, 0
          %v2579 = vsel %vm332, %v2542, 0
          %v2582 = vsel %vm332, %v2543, 0
          %v2585 = vsel %vm332, %v2544, 0
          %v2588 = vsel %vm332, %v2545, 0
          %v2591 = vsel %vm332, %v2546, 0
          %v2594 = vsel %vm332, %v2547, 0
          %v2597 = vsel %vm332, %v2548, 0
          %v2600 = vsel %vm332, %v2549, 0
          %2602 = vmatprep.subr.mxu0 0.0
          %2603 = vmatpush1.msra.mxu0 %v2550
          %2604 = vmatprep.subr.mxu0 0.0
          %2605 = vmatpush1.msra.mxu0 %v2551
          %2606 = vmatprep.subr.mxu0 0.0
          %2607 = vmatpush1.msra.mxu0 %v2552
          %2608 = vmatprep.subr.mxu0 0.0
          %2609 = vmatpush1.msra.mxu0 %v2553
          %2610 = vmatprep.subr.mxu0 0.0
          %2611 = vmatpush1.msra.mxu0 0.0
          %2612 = vmatprep.subr.mxu0 0.0
          %2613 = vmatpush1.msra.mxu0 0.0
          %2614 = vmatprep.subr.mxu0 0.0
          %2615 = vmatpush1.msra.mxu0 0.0
          %2616 = vmatprep.subr.mxu0 0.0
          %2617 = vmatpush1.msra.mxu0 0.0
          %2618 = vmatprep.subr.mxu0 0.0
          %2619 = vmatpush1.msra.mxu0 0.0
          %2620 = vmatprep.subr.mxu0 0.0
          %2621 = vmatpush1.msra.mxu0 0.0
          %2622 = vmatprep.subr.mxu0 0.0
          %2623 = vmatpush1.msra.mxu0 0.0
          %2624 = vmatprep.subr.mxu0 0.0
          %2625 = vmatpush1.msra.mxu0 0.0
          %2626 = vmatprep.subr.mxu0 0.0
          %2627 = vmatpush1.msra.mxu0 0.0
          %2628 = vmatprep.subr.mxu0 0.0
          %2629 = vmatpush1.msra.mxu0 0.0
          %2630 = vmatprep.subr.mxu0 0.0
          %2631 = vmatpush1.msra.mxu0 0.0
          %2632 = vmatprep.subr.mxu0 0.0
          %2633 = vmatpush1.msra.mxu0 0.0
          %2634 = vmatprep.subr.mxu0 0.0
          %2635 = vmatpush1.msra.mxu0 0.0
          %2636 = vmatprep.subr.mxu0 0.0
          %2637 = vmatpush1.msra.mxu0 0.0
          %2638 = vmatprep.subr.mxu0 0.0
          %2639 = vmatpush1.msra.mxu0 0.0
          %2640 = vmatprep.subr.mxu0 0.0
          %2641 = vmatpush1.msra.mxu0 0.0
          %2642 = vmatprep.subr.mxu0 0.0
          %2643 = vmatpush1.msra.mxu0 0.0
          %2644 = vmatprep.subr.mxu0 0.0
          %2645 = vmatpush1.msra.mxu0 0.0
          %2646 = vmatprep.subr.mxu0 0.0
          %2647 = vmatpush1.msra.mxu0 0.0
          %2648 = vmatprep.subr.mxu0 0.0
          %2649 = vmatpush1.msra.mxu0 0.0
          %2650 = vmatprep.subr.mxu0 0.0
          %2651 = vmatpush1.msra.mxu0 0.0
          %2652 = vmatprep.subr.mxu0 0.0
          %2653 = vmatpush1.msra.mxu0 0.0
          %2654 = vmatprep.subr.mxu0 0.0
          %2655 = vmatpush1.msra.mxu0 0.0
          %2656 = vmatprep.subr.mxu0 0.0
          %2657 = vmatpush1.msra.mxu0 0.0
          %2658 = vmatprep.subr.mxu0 0.0
          %2659 = vmatpush1.msra.mxu0 0.0
          %2660 = vmatprep.subr.mxu0 0.0
          %2661 = vmatpush1.msra.mxu0 0.0
          %2662 = vmatprep.subr.mxu0 0.0
          %2663 = vmatpush1.msra.mxu0 0.0
          %2664 = vmatprep.subr.mxu0 0.0
          %2665 = vmatpush1.msra.mxu0 0.0
          %2666 = vmatprep.mubr.f32.mxu0 0.0
          %2667 = vmatmul.mubr.f32.gmra.mrb[0].mxu0 %v2555
          %v2668 = vpop.f32.mrb[0].mxu0
          %v2669 = vadd.f32 0.0, %v2668
          %v2670 = vpop.f32.mrb[0].mxu0
          %2671 = vmatprep.mubr.f32.mxu0 0.0
          %2672 = vmatmul.mubr.f32.gmra.mrb[0].mxu0 %v2558
          %v2673 = vpop.f32.mrb[0].mxu0
          %v2674 = vadd.f32 0.0, %v2673
          %v2675 = vpop.f32.mrb[0].mxu0
          %2676 = vmatprep.mubr.f32.mxu0 0.0
          %2677 = vmatmul.mubr.f32.gmra.mrb[0].mxu0 %v2561
          %v2678 = vpop.f32.mrb[0].mxu0
          %v2679 = vadd.f32 0.0, %v2678
          %v2680 = vpop.f32.mrb[0].mxu0
          %2681 = vmatprep.mubr.f32.mxu0 0.0
          %2682 = vmatmul.mubr.f32.gmra.mrb[0].mxu0 %v2564
          %v2683 = vpop.f32.mrb[0].mxu0
          %v2684 = vadd.f32 0.0, %v2683
          %v2685 = vpop.f32.mrb[0].mxu0
          %2686 = vmatprep.mubr.f32.mxu0 0.0
          %2687 = vmatmul.mubr.f32.gmra.mrb[0].mxu0 %v2567
          %v2688 = vpop.f32.mrb[0].mxu0
          %v2689 = vadd.f32 0.0, %v2688
          %v2690 = vpop.f32.mrb[0].mxu0
          %2691 = vmatprep.mubr.f32.mxu0 0.0
          %2692 = vmatmul.mubr.f32.gmra.mrb[0].mxu0 %v2570
          %v2693 = vpop.f32.mrb[0].mxu0
          %v2694 = vadd.f32 0.0, %v2693
          %v2695 = vpop.f32.mrb[0].mxu0
          %2696 = vmatprep.mubr.f32.mxu0 0.0
          %2697 = vmatmul.mubr.f32.gmra.mrb[0].mxu0 %v2573
          %v2698 = vpop.f32.mrb[0].mxu0
          %v2699 = vadd.f32 0.0, %v2698
          %v2700 = vpop.f32.mrb[0].mxu0
          %2701 = vmatprep.mubr.f32.mxu0 0.0
          %2702 = vmatmul.mubr.f32.gmra.mrb[0].mxu0 %v2576
          %v2703 = vpop.f32.mrb[0].mxu0
          %v2704 = vadd.f32 0.0, %v2703
          %v2705 = vpop.f32.mrb[0].mxu0
          %2706 = vmatprep.mubr.f32.mxu0 0.0
          %2707 = vmatmul.mubr.f32.gmra.mrb[0].mxu0 %v2579
          %v2708 = vpop.f32.mrb[0].mxu0
          %v2709 = vadd.f32 0.0, %v2708
          %v2710 = vpop.f32.mrb[0].mxu0
          %2711 = vmatprep.mubr.f32.mxu0 0.0
          %2712 = vmatmul.mubr.f32.gmra.mrb[0].mxu0 %v2582
          %v2713 = vpop.f32.mrb[0].mxu0
          %v2714 = vadd.f32 0.0, %v2713
          %v2715 = vpop.f32.mrb[0].mxu0
          %2716 = vmatprep.mubr.f32.mxu0 0.0
          %2717 = vmatmul.mubr.f32.gmra.mrb[0].mxu0 %v2585
          %v2718 = vpop.f32.mrb[0].mxu0
          %v2719 = vadd.f32 0.0, %v2718
          %v2720 = vpop.f32.mrb[0].mxu0
          %2721 = vmatprep.mubr.f32.mxu0 0.0
          %2722 = vmatmul.mubr.f32.gmra.mrb[0].mxu0 %v2588
          %v2723 = vpop.f32.mrb[0].mxu0
          %v2724 = vadd.f32 0.0, %v2723
          %v2725 = vpop.f32.mrb[0].mxu0
          %2726 = vmatprep.mubr.f32.mxu0 0.0
          %2727 = vmatmul.mubr.f32.gmra.mrb[0].mxu0 %v2591
          %v2728 = vpop.f32.mrb[0].mxu0
          %v2729 = vadd.f32 0.0, %v2728
          %v2730 = vpop.f32.mrb[0].mxu0
          %2731 = vmatprep.mubr.f32.mxu0 0.0
          %2732 = vmatmul.mubr.f32.gmra.mrb[0].mxu0 %v2594
          %v2733 = vpop.f32.mrb[0].mxu0
          %v2734 = vadd.f32 0.0, %v2733
          %v2735 = vpop.f32.mrb[0].mxu0
          %2736 = vmatprep.mubr.f32.mxu0 0.0
          %2737 = vmatmul.mubr.f32.gmra.mrb[0].mxu0 %v2597
          %v2738 = vpop.f32.mrb[0].mxu0
          %v2739 = vadd.f32 0.0, %v2738
          %v2740 = vpop.f32.mrb[0].mxu0
          %2741 = vmatprep.mubr.f32.mxu0 0.0
          %2742 = vmatmul.mubr.f32.gmra.mrb[0].mxu0 %v2600
          %v2743 = vpop.f32.mrb[0].mxu0
          %v2744 = vadd.f32 0.0, %v2743
          %v2745 = vpop.f32.mrb[0].mxu0
          %2746 = vdwg.mxu0
          %v2747 = vadd.f32 %v2518, %v2669
          %v2748 = vadd.f32 %v2519, %v2674
          %v2749 = vadd.f32 %v2520, %v2679
          %v2750 = vadd.f32 %v2521, %v2684
          %v2751 = vadd.f32 %v2522, %v2689
          %v2752 = vadd.f32 %v2523, %v2694
          %v2753 = vadd.f32 %v2524, %v2699
          %v2754 = vadd.f32 %v2525, %v2704
          %v2755 = vadd.f32 %v2526, %v2709
          %v2756 = vadd.f32 %v2527, %v2714
          %v2757 = vadd.f32 %v2528, %v2719
          %v2758 = vadd.f32 %v2529, %v2724
          %v2759 = vadd.f32 %v2530, %v2729
          %v2760 = vadd.f32 %v2531, %v2734
          %v2761 = vadd.f32 %v2532, %v2739
          %v2762 = vadd.f32 %v2533, %v2744
          %v2763 = vld [vmem:[%s2304 + $0x9] sm:$0xff]
          %v2764 = vld [vmem:[%s2304 + $0x11] sm:$0xff]
          %v2765 = vld [vmem:[%s2304 + $0x19] sm:$0xff]
          %v2766 = vld [vmem:[%s2304 + $0x21] sm:$0xff]
          %v2767 = vld [vmem:[%s2304 + $0x39] sm:$0xff]
          %v2768 = vld [vmem:[%s2304 + $0x41] sm:$0xff]
          %v2769 = vld [vmem:[%s2304 + $0x49] sm:$0xff]
          %v2770 = vld [vmem:[%s2304 + $0x51] sm:$0xff]
          %v2771 = vld [vmem:[%s2304 + $0x69] sm:$0xff]
          %v2772 = vld [vmem:[%s2304 + $0x71] sm:$0xff]
          %v2773 = vld [vmem:[%s2304 + $0x79] sm:$0xff]
          %v2774 = vld [vmem:[%s2304 + $0x81] sm:$0xff]
          %v2775 = vld [vmem:[%s2304 + $0x99] sm:$0xff]
          %v2776 = vld [vmem:[%s2304 + $0xa1] sm:$0xff]
          %v2777 = vld [vmem:[%s2304 + $0xa9] sm:$0xff]
          %v2778 = vld [vmem:[%s2304 + $0xb1] sm:$0xff]
          %v2779 = vld [vmem:[#allocation9 + $0x100] sm:$0xff]
          %v2780 = vld [vmem:[#allocation9 + $0x108] sm:$0xff]
          %v2781 = vld [vmem:[#allocation9 + $0x110] sm:$0xff]
          %v2782 = vld [vmem:[#allocation9 + $0x118] sm:$0xff]
          %v2784 = vsel %vm332, %v2763, 0
          %v2787 = vsel %vm332, %v2764, 0
          %v2790 = vsel %vm332, %v2765, 0
          %v2793 = vsel %vm332, %v2766, 0
          %v2796 = vsel %vm332, %v2767, 0
          %v2799 = vsel %vm332, %v2768, 0
          %v2802 = vsel %vm332, %v2769, 0
          %v2805 = vsel %vm332, %v2770, 0
          %v2808 = vsel %vm332, %v2771, 0
          %v2811 = vsel %vm332, %v2772, 0
          %v2814 = vsel %vm332, %v2773, 0
          %v2817 = vsel %vm332, %v2774, 0
          %v2820 = vsel %vm332, %v2775, 0
          %v2823 = vsel %vm332, %v2776, 0
          %v2826 = vsel %vm332, %v2777, 0
          %v2829 = vsel %vm332, %v2778, 0
          %2831 = vmatprep.subr.mxu0 0.0
          %2832 = vmatpush1.msra.mxu0 %v2779
          %2833 = vmatprep.subr.mxu0 0.0
          %2834 = vmatpush1.msra.mxu0 %v2780
          %2835 = vmatprep.subr.mxu0 0.0
          %2836 = vmatpush1.msra.mxu0 %v2781
          %2837 = vmatprep.subr.mxu0 0.0
          %2838 = vmatpush1.msra.mxu0 %v2782
          %2839 = vmatprep.subr.mxu0 0.0
          %2840 = vmatpush1.msra.mxu0 0.0
          %2841 = vmatprep.subr.mxu0 0.0
          %2842 = vmatpush1.msra.mxu0 0.0
          %2843 = vmatprep.subr.mxu0 0.0
          %2844 = vmatpush1.msra.mxu0 0.0
          %2845 = vmatprep.subr.mxu0 0.0
          %2846 = vmatpush1.msra.mxu0 0.0
          %2847 = vmatprep.subr.mxu0 0.0
          %2848 = vmatpush1.msra.mxu0 0.0
          %2849 = vmatprep.subr.mxu0 0.0
          %2850 = vmatpush1.msra.mxu0 0.0
          %2851 = vmatprep.subr.mxu0 0.0
          %2852 = vmatpush1.msra.mxu0 0.0
          %2853 = vmatprep.subr.mxu0 0.0
          %2854 = vmatpush1.msra.mxu0 0.0
          %2855 = vmatprep.subr.mxu0 0.0
          %2856 = vmatpush1.msra.mxu0 0.0
          %2857 = vmatprep.subr.mxu0 0.0
          %2858 = vmatpush1.msra.mxu0 0.0
          %2859 = vmatprep.subr.mxu0 0.0
          %2860 = vmatpush1.msra.mxu0 0.0
          %2861 = vmatprep.subr.mxu0 0.0
          %2862 = vmatpush1.msra.mxu0 0.0
          %2863 = vmatprep.subr.mxu0 0.0
          %2864 = vmatpush1.msra.mxu0 0.0
          %2865 = vmatprep.subr.mxu0 0.0
          %2866 = vmatpush1.msra.mxu0 0.0
          %2867 = vmatprep.subr.mxu0 0.0
          %2868 = vmatpush1.msra.mxu0 0.0
          %2869 = vmatprep.subr.mxu0 0.0
          %2870 = vmatpush1.msra.mxu0 0.0
          %2871 = vmatprep.subr.mxu0 0.0
          %2872 = vmatpush1.msra.mxu0 0.0
          %2873 = vmatprep.subr.mxu0 0.0
          %2874 = vmatpush1.msra.mxu0 0.0
          %2875 = vmatprep.subr.mxu0 0.0
          %2876 = vmatpush1.msra.mxu0 0.0
          %2877 = vmatprep.subr.mxu0 0.0
          %2878 = vmatpush1.msra.mxu0 0.0
          %2879 = vmatprep.subr.mxu0 0.0
          %2880 = vmatpush1.msra.mxu0 0.0
          %2881 = vmatprep.subr.mxu0 0.0
          %2882 = vmatpush1.msra.mxu0 0.0
          %2883 = vmatprep.subr.mxu0 0.0
          %2884 = vmatpush1.msra.mxu0 0.0
          %2885 = vmatprep.subr.mxu0 0.0
          %2886 = vmatpush1.msra.mxu0 0.0
          %2887 = vmatprep.subr.mxu0 0.0
          %2888 = vmatpush1.msra.mxu0 0.0
          %2889 = vmatprep.subr.mxu0 0.0
          %2890 = vmatpush1.msra.mxu0 0.0
          %2891 = vmatprep.subr.mxu0 0.0
          %2892 = vmatpush1.msra.mxu0 0.0
          %2893 = vmatprep.subr.mxu0 0.0
          %2894 = vmatpush1.msra.mxu0 0.0
          %2895 = vmatprep.mubr.f32.mxu0 0.0
          %2896 = vmatmul.mubr.f32.gmra.mrb[0].mxu0 %v2784
          %v2897 = vpop.f32.mrb[0].mxu0
          %v2898 = vadd.f32 0.0, %v2897
          %v2899 = vpop.f32.mrb[0].mxu0
          %2900 = vmatprep.mubr.f32.mxu0 0.0
          %2901 = vmatmul.mubr.f32.gmra.mrb[0].mxu0 %v2787
          %v2902 = vpop.f32.mrb[0].mxu0
          %v2903 = vadd.f32 0.0, %v2902
          %v2904 = vpop.f32.mrb[0].mxu0
          %2905 = vmatprep.mubr.f32.mxu0 0.0
          %2906 = vmatmul.mubr.f32.gmra.mrb[0].mxu0 %v2790
          %v2907 = vpop.f32.mrb[0].mxu0
          %v2908 = vadd.f32 0.0, %v2907
          %v2909 = vpop.f32.mrb[0].mxu0
          %2910 = vmatprep.mubr.f32.mxu0 0.0
          %2911 = vmatmul.mubr.f32.gmra.mrb[0].mxu0 %v2793
          %v2912 = vpop.f32.mrb[0].mxu0
          %v2913 = vadd.f32 0.0, %v2912
          %v2914 = vpop.f32.mrb[0].mxu0
          %2915 = vmatprep.mubr.f32.mxu0 0.0
          %2916 = vmatmul.mubr.f32.gmra.mrb[0].mxu0 %v2796
          %v2917 = vpop.f32.mrb[0].mxu0
          %v2918 = vadd.f32 0.0, %v2917
          %v2919 = vpop.f32.mrb[0].mxu0
          %2920 = vmatprep.mubr.f32.mxu0 0.0
          %2921 = vmatmul.mubr.f32.gmra.mrb[0].mxu0 %v2799
          %v2922 = vpop.f32.mrb[0].mxu0
          %v2923 = vadd.f32 0.0, %v2922
          %v2924 = vpop.f32.mrb[0].mxu0
          %2925 = vmatprep.mubr.f32.mxu0 0.0
          %2926 = vmatmul.mubr.f32.gmra.mrb[0].mxu0 %v2802
          %v2927 = vpop.f32.mrb[0].mxu0
          %v2928 = vadd.f32 0.0, %v2927
          %v2929 = vpop.f32.mrb[0].mxu0
          %2930 = vmatprep.mubr.f32.mxu0 0.0
          %2931 = vmatmul.mubr.f32.gmra.mrb[0].mxu0 %v2805
          %v2932 = vpop.f32.mrb[0].mxu0
          %v2933 = vadd.f32 0.0, %v2932
          %v2934 = vpop.f32.mrb[0].mxu0
          %2935 = vmatprep.mubr.f32.mxu0 0.0
          %2936 = vmatmul.mubr.f32.gmra.mrb[0].mxu0 %v2808
          %v2937 = vpop.f32.mrb[0].mxu0
          %v2938 = vadd.f32 0.0, %v2937
          %v2939 = vpop.f32.mrb[0].mxu0
          %2940 = vmatprep.mubr.f32.mxu0 0.0
          %2941 = vmatmul.mubr.f32.gmra.mrb[0].mxu0 %v2811
          %v2942 = vpop.f32.mrb[0].mxu0
          %v2943 = vadd.f32 0.0, %v2942
          %v2944 = vpop.f32.mrb[0].mxu0
          %2945 = vmatprep.mubr.f32.mxu0 0.0
          %2946 = vmatmul.mubr.f32.gmra.mrb[0].mxu0 %v2814
          %v2947 = vpop.f32.mrb[0].mxu0
          %v2948 = vadd.f32 0.0, %v2947
          %v2949 = vpop.f32.mrb[0].mxu0
          %2950 = vmatprep.mubr.f32.mxu0 0.0
          %2951 = vmatmul.mubr.f32.gmra.mrb[0].mxu0 %v2817
          %v2952 = vpop.f32.mrb[0].mxu0
          %v2953 = vadd.f32 0.0, %v2952
          %v2954 = vpop.f32.mrb[0].mxu0
          %2955 = vmatprep.mubr.f32.mxu0 0.0
          %2956 = vmatmul.mubr.f32.gmra.mrb[0].mxu0 %v2820
          %v2957 = vpop.f32.mrb[0].mxu0
          %v2958 = vadd.f32 0.0, %v2957
          %v2959 = vpop.f32.mrb[0].mxu0
          %2960 = vmatprep.mubr.f32.mxu0 0.0
          %2961 = vmatmul.mubr.f32.gmra.mrb[0].mxu0 %v2823
          %v2962 = vpop.f32.mrb[0].mxu0
          %v2963 = vadd.f32 0.0, %v2962
          %v2964 = vpop.f32.mrb[0].mxu0
          %2965 = vmatprep.mubr.f32.mxu0 0.0
          %2966 = vmatmul.mubr.f32.gmra.mrb[0].mxu0 %v2826
          %v2967 = vpop.f32.mrb[0].mxu0
          %v2968 = vadd.f32 0.0, %v2967
          %v2969 = vpop.f32.mrb[0].mxu0
          %2970 = vmatprep.mubr.f32.mxu0 0.0
          %2971 = vmatmul.mubr.f32.gmra.mrb[0].mxu0 %v2829
          %v2972 = vpop.f32.mrb[0].mxu0
          %v2973 = vadd.f32 0.0, %v2972
          %v2974 = vpop.f32.mrb[0].mxu0
          %2975 = vdwg.mxu0
          %v2976 = vadd.f32 %v2747, %v2898
          %v2977 = vadd.f32 %v2748, %v2903
          %v2978 = vadd.f32 %v2749, %v2908
          %v2979 = vadd.f32 %v2750, %v2913
          %v2980 = vadd.f32 %v2751, %v2918
          %v2981 = vadd.f32 %v2752, %v2923
          %v2982 = vadd.f32 %v2753, %v2928
          %v2983 = vadd.f32 %v2754, %v2933
          %v2984 = vadd.f32 %v2755, %v2938
          %v2985 = vadd.f32 %v2756, %v2943
          %v2986 = vadd.f32 %v2757, %v2948
          %v2987 = vadd.f32 %v2758, %v2953
          %v2988 = vadd.f32 %v2759, %v2958
          %v2989 = vadd.f32 %v2760, %v2963
          %v2990 = vadd.f32 %v2761, %v2968
          %v2991 = vadd.f32 %v2762, %v2973
          %v2993 = vlaneseq
          %v2994 = vshrl.u32 %v2993, 7
          %v2995 = vsub.s32 0, %v2994
          %v2996 = vrot.slane %v464, %v2995
          %v2998 = vadd.f32 %v2976, %v2996
          %v2999 = vadd.f32 %v2977, %v2996
          %v3000 = vadd.f32 %v2978, %v2996
          %v3001 = vadd.f32 %v2979, %v2996
          %v3002 = vadd.f32 %v2980, %v2996
          %v3003 = vadd.f32 %v2981, %v2996
          %v3004 = vadd.f32 %v2982, %v2996
          %v3005 = vadd.f32 %v2983, %v2996
          %v3006 = vadd.f32 %v2984, %v2996
          %v3007 = vadd.f32 %v2985, %v2996
          %v3008 = vadd.f32 %v2986, %v2996
          %v3009 = vadd.f32 %v2987, %v2996
          %v3010 = vadd.f32 %v2988, %v2996
          %v3011 = vadd.f32 %v2989, %v2996
          %v3012 = vadd.f32 %v2990, %v2996
          %v3013 = vadd.f32 %v2991, %v2996
          %v3014 = vmax.f32 %v2998, 0.0
          %v3015 = vmax.f32 %v2999, 0.0
          %v3016 = vmax.f32 %v3000, 0.0
          %v3017 = vmax.f32 %v3001, 0.0
          %v3018 = vmax.f32 %v3002, 0.0
          %v3019 = vmax.f32 %v3003, 0.0
          %v3020 = vmax.f32 %v3004, 0.0
          %v3021 = vmax.f32 %v3005, 0.0
          %v3022 = vmax.f32 %v3006, 0.0
          %v3023 = vmax.f32 %v3007, 0.0
          %v3024 = vmax.f32 %v3008, 0.0
          %v3025 = vmax.f32 %v3009, 0.0
          %v3026 = vmax.f32 %v3010, 0.0
          %v3027 = vmax.f32 %v3011, 0.0
          %v3028 = vmax.f32 %v3012, 0.0
          %v3029 = vmax.f32 %v3013, 0.0
          %v3030 = vmax.f32 %v3014, %v3018
          %v3031 = vmax.f32 %v3015, %v3019
          %v3032 = vmax.f32 %v3016, %v3020
          %v3033 = vmax.f32 %v3017, %v3021
          %v3034 = vmax.f32 %v3022, %v3026
          %v3035 = vmax.f32 %v3023, %v3027
          %v3036 = vmax.f32 %v3024, %v3028
          %v3037 = vmax.f32 %v3025, %v3029
          %3038 = vst.msk [vmem:[#allocation5] sm:$0xff] %vm332, %v3030
          %3039 = vst.msk [vmem:[#allocation5 + $0x8] sm:$0xff] %vm332, %v3031
          %3040 = vst.msk [vmem:[#allocation5 + $0x10] sm:$0xff] %vm332, %v3032
          %3041 = vst.msk [vmem:[#allocation5 + $0x18] sm:$0xff] %vm332, %v3033
          %3042 = vst.msk [vmem:[#allocation5 + $0x20] sm:$0xff] %vm332, %v3034
          %3043 = vst.msk [vmem:[#allocation5 + $0x28] sm:$0xff] %vm332, %v3035
          %3044 = vst.msk [vmem:[#allocation5 + $0x30] sm:$0xff] %vm332, %v3036
          %3045 = vst.msk [vmem:[#allocation5 + $0x38] sm:$0xff] %vm332, %v3037
          %v3046 = vld [vmem:[#allocation5] ss:$2 sm:$0xff]
          %s3047 = scalar_lea.vmem [#allocation5], 16
          %v3048 = vld [vmem:[%s3047] ss:$2 sm:$0xff]
          %s3049 = scalar_lea.vmem [#allocation5], 32
          %v3050 = vld [vmem:[%s3049] ss:$2 sm:$0xff]
          %s3051 = scalar_lea.vmem [#allocation5], 48
          %v3052 = vld [vmem:[%s3051] ss:$2 sm:$0xff]
          %s3053 = scalar_lea.vmem [#allocation5], 1
          %v3054 = vld [vmem:[%s3053] ss:$2 sm:$0xff]
          %s3055 = scalar_lea.vmem [#allocation5], 17
          %v3056 = vld [vmem:[%s3055] ss:$2 sm:$0xff]
          %s3057 = scalar_lea.vmem [#allocation5], 33
          %v3058 = vld [vmem:[%s3057] ss:$2 sm:$0xff]
          %s3059 = scalar_lea.vmem [#allocation5], 49
          %v3060 = vld [vmem:[%s3059] ss:$2 sm:$0xff]
          %v3061 = vmax.f32 %v3046, %v3054
          %v3062 = vmax.f32 %v3048, %v3056
          %v3063 = vmax.f32 %v3050, %v3058
          %v3064 = vmax.f32 %v3052, %v3060
          %s3065 = smul.u32 %s949, 2
          %s3066 = sadd.s32 %s3065, 1
          %s3067 = smul.u32 %s3066, 32
          %s3068 = scalar_lea.vmem [#allocation3], %s3067
          %3069 = vst.msk [vmem:[%s3068 + $0x8] sm:$0xff] %vm332, %v3061
          %3070 = vst.msk [vmem:[%s3068 + $0x10] sm:$0xff] %vm332, %v3062
          %3071 = vst.msk [vmem:[%s3068 + $0x28] sm:$0xff] %vm332, %v3063
          %3072 = vst.msk [vmem:[%s3068 + $0x30] sm:$0xff] %vm332, %v3064
        $region76: #{genki_forward.2} parent=47 // loop_footer
          %s953 = sadd.s32 1, %s949
        $region77: #{genki_forward.2} parent=47 // loop_footer_branch
          %948 = sbr.rel target = $region73
        $region78: #{genki_forward.2} parent=47 // loop_exit
          _
        loop: start=0, step=1, limit=4
        $region79: #{genki_forward.2} parent=47 // loop_pre_header
          _
        $region80: #{genki_forward.2} parent=47 // loop_header
          %s3074 = sphi 0, %s3078
          %p3075 = scmp.ge.s32.totalorder %s3074, 4
        $region81: #{genki_forward.2} parent=47 // loop_header_branch
          %3077 = sbr.rel (%p3075) target = $region85
        $region82: #{genki_forward.2} parent=47 // loop_body
          %s3079 = smul.u32 %s3074, 4
          %s3080 = smul.u32 %s3079, 32
          %s3081 = scalar_lea.vmem [#allocation3], %s3080
          %v3082 = vld [vmem:[%s3081 + $0x7] sm:$0xff]
          %v3083 = vld [vmem:[%s3081 + $0xf] sm:$0xff]
          %v3084 = vld [vmem:[%s3081 + $0x27] sm:$0xff]
          %v3085 = vld [vmem:[%s3081 + $0x2f] sm:$0xff]
          %v3086 = vld [vmem:[%s3081 + $0x47] sm:$0xff]
          %v3087 = vld [vmem:[%s3081 + $0x4f] sm:$0xff]
          %v3088 = vld [vmem:[%s3081 + $0x67] sm:$0xff]
          %v3089 = vld [vmem:[%s3081 + $0x6f] sm:$0xff]
          %v3090 = vld [vmem:[%s5] sm:$0xff]
          %v3091 = vld [vmem:[%s5 + $0x8] sm:$0xff]
          %v3092 = vld [vmem:[%s5 + $0x10] sm:$0xff]
          %v3093 = vld [vmem:[%s5 + $0x18] sm:$0xff]
          %v3094 = vld [vmem:[%s3081 + $0x8] sm:$0xff]
          %v3095 = vld [vmem:[%s3081 + $0x10] sm:$0xff]
          %v3096 = vld [vmem:[%s3081 + $0x28] sm:$0xff]
          %v3097 = vld [vmem:[%s3081 + $0x30] sm:$0xff]
          %v3098 = vld [vmem:[%s3081 + $0x48] sm:$0xff]
          %v3099 = vld [vmem:[%s3081 + $0x50] sm:$0xff]
          %v3100 = vld [vmem:[%s3081 + $0x68] sm:$0xff]
          %v3101 = vld [vmem:[%s3081 + $0x70] sm:$0xff]
          %v3102 = vld [vmem:[%s5 + $0x20] sm:$0xff]
          %v3103 = vld [vmem:[%s5 + $0x28] sm:$0xff]
          %v3104 = vld [vmem:[%s5 + $0x30] sm:$0xff]
          %v3105 = vld [vmem:[%s5 + $0x38] sm:$0xff]
          %v3107 = vsel %vm332, %v3094, 0
          %v3110 = vsel %vm332, %v3095, 0
          %v3113 = vsel %vm332, %v3096, 0
          %v3116 = vsel %vm332, %v3097, 0
          %v3119 = vsel %vm332, %v3098, 0
          %v3122 = vsel %vm332, %v3099, 0
          %v3125 = vsel %vm332, %v3100, 0
          %v3128 = vsel %vm332, %v3101, 0
          %3130 = vmatprep.subr.mxu0 0.0
          %3131 = vmatpush1.msra.mxu0 %v3102
          %3132 = vmatprep.subr.mxu0 0.0
          %3133 = vmatpush1.msra.mxu0 %v3103
          %3134 = vmatprep.subr.mxu0 0.0
          %3135 = vmatpush1.msra.mxu0 %v3104
          %3136 = vmatprep.subr.mxu0 0.0
          %3137 = vmatpush1.msra.mxu0 %v3105
          %3138 = vmatprep.subr.mxu0 0.0
          %3139 = vmatpush1.msra.mxu0 0.0
          %3140 = vmatprep.subr.mxu0 0.0
          %3141 = vmatpush1.msra.mxu0 0.0
          %3142 = vmatprep.subr.mxu0 0.0
          %3143 = vmatpush1.msra.mxu0 0.0
          %3144 = vmatprep.subr.mxu0 0.0
          %3145 = vmatpush1.msra.mxu0 0.0
          %3146 = vmatprep.subr.mxu0 0.0
          %3147 = vmatpush1.msra.mxu0 0.0
          %3148 = vmatprep.subr.mxu0 0.0
          %3149 = vmatpush1.msra.mxu0 0.0
          %3150 = vmatprep.subr.mxu0 0.0
          %3151 = vmatpush1.msra.mxu0 0.0
          %3152 = vmatprep.subr.mxu0 0.0
          %3153 = vmatpush1.msra.mxu0 0.0
          %3154 = vmatprep.subr.mxu0 0.0
          %3155 = vmatpush1.msra.mxu0 0.0
          %3156 = vmatprep.subr.mxu0 0.0
          %3157 = vmatpush1.msra.mxu0 0.0
          %3158 = vmatprep.subr.mxu0 0.0
          %3159 = vmatpush1.msra.mxu0 0.0
          %3160 = vmatprep.subr.mxu0 0.0
          %3161 = vmatpush1.msra.mxu0 0.0
          %3162 = vmatprep.subr.mxu0 0.0
          %3163 = vmatpush1.msra.mxu0 0.0
          %3164 = vmatprep.subr.mxu0 0.0
          %3165 = vmatpush1.msra.mxu0 0.0
          %3166 = vmatprep.subr.mxu0 0.0
          %3167 = vmatpush1.msra.mxu0 0.0
          %3168 = vmatprep.subr.mxu0 0.0
          %3169 = vmatpush1.msra.mxu0 0.0
          %3170 = vmatprep.subr.mxu0 0.0
          %3171 = vmatpush1.msra.mxu0 0.0
          %3172 = vmatprep.subr.mxu0 0.0
          %3173 = vmatpush1.msra.mxu0 0.0
          %3174 = vmatprep.subr.mxu0 0.0
          %3175 = vmatpush1.msra.mxu0 0.0
          %3176 = vmatprep.subr.mxu0 0.0
          %3177 = vmatpush1.msra.mxu0 0.0
          %3178 = vmatprep.subr.mxu0 0.0
          %3179 = vmatpush1.msra.mxu0 0.0
          %3180 = vmatprep.subr.mxu0 0.0
          %3181 = vmatpush1.msra.mxu0 0.0
          %3182 = vmatprep.subr.mxu0 0.0
          %3183 = vmatpush1.msra.mxu0 0.0
          %3184 = vmatprep.subr.mxu0 0.0
          %3185 = vmatpush1.msra.mxu0 0.0
          %3186 = vmatprep.subr.mxu0 0.0
          %3187 = vmatpush1.msra.mxu0 0.0
          %3188 = vmatprep.subr.mxu0 0.0
          %3189 = vmatpush1.msra.mxu0 0.0
          %3190 = vmatprep.subr.mxu0 0.0
          %3191 = vmatpush1.msra.mxu0 0.0
          %3192 = vmatprep.subr.mxu0 0.0
          %3193 = vmatpush1.msra.mxu0 0.0
          %3194 = vmatprep.mubr.f32.mxu0 0.0
          %3195 = vmatmul.mubr.f32.gmra.mrb[0].mxu0 %v3107
          %v3196 = vpop.f32.mrb[0].mxu0
          %v3197 = vadd.f32 0.0, %v3196
          %v3198 = vpop.f32.mrb[0].mxu0
          %3199 = vmatprep.mubr.f32.mxu0 0.0
          %3200 = vmatmul.mubr.f32.gmra.mrb[0].mxu0 %v3110
          %v3201 = vpop.f32.mrb[0].mxu0
          %v3202 = vadd.f32 0.0, %v3201
          %v3203 = vpop.f32.mrb[0].mxu0
          %3204 = vmatprep.mubr.f32.mxu0 0.0
          %3205 = vmatmul.mubr.f32.gmra.mrb[0].mxu0 %v3113
          %v3206 = vpop.f32.mrb[0].mxu0
          %v3207 = vadd.f32 0.0, %v3206
          %v3208 = vpop.f32.mrb[0].mxu0
          %3209 = vmatprep.mubr.f32.mxu0 0.0
          %3210 = vmatmul.mubr.f32.gmra.mrb[0].mxu0 %v3116
          %v3211 = vpop.f32.mrb[0].mxu0
          %v3212 = vadd.f32 0.0, %v3211
          %v3213 = vpop.f32.mrb[0].mxu0
          %3214 = vmatprep.mubr.f32.mxu0 0.0
          %3215 = vmatmul.mubr.f32.gmra.mrb[0].mxu0 %v3119
          %v3216 = vpop.f32.mrb[0].mxu0
          %v3217 = vadd.f32 0.0, %v3216
          %v3218 = vpop.f32.mrb[0].mxu0
          %3219 = vmatprep.mubr.f32.mxu0 0.0
          %3220 = vmatmul.mubr.f32.gmra.mrb[0].mxu0 %v3122
          %v3221 = vpop.f32.mrb[0].mxu0
          %v3222 = vadd.f32 0.0, %v3221
          %v3223 = vpop.f32.mrb[0].mxu0
          %3224 = vmatprep.mubr.f32.mxu0 0.0
          %3225 = vmatmul.mubr.f32.gmra.mrb[0].mxu0 %v3125
          %v3226 = vpop.f32.mrb[0].mxu0
          %v3227 = vadd.f32 0.0, %v3226
          %v3228 = vpop.f32.mrb[0].mxu0
          %3229 = vmatprep.mubr.f32.mxu0 0.0
          %3230 = vmatmul.mubr.f32.gmra.mrb[0].mxu0 %v3128
          %v3231 = vpop.f32.mrb[0].mxu0
          %v3232 = vadd.f32 0.0, %v3231
          %v3233 = vpop.f32.mrb[0].mxu0
          %3234 = vdwg.mxu0
          %v3236 = vsel %vm332, %v3082, 0
          %v3239 = vsel %vm332, %v3083, 0
          %v3242 = vsel %vm332, %v3084, 0
          %v3245 = vsel %vm332, %v3085, 0
          %v3248 = vsel %vm332, %v3086, 0
          %v3251 = vsel %vm332, %v3087, 0
          %v3254 = vsel %vm332, %v3088, 0
          %v3257 = vsel %vm332, %v3089, 0
          %3259 = vmatprep.subr.mxu0 0.0
          %3260 = vmatpush1.msra.mxu0 %v3090
          %3261 = vmatprep.subr.mxu0 0.0
          %3262 = vmatpush1.msra.mxu0 %v3091
          %3263 = vmatprep.subr.mxu0 0.0
          %3264 = vmatpush1.msra.mxu0 %v3092
          %3265 = vmatprep.subr.mxu0 0.0
          %3266 = vmatpush1.msra.mxu0 %v3093
          %3267 = vmatprep.subr.mxu0 0.0
          %3268 = vmatpush1.msra.mxu0 0.0
          %3269 = vmatprep.subr.mxu0 0.0
          %3270 = vmatpush1.msra.mxu0 0.0
          %3271 = vmatprep.subr.mxu0 0.0
          %3272 = vmatpush1.msra.mxu0 0.0
          %3273 = vmatprep.subr.mxu0 0.0
          %3274 = vmatpush1.msra.mxu0 0.0
          %3275 = vmatprep.subr.mxu0 0.0
          %3276 = vmatpush1.msra.mxu0 0.0
          %3277 = vmatprep.subr.mxu0 0.0
          %3278 = vmatpush1.msra.mxu0 0.0
          %3279 = vmatprep.subr.mxu0 0.0
          %3280 = vmatpush1.msra.mxu0 0.0
          %3281 = vmatprep.subr.mxu0 0.0
          %3282 = vmatpush1.msra.mxu0 0.0
          %3283 = vmatprep.subr.mxu0 0.0
          %3284 = vmatpush1.msra.mxu0 0.0
          %3285 = vmatprep.subr.mxu0 0.0
          %3286 = vmatpush1.msra.mxu0 0.0
          %3287 = vmatprep.subr.mxu0 0.0
          %3288 = vmatpush1.msra.mxu0 0.0
          %3289 = vmatprep.subr.mxu0 0.0
          %3290 = vmatpush1.msra.mxu0 0.0
          %3291 = vmatprep.subr.mxu0 0.0
          %3292 = vmatpush1.msra.mxu0 0.0
          %3293 = vmatprep.subr.mxu0 0.0
          %3294 = vmatpush1.msra.mxu0 0.0
          %3295 = vmatprep.subr.mxu0 0.0
          %3296 = vmatpush1.msra.mxu0 0.0
          %3297 = vmatprep.subr.mxu0 0.0
          %3298 = vmatpush1.msra.mxu0 0.0
          %3299 = vmatprep.subr.mxu0 0.0
          %3300 = vmatpush1.msra.mxu0 0.0
          %3301 = vmatprep.subr.mxu0 0.0
          %3302 = vmatpush1.msra.mxu0 0.0
          %3303 = vmatprep.subr.mxu0 0.0
          %3304 = vmatpush1.msra.mxu0 0.0
          %3305 = vmatprep.subr.mxu0 0.0
          %3306 = vmatpush1.msra.mxu0 0.0
          %3307 = vmatprep.subr.mxu0 0.0
          %3308 = vmatpush1.msra.mxu0 0.0
          %3309 = vmatprep.subr.mxu0 0.0
          %3310 = vmatpush1.msra.mxu0 0.0
          %3311 = vmatprep.subr.mxu0 0.0
          %3312 = vmatpush1.msra.mxu0 0.0
          %3313 = vmatprep.subr.mxu0 0.0
          %3314 = vmatpush1.msra.mxu0 0.0
          %3315 = vmatprep.subr.mxu0 0.0
          %3316 = vmatpush1.msra.mxu0 0.0
          %3317 = vmatprep.subr.mxu0 0.0
          %3318 = vmatpush1.msra.mxu0 0.0
          %3319 = vmatprep.subr.mxu0 0.0
          %3320 = vmatpush1.msra.mxu0 0.0
          %3321 = vmatprep.subr.mxu0 0.0
          %3322 = vmatpush1.msra.mxu0 0.0
          %3323 = vmatprep.mubr.f32.mxu0 0.0
          %3324 = vmatmul.mubr.f32.gmra.mrb[0].mxu0 %v3236
          %v3325 = vpop.f32.mrb[0].mxu0
          %v3326 = vadd.f32 %v3197, %v3325
          %v3327 = vpop.f32.mrb[0].mxu0
          %3328 = vmatprep.mubr.f32.mxu0 0.0
          %3329 = vmatmul.mubr.f32.gmra.mrb[0].mxu0 %v3239
          %v3330 = vpop.f32.mrb[0].mxu0
          %v3331 = vadd.f32 %v3202, %v3330
          %v3332 = vpop.f32.mrb[0].mxu0
          %3333 = vmatprep.mubr.f32.mxu0 0.0
          %3334 = vmatmul.mubr.f32.gmra.mrb[0].mxu0 %v3242
          %v3335 = vpop.f32.mrb[0].mxu0
          %v3336 = vadd.f32 %v3207, %v3335
          %v3337 = vpop.f32.mrb[0].mxu0
          %3338 = vmatprep.mubr.f32.mxu0 0.0
          %3339 = vmatmul.mubr.f32.gmra.mrb[0].mxu0 %v3245
          %v3340 = vpop.f32.mrb[0].mxu0
          %v3341 = vadd.f32 %v3212, %v3340
          %v3342 = vpop.f32.mrb[0].mxu0
          %3343 = vmatprep.mubr.f32.mxu0 0.0
          %3344 = vmatmul.mubr.f32.gmra.mrb[0].mxu0 %v3248
          %v3345 = vpop.f32.mrb[0].mxu0
          %v3346 = vadd.f32 %v3217, %v3345
          %v3347 = vpop.f32.mrb[0].mxu0
          %3348 = vmatprep.mubr.f32.mxu0 0.0
          %3349 = vmatmul.mubr.f32.gmra.mrb[0].mxu0 %v3251
          %v3350 = vpop.f32.mrb[0].mxu0
          %v3351 = vadd.f32 %v3222, %v3350
          %v3352 = vpop.f32.mrb[0].mxu0
          %3353 = vmatprep.mubr.f32.mxu0 0.0
          %3354 = vmatmul.mubr.f32.gmra.mrb[0].mxu0 %v3254
          %v3355 = vpop.f32.mrb[0].mxu0
          %v3356 = vadd.f32 %v3227, %v3355
          %v3357 = vpop.f32.mrb[0].mxu0
          %3358 = vmatprep.mubr.f32.mxu0 0.0
          %3359 = vmatmul.mubr.f32.gmra.mrb[0].mxu0 %v3257
          %v3360 = vpop.f32.mrb[0].mxu0
          %v3361 = vadd.f32 %v3232, %v3360
          %v3362 = vpop.f32.mrb[0].mxu0
          %3363 = vdwg.mxu0
          %v3364 = vld [vmem:[%s3081 + $0x9] sm:$0xff]
          %v3365 = vld [vmem:[%s3081 + $0x11] sm:$0xff]
          %v3366 = vld [vmem:[%s3081 + $0x29] sm:$0xff]
          %v3367 = vld [vmem:[%s3081 + $0x31] sm:$0xff]
          %v3368 = vld [vmem:[%s3081 + $0x49] sm:$0xff]
          %v3369 = vld [vmem:[%s3081 + $0x51] sm:$0xff]
          %v3370 = vld [vmem:[%s3081 + $0x69] sm:$0xff]
          %v3371 = vld [vmem:[%s3081 + $0x71] sm:$0xff]
          %v3372 = vld [vmem:[%s5 + $0x40] sm:$0xff]
          %v3373 = vld [vmem:[%s5 + $0x48] sm:$0xff]
          %v3374 = vld [vmem:[%s5 + $0x50] sm:$0xff]
          %v3375 = vld [vmem:[%s5 + $0x58] sm:$0xff]
          %v3377 = vsel %vm332, %v3364, 0
          %v3380 = vsel %vm332, %v3365, 0
          %v3383 = vsel %vm332, %v3366, 0
          %v3386 = vsel %vm332, %v3367, 0
          %v3389 = vsel %vm332, %v3368, 0
          %v3392 = vsel %vm332, %v3369, 0
          %v3395 = vsel %vm332, %v3370, 0
          %v3398 = vsel %vm332, %v3371, 0
          %3400 = vmatprep.subr.mxu0 0.0
          %3401 = vmatpush1.msra.mxu0 %v3372
          %3402 = vmatprep.subr.mxu0 0.0
          %3403 = vmatpush1.msra.mxu0 %v3373
          %3404 = vmatprep.subr.mxu0 0.0
          %3405 = vmatpush1.msra.mxu0 %v3374
          %3406 = vmatprep.subr.mxu0 0.0
          %3407 = vmatpush1.msra.mxu0 %v3375
          %3408 = vmatprep.subr.mxu0 0.0
          %3409 = vmatpush1.msra.mxu0 0.0
          %3410 = vmatprep.subr.mxu0 0.0
          %3411 = vmatpush1.msra.mxu0 0.0
          %3412 = vmatprep.subr.mxu0 0.0
          %3413 = vmatpush1.msra.mxu0 0.0
          %3414 = vmatprep.subr.mxu0 0.0
          %3415 = vmatpush1.msra.mxu0 0.0
          %3416 = vmatprep.subr.mxu0 0.0
          %3417 = vmatpush1.msra.mxu0 0.0
          %3418 = vmatprep.subr.mxu0 0.0
          %3419 = vmatpush1.msra.mxu0 0.0
          %3420 = vmatprep.subr.mxu0 0.0
          %3421 = vmatpush1.msra.mxu0 0.0
          %3422 = vmatprep.subr.mxu0 0.0
          %3423 = vmatpush1.msra.mxu0 0.0
          %3424 = vmatprep.subr.mxu0 0.0
          %3425 = vmatpush1.msra.mxu0 0.0
          %3426 = vmatprep.subr.mxu0 0.0
          %3427 = vmatpush1.msra.mxu0 0.0
          %3428 = vmatprep.subr.mxu0 0.0
          %3429 = vmatpush1.msra.mxu0 0.0
          %3430 = vmatprep.subr.mxu0 0.0
          %3431 = vmatpush1.msra.mxu0 0.0
          %3432 = vmatprep.subr.mxu0 0.0
          %3433 = vmatpush1.msra.mxu0 0.0
          %3434 = vmatprep.subr.mxu0 0.0
          %3435 = vmatpush1.msra.mxu0 0.0
          %3436 = vmatprep.subr.mxu0 0.0
          %3437 = vmatpush1.msra.mxu0 0.0
          %3438 = vmatprep.subr.mxu0 0.0
          %3439 = vmatpush1.msra.mxu0 0.0
          %3440 = vmatprep.subr.mxu0 0.0
          %3441 = vmatpush1.msra.mxu0 0.0
          %3442 = vmatprep.subr.mxu0 0.0
          %3443 = vmatpush1.msra.mxu0 0.0
          %3444 = vmatprep.subr.mxu0 0.0
          %3445 = vmatpush1.msra.mxu0 0.0
          %3446 = vmatprep.subr.mxu0 0.0
          %3447 = vmatpush1.msra.mxu0 0.0
          %3448 = vmatprep.subr.mxu0 0.0
          %3449 = vmatpush1.msra.mxu0 0.0
          %3450 = vmatprep.subr.mxu0 0.0
          %3451 = vmatpush1.msra.mxu0 0.0
          %3452 = vmatprep.subr.mxu0 0.0
          %3453 = vmatpush1.msra.mxu0 0.0
          %3454 = vmatprep.subr.mxu0 0.0
          %3455 = vmatpush1.msra.mxu0 0.0
          %3456 = vmatprep.subr.mxu0 0.0
          %3457 = vmatpush1.msra.mxu0 0.0
          %3458 = vmatprep.subr.mxu0 0.0
          %3459 = vmatpush1.msra.mxu0 0.0
          %3460 = vmatprep.subr.mxu0 0.0
          %3461 = vmatpush1.msra.mxu0 0.0
          %3462 = vmatprep.subr.mxu0 0.0
          %3463 = vmatpush1.msra.mxu0 0.0
          %3464 = vmatprep.mubr.f32.mxu0 0.0
          %3465 = vmatmul.mubr.f32.gmra.mrb[0].mxu0 %v3377
          %v3466 = vpop.f32.mrb[0].mxu0
          %v3467 = vadd.f32 0.0, %v3466
          %v3468 = vpop.f32.mrb[0].mxu0
          %3469 = vmatprep.mubr.f32.mxu0 0.0
          %3470 = vmatmul.mubr.f32.gmra.mrb[0].mxu0 %v3380
          %v3471 = vpop.f32.mrb[0].mxu0
          %v3472 = vadd.f32 0.0, %v3471
          %v3473 = vpop.f32.mrb[0].mxu0
          %3474 = vmatprep.mubr.f32.mxu0 0.0
          %3475 = vmatmul.mubr.f32.gmra.mrb[0].mxu0 %v3383
          %v3476 = vpop.f32.mrb[0].mxu0
          %v3477 = vadd.f32 0.0, %v3476
          %v3478 = vpop.f32.mrb[0].mxu0
          %3479 = vmatprep.mubr.f32.mxu0 0.0
          %3480 = vmatmul.mubr.f32.gmra.mrb[0].mxu0 %v3386
          %v3481 = vpop.f32.mrb[0].mxu0
          %v3482 = vadd.f32 0.0, %v3481
          %v3483 = vpop.f32.mrb[0].mxu0
          %3484 = vmatprep.mubr.f32.mxu0 0.0
          %3485 = vmatmul.mubr.f32.gmra.mrb[0].mxu0 %v3389
          %v3486 = vpop.f32.mrb[0].mxu0
          %v3487 = vadd.f32 0.0, %v3486
          %v3488 = vpop.f32.mrb[0].mxu0
          %3489 = vmatprep.mubr.f32.mxu0 0.0
          %3490 = vmatmul.mubr.f32.gmra.mrb[0].mxu0 %v3392
          %v3491 = vpop.f32.mrb[0].mxu0
          %v3492 = vadd.f32 0.0, %v3491
          %v3493 = vpop.f32.mrb[0].mxu0
          %3494 = vmatprep.mubr.f32.mxu0 0.0
          %3495 = vmatmul.mubr.f32.gmra.mrb[0].mxu0 %v3395
          %v3496 = vpop.f32.mrb[0].mxu0
          %v3497 = vadd.f32 0.0, %v3496
          %v3498 = vpop.f32.mrb[0].mxu0
          %3499 = vmatprep.mubr.f32.mxu0 0.0
          %3500 = vmatmul.mubr.f32.gmra.mrb[0].mxu0 %v3398
          %v3501 = vpop.f32.mrb[0].mxu0
          %v3502 = vadd.f32 0.0, %v3501
          %v3503 = vpop.f32.mrb[0].mxu0
          %3504 = vdwg.mxu0
          %v3505 = vadd.f32 %v3326, %v3467
          %v3506 = vadd.f32 %v3331, %v3472
          %v3507 = vadd.f32 %v3336, %v3477
          %v3508 = vadd.f32 %v3341, %v3482
          %v3509 = vadd.f32 %v3346, %v3487
          %v3510 = vadd.f32 %v3351, %v3492
          %v3511 = vadd.f32 %v3356, %v3497
          %v3512 = vadd.f32 %v3361, %v3502
          %s3513 = sadd.s32 %s3079, 1
          %s3514 = smul.u32 %s3513, 32
          %s3515 = scalar_lea.vmem [#allocation3], %s3514
          %v3516 = vld [vmem:[%s3515 + $0x7] sm:$0xff]
          %v3517 = vld [vmem:[%s3515 + $0xf] sm:$0xff]
          %v3518 = vld [vmem:[%s3515 + $0x27] sm:$0xff]
          %v3519 = vld [vmem:[%s3515 + $0x2f] sm:$0xff]
          %v3520 = vld [vmem:[%s3515 + $0x47] sm:$0xff]
          %v3521 = vld [vmem:[%s3515 + $0x4f] sm:$0xff]
          %v3522 = vld [vmem:[%s3515 + $0x67] sm:$0xff]
          %v3523 = vld [vmem:[%s3515 + $0x6f] sm:$0xff]
          %v3524 = vld [vmem:[%s5 + $0x60] sm:$0xff]
          %v3525 = vld [vmem:[%s5 + $0x68] sm:$0xff]
          %v3526 = vld [vmem:[%s5 + $0x70] sm:$0xff]
          %v3527 = vld [vmem:[%s5 + $0x78] sm:$0xff]
          %v3529 = vsel %vm332, %v3516, 0
          %v3532 = vsel %vm332, %v3517, 0
          %v3535 = vsel %vm332, %v3518, 0
          %v3538 = vsel %vm332, %v3519, 0
          %v3541 = vsel %vm332, %v3520, 0
          %v3544 = vsel %vm332, %v3521, 0
          %v3547 = vsel %vm332, %v3522, 0
          %v3550 = vsel %vm332, %v3523, 0
          %3552 = vmatprep.subr.mxu0 0.0
          %3553 = vmatpush1.msra.mxu0 %v3524
          %3554 = vmatprep.subr.mxu0 0.0
          %3555 = vmatpush1.msra.mxu0 %v3525
          %3556 = vmatprep.subr.mxu0 0.0
          %3557 = vmatpush1.msra.mxu0 %v3526
          %3558 = vmatprep.subr.mxu0 0.0
          %3559 = vmatpush1.msra.mxu0 %v3527
          %3560 = vmatprep.subr.mxu0 0.0
          %3561 = vmatpush1.msra.mxu0 0.0
          %3562 = vmatprep.subr.mxu0 0.0
          %3563 = vmatpush1.msra.mxu0 0.0
          %3564 = vmatprep.subr.mxu0 0.0
          %3565 = vmatpush1.msra.mxu0 0.0
          %3566 = vmatprep.subr.mxu0 0.0
          %3567 = vmatpush1.msra.mxu0 0.0
          %3568 = vmatprep.subr.mxu0 0.0
          %3569 = vmatpush1.msra.mxu0 0.0
          %3570 = vmatprep.subr.mxu0 0.0
          %3571 = vmatpush1.msra.mxu0 0.0
          %3572 = vmatprep.subr.mxu0 0.0
          %3573 = vmatpush1.msra.mxu0 0.0
          %3574 = vmatprep.subr.mxu0 0.0
          %3575 = vmatpush1.msra.mxu0 0.0
          %3576 = vmatprep.subr.mxu0 0.0
          %3577 = vmatpush1.msra.mxu0 0.0
          %3578 = vmatprep.subr.mxu0 0.0
          %3579 = vmatpush1.msra.mxu0 0.0
          %3580 = vmatprep.subr.mxu0 0.0
          %3581 = vmatpush1.msra.mxu0 0.0
          %3582 = vmatprep.subr.mxu0 0.0
          %3583 = vmatpush1.msra.mxu0 0.0
          %3584 = vmatprep.subr.mxu0 0.0
          %3585 = vmatpush1.msra.mxu0 0.0
          %3586 = vmatprep.subr.mxu0 0.0
          %3587 = vmatpush1.msra.mxu0 0.0
          %3588 = vmatprep.subr.mxu0 0.0
          %3589 = vmatpush1.msra.mxu0 0.0
          %3590 = vmatprep.subr.mxu0 0.0
          %3591 = vmatpush1.msra.mxu0 0.0
          %3592 = vmatprep.subr.mxu0 0.0
          %3593 = vmatpush1.msra.mxu0 0.0
          %3594 = vmatprep.subr.mxu0 0.0
          %3595 = vmatpush1.msra.mxu0 0.0
          %3596 = vmatprep.subr.mxu0 0.0
          %3597 = vmatpush1.msra.mxu0 0.0
          %3598 = vmatprep.subr.mxu0 0.0
          %3599 = vmatpush1.msra.mxu0 0.0
          %3600 = vmatprep.subr.mxu0 0.0
          %3601 = vmatpush1.msra.mxu0 0.0
          %3602 = vmatprep.subr.mxu0 0.0
          %3603 = vmatpush1.msra.mxu0 0.0
          %3604 = vmatprep.subr.mxu0 0.0
          %3605 = vmatpush1.msra.mxu0 0.0
          %3606 = vmatprep.subr.mxu0 0.0
          %3607 = vmatpush1.msra.mxu0 0.0
          %3608 = vmatprep.subr.mxu0 0.0
          %3609 = vmatpush1.msra.mxu0 0.0
          %3610 = vmatprep.subr.mxu0 0.0
          %3611 = vmatpush1.msra.mxu0 0.0
          %3612 = vmatprep.subr.mxu0 0.0
          %3613 = vmatpush1.msra.mxu0 0.0
          %3614 = vmatprep.subr.mxu0 0.0
          %3615 = vmatpush1.msra.mxu0 0.0
          %3616 = vmatprep.mubr.f32.mxu0 0.0
          %3617 = vmatmul.mubr.f32.gmra.mrb[0].mxu0 %v3529
          %v3618 = vpop.f32.mrb[0].mxu0
          %v3619 = vadd.f32 0.0, %v3618
          %v3620 = vpop.f32.mrb[0].mxu0
          %3621 = vmatprep.mubr.f32.mxu0 0.0
          %3622 = vmatmul.mubr.f32.gmra.mrb[0].mxu0 %v3532
          %v3623 = vpop.f32.mrb[0].mxu0
          %v3624 = vadd.f32 0.0, %v3623
          %v3625 = vpop.f32.mrb[0].mxu0
          %3626 = vmatprep.mubr.f32.mxu0 0.0
          %3627 = vmatmul.mubr.f32.gmra.mrb[0].mxu0 %v3535
          %v3628 = vpop.f32.mrb[0].mxu0
          %v3629 = vadd.f32 0.0, %v3628
          %v3630 = vpop.f32.mrb[0].mxu0
          %3631 = vmatprep.mubr.f32.mxu0 0.0
          %3632 = vmatmul.mubr.f32.gmra.mrb[0].mxu0 %v3538
          %v3633 = vpop.f32.mrb[0].mxu0
          %v3634 = vadd.f32 0.0, %v3633
          %v3635 = vpop.f32.mrb[0].mxu0
          %3636 = vmatprep.mubr.f32.mxu0 0.0
          %3637 = vmatmul.mubr.f32.gmra.mrb[0].mxu0 %v3541
          %v3638 = vpop.f32.mrb[0].mxu0
          %v3639 = vadd.f32 0.0, %v3638
          %v3640 = vpop.f32.mrb[0].mxu0
          %3641 = vmatprep.mubr.f32.mxu0 0.0
          %3642 = vmatmul.mubr.f32.gmra.mrb[0].mxu0 %v3544
          %v3643 = vpop.f32.mrb[0].mxu0
          %v3644 = vadd.f32 0.0, %v3643
          %v3645 = vpop.f32.mrb[0].mxu0
          %3646 = vmatprep.mubr.f32.mxu0 0.0
          %3647 = vmatmul.mubr.f32.gmra.mrb[0].mxu0 %v3547
          %v3648 = vpop.f32.mrb[0].mxu0
          %v3649 = vadd.f32 0.0, %v3648
          %v3650 = vpop.f32.mrb[0].mxu0
          %3651 = vmatprep.mubr.f32.mxu0 0.0
          %3652 = vmatmul.mubr.f32.gmra.mrb[0].mxu0 %v3550
          %v3653 = vpop.f32.mrb[0].mxu0
          %v3654 = vadd.f32 0.0, %v3653
          %v3655 = vpop.f32.mrb[0].mxu0
          %3656 = vdwg.mxu0
          %v3657 = vadd.f32 %v3505, %v3619
          %v3658 = vadd.f32 %v3506, %v3624
          %v3659 = vadd.f32 %v3507, %v3629
          %v3660 = vadd.f32 %v3508, %v3634
          %v3661 = vadd.f32 %v3509, %v3639
          %v3662 = vadd.f32 %v3510, %v3644
          %v3663 = vadd.f32 %v3511, %v3649
          %v3664 = vadd.f32 %v3512, %v3654
          %v3665 = vld [vmem:[%s3515 + $0x8] sm:$0xff]
          %v3666 = vld [vmem:[%s3515 + $0x10] sm:$0xff]
          %v3667 = vld [vmem:[%s3515 + $0x28] sm:$0xff]
          %v3668 = vld [vmem:[%s3515 + $0x30] sm:$0xff]
          %v3669 = vld [vmem:[%s3515 + $0x48] sm:$0xff]
          %v3670 = vld [vmem:[%s3515 + $0x50] sm:$0xff]
          %v3671 = vld [vmem:[%s3515 + $0x68] sm:$0xff]
          %v3672 = vld [vmem:[%s3515 + $0x70] sm:$0xff]
          %v3673 = vld [vmem:[%s5 + $0x80] sm:$0xff]
          %v3674 = vld [vmem:[%s5 + $0x88] sm:$0xff]
          %v3675 = vld [vmem:[%s5 + $0x90] sm:$0xff]
          %v3676 = vld [vmem:[%s5 + $0x98] sm:$0xff]
          %v3678 = vsel %vm332, %v3665, 0
          %v3681 = vsel %vm332, %v3666, 0
          %v3684 = vsel %vm332, %v3667, 0
          %v3687 = vsel %vm332, %v3668, 0
          %v3690 = vsel %vm332, %v3669, 0
          %v3693 = vsel %vm332, %v3670, 0
          %v3696 = vsel %vm332, %v3671, 0
          %v3699 = vsel %vm332, %v3672, 0
          %3701 = vmatprep.subr.mxu0 0.0
          %3702 = vmatpush1.msra.mxu0 %v3673
          %3703 = vmatprep.subr.mxu0 0.0
          %3704 = vmatpush1.msra.mxu0 %v3674
          %3705 = vmatprep.subr.mxu0 0.0
          %3706 = vmatpush1.msra.mxu0 %v3675
          %3707 = vmatprep.subr.mxu0 0.0
          %3708 = vmatpush1.msra.mxu0 %v3676
          %3709 = vmatprep.subr.mxu0 0.0
          %3710 = vmatpush1.msra.mxu0 0.0
          %3711 = vmatprep.subr.mxu0 0.0
          %3712 = vmatpush1.msra.mxu0 0.0
          %3713 = vmatprep.subr.mxu0 0.0
          %3714 = vmatpush1.msra.mxu0 0.0
          %3715 = vmatprep.subr.mxu0 0.0
          %3716 = vmatpush1.msra.mxu0 0.0
          %3717 = vmatprep.subr.mxu0 0.0
          %3718 = vmatpush1.msra.mxu0 0.0
          %3719 = vmatprep.subr.mxu0 0.0
          %3720 = vmatpush1.msra.mxu0 0.0
          %3721 = vmatprep.subr.mxu0 0.0
          %3722 = vmatpush1.msra.mxu0 0.0
          %3723 = vmatprep.subr.mxu0 0.0
          %3724 = vmatpush1.msra.mxu0 0.0
          %3725 = vmatprep.subr.mxu0 0.0
          %3726 = vmatpush1.msra.mxu0 0.0
          %3727 = vmatprep.subr.mxu0 0.0
          %3728 = vmatpush1.msra.mxu0 0.0
          %3729 = vmatprep.subr.mxu0 0.0
          %3730 = vmatpush1.msra.mxu0 0.0
          %3731 = vmatprep.subr.mxu0 0.0
          %3732 = vmatpush1.msra.mxu0 0.0
          %3733 = vmatprep.subr.mxu0 0.0
          %3734 = vmatpush1.msra.mxu0 0.0
          %3735 = vmatprep.subr.mxu0 0.0
          %3736 = vmatpush1.msra.mxu0 0.0
          %3737 = vmatprep.subr.mxu0 0.0
          %3738 = vmatpush1.msra.mxu0 0.0
          %3739 = vmatprep.subr.mxu0 0.0
          %3740 = vmatpush1.msra.mxu0 0.0
          %3741 = vmatprep.subr.mxu0 0.0
          %3742 = vmatpush1.msra.mxu0 0.0
          %3743 = vmatprep.subr.mxu0 0.0
          %3744 = vmatpush1.msra.mxu0 0.0
          %3745 = vmatprep.subr.mxu0 0.0
          %3746 = vmatpush1.msra.mxu0 0.0
          %3747 = vmatprep.subr.mxu0 0.0
          %3748 = vmatpush1.msra.mxu0 0.0
          %3749 = vmatprep.subr.mxu0 0.0
          %3750 = vmatpush1.msra.mxu0 0.0
          %3751 = vmatprep.subr.mxu0 0.0
          %3752 = vmatpush1.msra.mxu0 0.0
          %3753 = vmatprep.subr.mxu0 0.0
          %3754 = vmatpush1.msra.mxu0 0.0
          %3755 = vmatprep.subr.mxu0 0.0
          %3756 = vmatpush1.msra.mxu0 0.0
          %3757 = vmatprep.subr.mxu0 0.0
          %3758 = vmatpush1.msra.mxu0 0.0
          %3759 = vmatprep.subr.mxu0 0.0
          %3760 = vmatpush1.msra.mxu0 0.0
          %3761 = vmatprep.subr.mxu0 0.0
          %3762 = vmatpush1.msra.mxu0 0.0
          %3763 = vmatprep.subr.mxu0 0.0
          %3764 = vmatpush1.msra.mxu0 0.0
          %3765 = vmatprep.mubr.f32.mxu0 0.0
          %3766 = vmatmul.mubr.f32.gmra.mrb[0].mxu0 %v3678
          %v3767 = vpop.f32.mrb[0].mxu0
          %v3768 = vadd.f32 0.0, %v3767
          %v3769 = vpop.f32.mrb[0].mxu0
          %3770 = vmatprep.mubr.f32.mxu0 0.0
          %3771 = vmatmul.mubr.f32.gmra.mrb[0].mxu0 %v3681
          %v3772 = vpop.f32.mrb[0].mxu0
          %v3773 = vadd.f32 0.0, %v3772
          %v3774 = vpop.f32.mrb[0].mxu0
          %3775 = vmatprep.mubr.f32.mxu0 0.0
          %3776 = vmatmul.mubr.f32.gmra.mrb[0].mxu0 %v3684
          %v3777 = vpop.f32.mrb[0].mxu0
          %v3778 = vadd.f32 0.0, %v3777
          %v3779 = vpop.f32.mrb[0].mxu0
          %3780 = vmatprep.mubr.f32.mxu0 0.0
          %3781 = vmatmul.mubr.f32.gmra.mrb[0].mxu0 %v3687
          %v3782 = vpop.f32.mrb[0].mxu0
          %v3783 = vadd.f32 0.0, %v3782
          %v3784 = vpop.f32.mrb[0].mxu0
          %3785 = vmatprep.mubr.f32.mxu0 0.0
          %3786 = vmatmul.mubr.f32.gmra.mrb[0].mxu0 %v3690
          %v3787 = vpop.f32.mrb[0].mxu0
          %v3788 = vadd.f32 0.0, %v3787
          %v3789 = vpop.f32.mrb[0].mxu0
          %3790 = vmatprep.mubr.f32.mxu0 0.0
          %3791 = vmatmul.mubr.f32.gmra.mrb[0].mxu0 %v3693
          %v3792 = vpop.f32.mrb[0].mxu0
          %v3793 = vadd.f32 0.0, %v3792
          %v3794 = vpop.f32.mrb[0].mxu0
          %3795 = vmatprep.mubr.f32.mxu0 0.0
          %3796 = vmatmul.mubr.f32.gmra.mrb[0].mxu0 %v3696
          %v3797 = vpop.f32.mrb[0].mxu0
          %v3798 = vadd.f32 0.0, %v3797
          %v3799 = vpop.f32.mrb[0].mxu0
          %3800 = vmatprep.mubr.f32.mxu0 0.0
          %3801 = vmatmul.mubr.f32.gmra.mrb[0].mxu0 %v3699
          %v3802 = vpop.f32.mrb[0].mxu0
          %v3803 = vadd.f32 0.0, %v3802
          %v3804 = vpop.f32.mrb[0].mxu0
          %3805 = vdwg.mxu0
          %v3806 = vadd.f32 %v3657, %v3768
          %v3807 = vadd.f32 %v3658, %v3773
          %v3808 = vadd.f32 %v3659, %v3778
          %v3809 = vadd.f32 %v3660, %v3783
          %v3810 = vadd.f32 %v3661, %v3788
          %v3811 = vadd.f32 %v3662, %v3793
          %v3812 = vadd.f32 %v3663, %v3798
          %v3813 = vadd.f32 %v3664, %v3803
          %v3814 = vld [vmem:[%s3515 + $0x9] sm:$0xff]
          %v3815 = vld [vmem:[%s3515 + $0x11] sm:$0xff]
          %v3816 = vld [vmem:[%s3515 + $0x29] sm:$0xff]
          %v3817 = vld [vmem:[%s3515 + $0x31] sm:$0xff]
          %v3818 = vld [vmem:[%s3515 + $0x49] sm:$0xff]
          %v3819 = vld [vmem:[%s3515 + $0x51] sm:$0xff]
          %v3820 = vld [vmem:[%s3515 + $0x69] sm:$0xff]
          %v3821 = vld [vmem:[%s3515 + $0x71] sm:$0xff]
          %v3822 = vld [vmem:[%s5 + $0xa0] sm:$0xff]
          %v3823 = vld [vmem:[%s5 + $0xa8] sm:$0xff]
          %v3824 = vld [vmem:[%s5 + $0xb0] sm:$0xff]
          %v3825 = vld [vmem:[%s5 + $0xb8] sm:$0xff]
          %v3827 = vsel %vm332, %v3814, 0
          %v3830 = vsel %vm332, %v3815, 0
          %v3833 = vsel %vm332, %v3816, 0
          %v3836 = vsel %vm332, %v3817, 0
          %v3839 = vsel %vm332, %v3818, 0
          %v3842 = vsel %vm332, %v3819, 0
          %v3845 = vsel %vm332, %v3820, 0
          %v3848 = vsel %vm332, %v3821, 0
          %3850 = vmatprep.subr.mxu0 0.0
          %3851 = vmatpush1.msra.mxu0 %v3822
          %3852 = vmatprep.subr.mxu0 0.0
          %3853 = vmatpush1.msra.mxu0 %v3823
          %3854 = vmatprep.subr.mxu0 0.0
          %3855 = vmatpush1.msra.mxu0 %v3824
          %3856 = vmatprep.subr.mxu0 0.0
          %3857 = vmatpush1.msra.mxu0 %v3825
          %3858 = vmatprep.subr.mxu0 0.0
          %3859 = vmatpush1.msra.mxu0 0.0
          %3860 = vmatprep.subr.mxu0 0.0
          %3861 = vmatpush1.msra.mxu0 0.0
          %3862 = vmatprep.subr.mxu0 0.0
          %3863 = vmatpush1.msra.mxu0 0.0
          %3864 = vmatprep.subr.mxu0 0.0
          %3865 = vmatpush1.msra.mxu0 0.0
          %3866 = vmatprep.subr.mxu0 0.0
          %3867 = vmatpush1.msra.mxu0 0.0
          %3868 = vmatprep.subr.mxu0 0.0
          %3869 = vmatpush1.msra.mxu0 0.0
          %3870 = vmatprep.subr.mxu0 0.0
          %3871 = vmatpush1.msra.mxu0 0.0
          %3872 = vmatprep.subr.mxu0 0.0
          %3873 = vmatpush1.msra.mxu0 0.0
          %3874 = vmatprep.subr.mxu0 0.0
          %3875 = vmatpush1.msra.mxu0 0.0
          %3876 = vmatprep.subr.mxu0 0.0
          %3877 = vmatpush1.msra.mxu0 0.0
          %3878 = vmatprep.subr.mxu0 0.0
          %3879 = vmatpush1.msra.mxu0 0.0
          %3880 = vmatprep.subr.mxu0 0.0
          %3881 = vmatpush1.msra.mxu0 0.0
          %3882 = vmatprep.subr.mxu0 0.0
          %3883 = vmatpush1.msra.mxu0 0.0
          %3884 = vmatprep.subr.mxu0 0.0
          %3885 = vmatpush1.msra.mxu0 0.0
          %3886 = vmatprep.subr.mxu0 0.0
          %3887 = vmatpush1.msra.mxu0 0.0
          %3888 = vmatprep.subr.mxu0 0.0
          %3889 = vmatpush1.msra.mxu0 0.0
          %3890 = vmatprep.subr.mxu0 0.0
          %3891 = vmatpush1.msra.mxu0 0.0
          %3892 = vmatprep.subr.mxu0 0.0
          %3893 = vmatpush1.msra.mxu0 0.0
          %3894 = vmatprep.subr.mxu0 0.0
          %3895 = vmatpush1.msra.mxu0 0.0
          %3896 = vmatprep.subr.mxu0 0.0
          %3897 = vmatpush1.msra.mxu0 0.0
          %3898 = vmatprep.subr.mxu0 0.0
          %3899 = vmatpush1.msra.mxu0 0.0
          %3900 = vmatprep.subr.mxu0 0.0
          %3901 = vmatpush1.msra.mxu0 0.0
          %3902 = vmatprep.subr.mxu0 0.0
          %3903 = vmatpush1.msra.mxu0 0.0
          %3904 = vmatprep.subr.mxu0 0.0
          %3905 = vmatpush1.msra.mxu0 0.0
          %3906 = vmatprep.subr.mxu0 0.0
          %3907 = vmatpush1.msra.mxu0 0.0
          %3908 = vmatprep.subr.mxu0 0.0
          %3909 = vmatpush1.msra.mxu0 0.0
          %3910 = vmatprep.subr.mxu0 0.0
          %3911 = vmatpush1.msra.mxu0 0.0
          %3912 = vmatprep.subr.mxu0 0.0
          %3913 = vmatpush1.msra.mxu0 0.0
          %3914 = vmatprep.mubr.f32.mxu0 0.0
          %3915 = vmatmul.mubr.f32.gmra.mrb[0].mxu0 %v3827
          %v3916 = vpop.f32.mrb[0].mxu0
          %v3917 = vadd.f32 0.0, %v3916
          %v3918 = vpop.f32.mrb[0].mxu0
          %3919 = vmatprep.mubr.f32.mxu0 0.0
          %3920 = vmatmul.mubr.f32.gmra.mrb[0].mxu0 %v3830
          %v3921 = vpop.f32.mrb[0].mxu0
          %v3922 = vadd.f32 0.0, %v3921
          %v3923 = vpop.f32.mrb[0].mxu0
          %3924 = vmatprep.mubr.f32.mxu0 0.0
          %3925 = vmatmul.mubr.f32.gmra.mrb[0].mxu0 %v3833
          %v3926 = vpop.f32.mrb[0].mxu0
          %v3927 = vadd.f32 0.0, %v3926
          %v3928 = vpop.f32.mrb[0].mxu0
          %3929 = vmatprep.mubr.f32.mxu0 0.0
          %3930 = vmatmul.mubr.f32.gmra.mrb[0].mxu0 %v3836
          %v3931 = vpop.f32.mrb[0].mxu0
          %v3932 = vadd.f32 0.0, %v3931
          %v3933 = vpop.f32.mrb[0].mxu0
          %3934 = vmatprep.mubr.f32.mxu0 0.0
          %3935 = vmatmul.mubr.f32.gmra.mrb[0].mxu0 %v3839
          %v3936 = vpop.f32.mrb[0].mxu0
          %v3937 = vadd.f32 0.0, %v3936
          %v3938 = vpop.f32.mrb[0].mxu0
          %3939 = vmatprep.mubr.f32.mxu0 0.0
          %3940 = vmatmul.mubr.f32.gmra.mrb[0].mxu0 %v3842
          %v3941 = vpop.f32.mrb[0].mxu0
          %v3942 = vadd.f32 0.0, %v3941
          %v3943 = vpop.f32.mrb[0].mxu0
          %3944 = vmatprep.mubr.f32.mxu0 0.0
          %3945 = vmatmul.mubr.f32.gmra.mrb[0].mxu0 %v3845
          %v3946 = vpop.f32.mrb[0].mxu0
          %v3947 = vadd.f32 0.0, %v3946
          %v3948 = vpop.f32.mrb[0].mxu0
          %3949 = vmatprep.mubr.f32.mxu0 0.0
          %3950 = vmatmul.mubr.f32.gmra.mrb[0].mxu0 %v3848
          %v3951 = vpop.f32.mrb[0].mxu0
          %v3952 = vadd.f32 0.0, %v3951
          %v3953 = vpop.f32.mrb[0].mxu0
          %3954 = vdwg.mxu0
          %v3955 = vadd.f32 %v3806, %v3917
          %v3956 = vadd.f32 %v3807, %v3922
          %v3957 = vadd.f32 %v3808, %v3927
          %v3958 = vadd.f32 %v3809, %v3932
          %v3959 = vadd.f32 %v3810, %v3937
          %v3960 = vadd.f32 %v3811, %v3942
          %v3961 = vadd.f32 %v3812, %v3947
          %v3962 = vadd.f32 %v3813, %v3952
          %s3963 = sadd.s32 %s3079, 2
          %s3964 = smul.u32 %s3963, 32
          %s3965 = scalar_lea.vmem [#allocation3], %s3964
          %v3966 = vld [vmem:[%s3965 + $0x7] sm:$0xff]
          %v3967 = vld [vmem:[%s3965 + $0xf] sm:$0xff]
          %v3968 = vld [vmem:[%s3965 + $0x27] sm:$0xff]
          %v3969 = vld [vmem:[%s3965 + $0x2f] sm:$0xff]
          %v3970 = vld [vmem:[%s3965 + $0x47] sm:$0xff]
          %v3971 = vld [vmem:[%s3965 + $0x4f] sm:$0xff]
          %v3972 = vld [vmem:[%s3965 + $0x67] sm:$0xff]
          %v3973 = vld [vmem:[%s3965 + $0x6f] sm:$0xff]
          %v3974 = vld [vmem:[%s5 + $0xc0] sm:$0xff]
          %v3975 = vld [vmem:[%s5 + $0xc8] sm:$0xff]
          %v3976 = vld [vmem:[%s5 + $0xd0] sm:$0xff]
          %v3977 = vld [vmem:[%s5 + $0xd8] sm:$0xff]
          %v3979 = vsel %vm332, %v3966, 0
          %v3982 = vsel %vm332, %v3967, 0
          %v3985 = vsel %vm332, %v3968, 0
          %v3988 = vsel %vm332, %v3969, 0
          %v3991 = vsel %vm332, %v3970, 0
          %v3994 = vsel %vm332, %v3971, 0
          %v3997 = vsel %vm332, %v3972, 0
          %v4000 = vsel %vm332, %v3973, 0
          %4002 = vmatprep.subr.mxu0 0.0
          %4003 = vmatpush1.msra.mxu0 %v3974
          %4004 = vmatprep.subr.mxu0 0.0
          %4005 = vmatpush1.msra.mxu0 %v3975
          %4006 = vmatprep.subr.mxu0 0.0
          %4007 = vmatpush1.msra.mxu0 %v3976
          %4008 = vmatprep.subr.mxu0 0.0
          %4009 = vmatpush1.msra.mxu0 %v3977
          %4010 = vmatprep.subr.mxu0 0.0
          %4011 = vmatpush1.msra.mxu0 0.0
          %4012 = vmatprep.subr.mxu0 0.0
          %4013 = vmatpush1.msra.mxu0 0.0
          %4014 = vmatprep.subr.mxu0 0.0
          %4015 = vmatpush1.msra.mxu0 0.0
          %4016 = vmatprep.subr.mxu0 0.0
          %4017 = vmatpush1.msra.mxu0 0.0
          %4018 = vmatprep.subr.mxu0 0.0
          %4019 = vmatpush1.msra.mxu0 0.0
          %4020 = vmatprep.subr.mxu0 0.0
          %4021 = vmatpush1.msra.mxu0 0.0
          %4022 = vmatprep.subr.mxu0 0.0
          %4023 = vmatpush1.msra.mxu0 0.0
          %4024 = vmatprep.subr.mxu0 0.0
          %4025 = vmatpush1.msra.mxu0 0.0
          %4026 = vmatprep.subr.mxu0 0.0
          %4027 = vmatpush1.msra.mxu0 0.0
          %4028 = vmatprep.subr.mxu0 0.0
          %4029 = vmatpush1.msra.mxu0 0.0
          %4030 = vmatprep.subr.mxu0 0.0
          %4031 = vmatpush1.msra.mxu0 0.0
          %4032 = vmatprep.subr.mxu0 0.0
          %4033 = vmatpush1.msra.mxu0 0.0
          %4034 = vmatprep.subr.mxu0 0.0
          %4035 = vmatpush1.msra.mxu0 0.0
          %4036 = vmatprep.subr.mxu0 0.0
          %4037 = vmatpush1.msra.mxu0 0.0
          %4038 = vmatprep.subr.mxu0 0.0
          %4039 = vmatpush1.msra.mxu0 0.0
          %4040 = vmatprep.subr.mxu0 0.0
          %4041 = vmatpush1.msra.mxu0 0.0
          %4042 = vmatprep.subr.mxu0 0.0
          %4043 = vmatpush1.msra.mxu0 0.0
          %4044 = vmatprep.subr.mxu0 0.0
          %4045 = vmatpush1.msra.mxu0 0.0
          %4046 = vmatprep.subr.mxu0 0.0
          %4047 = vmatpush1.msra.mxu0 0.0
          %4048 = vmatprep.subr.mxu0 0.0
          %4049 = vmatpush1.msra.mxu0 0.0
          %4050 = vmatprep.subr.mxu0 0.0
          %4051 = vmatpush1.msra.mxu0 0.0
          %4052 = vmatprep.subr.mxu0 0.0
          %4053 = vmatpush1.msra.mxu0 0.0
          %4054 = vmatprep.subr.mxu0 0.0
          %4055 = vmatpush1.msra.mxu0 0.0
          %4056 = vmatprep.subr.mxu0 0.0
          %4057 = vmatpush1.msra.mxu0 0.0
          %4058 = vmatprep.subr.mxu0 0.0
          %4059 = vmatpush1.msra.mxu0 0.0
          %4060 = vmatprep.subr.mxu0 0.0
          %4061 = vmatpush1.msra.mxu0 0.0
          %4062 = vmatprep.subr.mxu0 0.0
          %4063 = vmatpush1.msra.mxu0 0.0
          %4064 = vmatprep.subr.mxu0 0.0
          %4065 = vmatpush1.msra.mxu0 0.0
          %4066 = vmatprep.mubr.f32.mxu0 0.0
          %4067 = vmatmul.mubr.f32.gmra.mrb[0].mxu0 %v3979
          %v4068 = vpop.f32.mrb[0].mxu0
          %v4069 = vadd.f32 0.0, %v4068
          %v4070 = vpop.f32.mrb[0].mxu0
          %4071 = vmatprep.mubr.f32.mxu0 0.0
          %4072 = vmatmul.mubr.f32.gmra.mrb[0].mxu0 %v3982
          %v4073 = vpop.f32.mrb[0].mxu0
          %v4074 = vadd.f32 0.0, %v4073
          %v4075 = vpop.f32.mrb[0].mxu0
          %4076 = vmatprep.mubr.f32.mxu0 0.0
          %4077 = vmatmul.mubr.f32.gmra.mrb[0].mxu0 %v3985
          %v4078 = vpop.f32.mrb[0].mxu0
          %v4079 = vadd.f32 0.0, %v4078
          %v4080 = vpop.f32.mrb[0].mxu0
          %4081 = vmatprep.mubr.f32.mxu0 0.0
          %4082 = vmatmul.mubr.f32.gmra.mrb[0].mxu0 %v3988
          %v4083 = vpop.f32.mrb[0].mxu0
          %v4084 = vadd.f32 0.0, %v4083
          %v4085 = vpop.f32.mrb[0].mxu0
          %4086 = vmatprep.mubr.f32.mxu0 0.0
          %4087 = vmatmul.mubr.f32.gmra.mrb[0].mxu0 %v3991
          %v4088 = vpop.f32.mrb[0].mxu0
          %v4089 = vadd.f32 0.0, %v4088
          %v4090 = vpop.f32.mrb[0].mxu0
          %4091 = vmatprep.mubr.f32.mxu0 0.0
          %4092 = vmatmul.mubr.f32.gmra.mrb[0].mxu0 %v3994
          %v4093 = vpop.f32.mrb[0].mxu0
          %v4094 = vadd.f32 0.0, %v4093
          %v4095 = vpop.f32.mrb[0].mxu0
          %4096 = vmatprep.mubr.f32.mxu0 0.0
          %4097 = vmatmul.mubr.f32.gmra.mrb[0].mxu0 %v3997
          %v4098 = vpop.f32.mrb[0].mxu0
          %v4099 = vadd.f32 0.0, %v4098
          %v4100 = vpop.f32.mrb[0].mxu0
          %4101 = vmatprep.mubr.f32.mxu0 0.0
          %4102 = vmatmul.mubr.f32.gmra.mrb[0].mxu0 %v4000
          %v4103 = vpop.f32.mrb[0].mxu0
          %v4104 = vadd.f32 0.0, %v4103
          %v4105 = vpop.f32.mrb[0].mxu0
          %4106 = vdwg.mxu0
          %v4107 = vadd.f32 %v3955, %v4069
          %v4108 = vadd.f32 %v3956, %v4074
          %v4109 = vadd.f32 %v3957, %v4079
          %v4110 = vadd.f32 %v3958, %v4084
          %v4111 = vadd.f32 %v3959, %v4089
          %v4112 = vadd.f32 %v3960, %v4094
          %v4113 = vadd.f32 %v3961, %v4099
          %v4114 = vadd.f32 %v3962, %v4104
          %v4115 = vld [vmem:[%s3965 + $0x8] sm:$0xff]
          %v4116 = vld [vmem:[%s3965 + $0x10] sm:$0xff]
          %v4117 = vld [vmem:[%s3965 + $0x28] sm:$0xff]
          %v4118 = vld [vmem:[%s3965 + $0x30] sm:$0xff]
          %v4119 = vld [vmem:[%s3965 + $0x48] sm:$0xff]
          %v4120 = vld [vmem:[%s3965 + $0x50] sm:$0xff]
          %v4121 = vld [vmem:[%s3965 + $0x68] sm:$0xff]
          %v4122 = vld [vmem:[%s3965 + $0x70] sm:$0xff]
          %v4123 = vld [vmem:[%s5 + $0xe0] sm:$0xff]
          %v4124 = vld [vmem:[%s5 + $0xe8] sm:$0xff]
          %v4125 = vld [vmem:[%s5 + $0xf0] sm:$0xff]
          %v4126 = vld [vmem:[%s5 + $0xf8] sm:$0xff]
          %v4128 = vsel %vm332, %v4115, 0
          %v4131 = vsel %vm332, %v4116, 0
          %v4134 = vsel %vm332, %v4117, 0
          %v4137 = vsel %vm332, %v4118, 0
          %v4140 = vsel %vm332, %v4119, 0
          %v4143 = vsel %vm332, %v4120, 0
          %v4146 = vsel %vm332, %v4121, 0
          %v4149 = vsel %vm332, %v4122, 0
          %4151 = vmatprep.subr.mxu0 0.0
          %4152 = vmatpush1.msra.mxu0 %v4123
          %4153 = vmatprep.subr.mxu0 0.0
          %4154 = vmatpush1.msra.mxu0 %v4124
          %4155 = vmatprep.subr.mxu0 0.0
          %4156 = vmatpush1.msra.mxu0 %v4125
          %4157 = vmatprep.subr.mxu0 0.0
          %4158 = vmatpush1.msra.mxu0 %v4126
          %4159 = vmatprep.subr.mxu0 0.0
          %4160 = vmatpush1.msra.mxu0 0.0
          %4161 = vmatprep.subr.mxu0 0.0
          %4162 = vmatpush1.msra.mxu0 0.0
          %4163 = vmatprep.subr.mxu0 0.0
          %4164 = vmatpush1.msra.mxu0 0.0
          %4165 = vmatprep.subr.mxu0 0.0
          %4166 = vmatpush1.msra.mxu0 0.0
          %4167 = vmatprep.subr.mxu0 0.0
          %4168 = vmatpush1.msra.mxu0 0.0
          %4169 = vmatprep.subr.mxu0 0.0
          %4170 = vmatpush1.msra.mxu0 0.0
          %4171 = vmatprep.subr.mxu0 0.0
          %4172 = vmatpush1.msra.mxu0 0.0
          %4173 = vmatprep.subr.mxu0 0.0
          %4174 = vmatpush1.msra.mxu0 0.0
          %4175 = vmatprep.subr.mxu0 0.0
          %4176 = vmatpush1.msra.mxu0 0.0
          %4177 = vmatprep.subr.mxu0 0.0
          %4178 = vmatpush1.msra.mxu0 0.0
          %4179 = vmatprep.subr.mxu0 0.0
          %4180 = vmatpush1.msra.mxu0 0.0
          %4181 = vmatprep.subr.mxu0 0.0
          %4182 = vmatpush1.msra.mxu0 0.0
          %4183 = vmatprep.subr.mxu0 0.0
          %4184 = vmatpush1.msra.mxu0 0.0
          %4185 = vmatprep.subr.mxu0 0.0
          %4186 = vmatpush1.msra.mxu0 0.0
          %4187 = vmatprep.subr.mxu0 0.0
          %4188 = vmatpush1.msra.mxu0 0.0
          %4189 = vmatprep.subr.mxu0 0.0
          %4190 = vmatpush1.msra.mxu0 0.0
          %4191 = vmatprep.subr.mxu0 0.0
          %4192 = vmatpush1.msra.mxu0 0.0
          %4193 = vmatprep.subr.mxu0 0.0
          %4194 = vmatpush1.msra.mxu0 0.0
          %4195 = vmatprep.subr.mxu0 0.0
          %4196 = vmatpush1.msra.mxu0 0.0
          %4197 = vmatprep.subr.mxu0 0.0
          %4198 = vmatpush1.msra.mxu0 0.0
          %4199 = vmatprep.subr.mxu0 0.0
          %4200 = vmatpush1.msra.mxu0 0.0
          %4201 = vmatprep.subr.mxu0 0.0
          %4202 = vmatpush1.msra.mxu0 0.0
          %4203 = vmatprep.subr.mxu0 0.0
          %4204 = vmatpush1.msra.mxu0 0.0
          %4205 = vmatprep.subr.mxu0 0.0
          %4206 = vmatpush1.msra.mxu0 0.0
          %4207 = vmatprep.subr.mxu0 0.0
          %4208 = vmatpush1.msra.mxu0 0.0
          %4209 = vmatprep.subr.mxu0 0.0
          %4210 = vmatpush1.msra.mxu0 0.0
          %4211 = vmatprep.subr.mxu0 0.0
          %4212 = vmatpush1.msra.mxu0 0.0
          %4213 = vmatprep.subr.mxu0 0.0
          %4214 = vmatpush1.msra.mxu0 0.0
          %4215 = vmatprep.mubr.f32.mxu0 0.0
          %4216 = vmatmul.mubr.f32.gmra.mrb[0].mxu0 %v4128
          %v4217 = vpop.f32.mrb[0].mxu0
          %v4218 = vadd.f32 0.0, %v4217
          %v4219 = vpop.f32.mrb[0].mxu0
          %4220 = vmatprep.mubr.f32.mxu0 0.0
          %4221 = vmatmul.mubr.f32.gmra.mrb[0].mxu0 %v4131
          %v4222 = vpop.f32.mrb[0].mxu0
          %v4223 = vadd.f32 0.0, %v4222
          %v4224 = vpop.f32.mrb[0].mxu0
          %4225 = vmatprep.mubr.f32.mxu0 0.0
          %4226 = vmatmul.mubr.f32.gmra.mrb[0].mxu0 %v4134
          %v4227 = vpop.f32.mrb[0].mxu0
          %v4228 = vadd.f32 0.0, %v4227
          %v4229 = vpop.f32.mrb[0].mxu0
          %4230 = vmatprep.mubr.f32.mxu0 0.0
          %4231 = vmatmul.mubr.f32.gmra.mrb[0].mxu0 %v4137
          %v4232 = vpop.f32.mrb[0].mxu0
          %v4233 = vadd.f32 0.0, %v4232
          %v4234 = vpop.f32.mrb[0].mxu0
          %4235 = vmatprep.mubr.f32.mxu0 0.0
          %4236 = vmatmul.mubr.f32.gmra.mrb[0].mxu0 %v4140
          %v4237 = vpop.f32.mrb[0].mxu0
          %v4238 = vadd.f32 0.0, %v4237
          %v4239 = vpop.f32.mrb[0].mxu0
          %4240 = vmatprep.mubr.f32.mxu0 0.0
          %4241 = vmatmul.mubr.f32.gmra.mrb[0].mxu0 %v4143
          %v4242 = vpop.f32.mrb[0].mxu0
          %v4243 = vadd.f32 0.0, %v4242
          %v4244 = vpop.f32.mrb[0].mxu0
          %4245 = vmatprep.mubr.f32.mxu0 0.0
          %4246 = vmatmul.mubr.f32.gmra.mrb[0].mxu0 %v4146
          %v4247 = vpop.f32.mrb[0].mxu0
          %v4248 = vadd.f32 0.0, %v4247
          %v4249 = vpop.f32.mrb[0].mxu0
          %4250 = vmatprep.mubr.f32.mxu0 0.0
          %4251 = vmatmul.mubr.f32.gmra.mrb[0].mxu0 %v4149
          %v4252 = vpop.f32.mrb[0].mxu0
          %v4253 = vadd.f32 0.0, %v4252
          %v4254 = vpop.f32.mrb[0].mxu0
          %4255 = vdwg.mxu0
          %v4256 = vadd.f32 %v4107, %v4218
          %v4257 = vadd.f32 %v4108, %v4223
          %v4258 = vadd.f32 %v4109, %v4228
          %v4259 = vadd.f32 %v4110, %v4233
          %v4260 = vadd.f32 %v4111, %v4238
          %v4261 = vadd.f32 %v4112, %v4243
          %v4262 = vadd.f32 %v4113, %v4248
          %v4263 = vadd.f32 %v4114, %v4253
          %v4264 = vld [vmem:[%s3965 + $0x9] sm:$0xff]
          %v4265 = vld [vmem:[%s3965 + $0x11] sm:$0xff]
          %v4266 = vld [vmem:[%s3965 + $0x29] sm:$0xff]
          %v4267 = vld [vmem:[%s3965 + $0x31] sm:$0xff]
          %v4268 = vld [vmem:[%s3965 + $0x49] sm:$0xff]
          %v4269 = vld [vmem:[%s3965 + $0x51] sm:$0xff]
          %v4270 = vld [vmem:[%s3965 + $0x69] sm:$0xff]
          %v4271 = vld [vmem:[%s3965 + $0x71] sm:$0xff]
          %v4272 = vld [vmem:[%s5 + $0x100] sm:$0xff]
          %v4273 = vld [vmem:[%s5 + $0x108] sm:$0xff]
          %v4274 = vld [vmem:[%s5 + $0x110] sm:$0xff]
          %v4275 = vld [vmem:[%s5 + $0x118] sm:$0xff]
          %v4277 = vsel %vm332, %v4264, 0
          %v4280 = vsel %vm332, %v4265, 0
          %v4283 = vsel %vm332, %v4266, 0
          %v4286 = vsel %vm332, %v4267, 0
          %v4289 = vsel %vm332, %v4268, 0
          %v4292 = vsel %vm332, %v4269, 0
          %v4295 = vsel %vm332, %v4270, 0
          %v4298 = vsel %vm332, %v4271, 0
          %4300 = vmatprep.subr.mxu0 0.0
          %4301 = vmatpush1.msra.mxu0 %v4272
          %4302 = vmatprep.subr.mxu0 0.0
          %4303 = vmatpush1.msra.mxu0 %v4273
          %4304 = vmatprep.subr.mxu0 0.0
          %4305 = vmatpush1.msra.mxu0 %v4274
          %4306 = vmatprep.subr.mxu0 0.0
          %4307 = vmatpush1.msra.mxu0 %v4275
          %4308 = vmatprep.subr.mxu0 0.0
          %4309 = vmatpush1.msra.mxu0 0.0
          %4310 = vmatprep.subr.mxu0 0.0
          %4311 = vmatpush1.msra.mxu0 0.0
          %4312 = vmatprep.subr.mxu0 0.0
          %4313 = vmatpush1.msra.mxu0 0.0
          %4314 = vmatprep.subr.mxu0 0.0
          %4315 = vmatpush1.msra.mxu0 0.0
          %4316 = vmatprep.subr.mxu0 0.0
          %4317 = vmatpush1.msra.mxu0 0.0
          %4318 = vmatprep.subr.mxu0 0.0
          %4319 = vmatpush1.msra.mxu0 0.0
          %4320 = vmatprep.subr.mxu0 0.0
          %4321 = vmatpush1.msra.mxu0 0.0
          %4322 = vmatprep.subr.mxu0 0.0
          %4323 = vmatpush1.msra.mxu0 0.0
          %4324 = vmatprep.subr.mxu0 0.0
          %4325 = vmatpush1.msra.mxu0 0.0
          %4326 = vmatprep.subr.mxu0 0.0
          %4327 = vmatpush1.msra.mxu0 0.0
          %4328 = vmatprep.subr.mxu0 0.0
          %4329 = vmatpush1.msra.mxu0 0.0
          %4330 = vmatprep.subr.mxu0 0.0
          %4331 = vmatpush1.msra.mxu0 0.0
          %4332 = vmatprep.subr.mxu0 0.0
          %4333 = vmatpush1.msra.mxu0 0.0
          %4334 = vmatprep.subr.mxu0 0.0
          %4335 = vmatpush1.msra.mxu0 0.0
          %4336 = vmatprep.subr.mxu0 0.0
          %4337 = vmatpush1.msra.mxu0 0.0
          %4338 = vmatprep.subr.mxu0 0.0
          %4339 = vmatpush1.msra.mxu0 0.0
          %4340 = vmatprep.subr.mxu0 0.0
          %4341 = vmatpush1.msra.mxu0 0.0
          %4342 = vmatprep.subr.mxu0 0.0
          %4343 = vmatpush1.msra.mxu0 0.0
          %4344 = vmatprep.subr.mxu0 0.0
          %4345 = vmatpush1.msra.mxu0 0.0
          %4346 = vmatprep.subr.mxu0 0.0
          %4347 = vmatpush1.msra.mxu0 0.0
          %4348 = vmatprep.subr.mxu0 0.0
          %4349 = vmatpush1.msra.mxu0 0.0
          %4350 = vmatprep.subr.mxu0 0.0
          %4351 = vmatpush1.msra.mxu0 0.0
          %4352 = vmatprep.subr.mxu0 0.0
          %4353 = vmatpush1.msra.mxu0 0.0
          %4354 = vmatprep.subr.mxu0 0.0
          %4355 = vmatpush1.msra.mxu0 0.0
          %4356 = vmatprep.subr.mxu0 0.0
          %4357 = vmatpush1.msra.mxu0 0.0
          %4358 = vmatprep.subr.mxu0 0.0
          %4359 = vmatpush1.msra.mxu0 0.0
          %4360 = vmatprep.subr.mxu0 0.0
          %4361 = vmatpush1.msra.mxu0 0.0
          %4362 = vmatprep.subr.mxu0 0.0
          %4363 = vmatpush1.msra.mxu0 0.0
          %4364 = vmatprep.mubr.f32.mxu0 0.0
          %4365 = vmatmul.mubr.f32.gmra.mrb[0].mxu0 %v4277
          %v4366 = vpop.f32.mrb[0].mxu0
          %v4367 = vadd.f32 0.0, %v4366
          %v4368 = vpop.f32.mrb[0].mxu0
          %4369 = vmatprep.mubr.f32.mxu0 0.0
          %4370 = vmatmul.mubr.f32.gmra.mrb[0].mxu0 %v4280
          %v4371 = vpop.f32.mrb[0].mxu0
          %v4372 = vadd.f32 0.0, %v4371
          %v4373 = vpop.f32.mrb[0].mxu0
          %4374 = vmatprep.mubr.f32.mxu0 0.0
          %4375 = vmatmul.mubr.f32.gmra.mrb[0].mxu0 %v4283
          %v4376 = vpop.f32.mrb[0].mxu0
          %v4377 = vadd.f32 0.0, %v4376
          %v4378 = vpop.f32.mrb[0].mxu0
          %4379 = vmatprep.mubr.f32.mxu0 0.0
          %4380 = vmatmul.mubr.f32.gmra.mrb[0].mxu0 %v4286
          %v4381 = vpop.f32.mrb[0].mxu0
          %v4382 = vadd.f32 0.0, %v4381
          %v4383 = vpop.f32.mrb[0].mxu0
          %4384 = vmatprep.mubr.f32.mxu0 0.0
          %4385 = vmatmul.mubr.f32.gmra.mrb[0].mxu0 %v4289
          %v4386 = vpop.f32.mrb[0].mxu0
          %v4387 = vadd.f32 0.0, %v4386
          %v4388 = vpop.f32.mrb[0].mxu0
          %4389 = vmatprep.mubr.f32.mxu0 0.0
          %4390 = vmatmul.mubr.f32.gmra.mrb[0].mxu0 %v4292
          %v4391 = vpop.f32.mrb[0].mxu0
          %v4392 = vadd.f32 0.0, %v4391
          %v4393 = vpop.f32.mrb[0].mxu0
          %4394 = vmatprep.mubr.f32.mxu0 0.0
          %4395 = vmatmul.mubr.f32.gmra.mrb[0].mxu0 %v4295
          %v4396 = vpop.f32.mrb[0].mxu0
          %v4397 = vadd.f32 0.0, %v4396
          %v4398 = vpop.f32.mrb[0].mxu0
          %4399 = vmatprep.mubr.f32.mxu0 0.0
          %4400 = vmatmul.mubr.f32.gmra.mrb[0].mxu0 %v4298
          %v4401 = vpop.f32.mrb[0].mxu0
          %v4402 = vadd.f32 0.0, %v4401
          %v4403 = vpop.f32.mrb[0].mxu0
          %4404 = vdwg.mxu0
          %v4405 = vadd.f32 %v4256, %v4367
          %v4406 = vadd.f32 %v4257, %v4372
          %v4407 = vadd.f32 %v4258, %v4377
          %v4408 = vadd.f32 %v4259, %v4382
          %v4409 = vadd.f32 %v4260, %v4387
          %v4410 = vadd.f32 %v4261, %v4392
          %v4411 = vadd.f32 %v4262, %v4397
          %v4412 = vadd.f32 %v4263, %v4402
          %v4414 = vlaneseq
          %v4415 = vshrl.u32 %v4414, 7
          %v4416 = vsub.s32 0, %v4415
          %v4417 = vrot.slane %v465, %v4416
          %v4419 = vadd.f32 %v4405, %v4417
          %v4420 = vadd.f32 %v4406, %v4417
          %v4421 = vadd.f32 %v4407, %v4417
          %v4422 = vadd.f32 %v4408, %v4417
          %v4423 = vadd.f32 %v4409, %v4417
          %v4424 = vadd.f32 %v4410, %v4417
          %v4425 = vadd.f32 %v4411, %v4417
          %v4426 = vadd.f32 %v4412, %v4417
          %v4427 = vmax.f32 %v4419, 0.0
          %v4428 = vmax.f32 %v4420, 0.0
          %v4429 = vmax.f32 %v4421, 0.0
          %v4430 = vmax.f32 %v4422, 0.0
          %v4431 = vmax.f32 %v4423, 0.0
          %v4432 = vmax.f32 %v4424, 0.0
          %v4433 = vmax.f32 %v4425, 0.0
          %v4434 = vmax.f32 %v4426, 0.0
          %v4435 = vmax.f32 %v4427, %v4429
          %v4436 = vmax.f32 %v4428, %v4430
          %v4437 = vmax.f32 %v4431, %v4433
          %v4438 = vmax.f32 %v4432, %v4434
          %vm4439 = vcmask 130048
          %4440 = vst.msk [vmem:[#allocation6] sm:$0xff] %vm4439, %v4435
          %4441 = vst.msk [vmem:[#allocation6 + $0x8] sm:$0xff] %vm4439, %v4436
          %4442 = vst.msk [vmem:[#allocation6 + $0x10] sm:$0xff] %vm4439, %v4437
          %4443 = vst.msk [vmem:[#allocation6 + $0x18] sm:$0xff] %vm4439, %v4438
          %v4444 = vld [vmem:[#allocation6] ss:$2 sm:$0xff]
          %s4445 = scalar_lea.vmem [#allocation6], 16
          %v4446 = vld [vmem:[%s4445] ss:$2 sm:$0xff]
          %s4447 = scalar_lea.vmem [#allocation6], 1
          %v4448 = vld [vmem:[%s4447] ss:$2 sm:$0xff]
          %s4449 = scalar_lea.vmem [#allocation6], 17
          %v4450 = vld [vmem:[%s4449] ss:$2 sm:$0xff]
          %v4451 = vmax.f32 %v4444, %v4448
          %v4452 = vmax.f32 %v4446, %v4450
          %s4453 = smul.u32 %s3074, 16
          %s4454 = scalar_lea.vmem %s331, %s4453
          %4455 = vst.msk [vmem:[%s4454] sm:$0xff] %vm4439, %v4451
          %4456 = vst.msk [vmem:[%s4454 + $0x8] sm:$0xff] %vm4439, %v4452
        $region83: #{genki_forward.2} parent=47 // loop_footer
          %s3078 = sadd.s32 1, %s3074
        $region84: #{genki_forward.2} parent=47 // loop_footer_branch
          %3073 = sbr.rel target = $region80
        $region85: #{genki_forward.2} parent=47 // loop_exit
          _
        %p4457 = scmp.lt.s32.totalorder %s21, 1
        %s4458 = scalar_select %p4457, %s21, 1
        %s4459 = smul.addr %s4458, 8
        %s4460 = smul.addr %s4459, 8
        %s4461 = scalar_lea.vmem %s7, %s4460
        // Predicated region
        $region86: #{genki_forward.2} parent=47 // pred_check
          %p4462 = pneg %p191
        $region87: #{genki_forward.2} parent=47 // pred_check_branch
          %4464 = sbr.rel (%p4462) target = $region89
        $region88: #{genki_forward.2} parent=47 // pred_region
          _
        $region89: #{genki_forward.2} parent=47 // pred_fallthru
          _
      $region48: #{genki_forward.2} parent=5 // pred_fallthru
        _
      %p4465 = scmp.le.s32.totalorder 2, %s16
      // Predicated region
      $region90: #{genki_forward.2} parent=5 // pred_check
        %p4466 = pneg %p4465
      $region91: #{genki_forward.2} parent=5 // pred_check_branch
        %4468 = sbr.rel (%p4466) target = $region93
      $region92: #{genki_forward.2} parent=5 // pred_region
        %s4469 = ssub.s32 %s16, 2
        // Predicated region
        $region94: #{genki_forward.2} parent=92 // pred_check
          %p4470 = pneg %p197
        $region95: #{genki_forward.2} parent=92 // pred_check_branch
          %4472 = sbr.rel (%p4470) target = $region97
        $region96: #{genki_forward.2} parent=92 // pred_region
          %p4473 = scmp.lt.s32.totalorder %s22, 1
          %s4474 = scalar_select %p4473, %s22, 1
          %s4475 = smul.addr %s4474, 8
          %s4476 = smul.addr %s4475, 8
          %s4477 = scalar_lea.vmem %s7, %s4476
        $region97: #{genki_forward.2} parent=92 // pred_fallthru
          _
      $region93: #{genki_forward.2} parent=5 // pred_fallthru
        _
    $region6: #{genki_forward.2} parent=1 // loop_footer
      %s20 = sadd.s32 1, %s16
    $region7: #{genki_forward.2} parent=1 // loop_footer_branch
      %15 = sbr.rel target = $region3
    $region8: #{genki_forward.2} parent=1 // loop_exit
      _
    %4478 = vsyncpa [#allocation8], 1
    %s4479 = scalar_lea.sflag [#allocation8], 1
    %4480 = vsyncpa %s4479, 1
    %4481 = vsyncpa [#allocation10], 1
    %4482 = vsyncpa [#allocation13], 1

</llo_original>
